<compile_context>
chip_gen: v7x
topology: tpu7x:2x2x1
jax: 0.10.0
libtpu: 0.0.40
codegen_flags: <defaults>
</compile_context>

<pallas_src>
import jax
import jax.numpy as jnp
from jax import lax
from jax.experimental import pallas as pl
from jax.experimental.pallas import tpu as pltpu

DIM_EMBED = 128
NUM_GROUPS = 8
GROUP_SIZE = DIM_EMBED // NUM_GROUPS
GN_EPS = 1e-5  # PyTorch GroupNorm default eps

# Row layout of the packed (16, 128) vector-parameter array.
_VROW = {"w1": 0, "b1": 1, "b2": 2, "b3": 3, "b4": 4, "b5": 5,
         "g1": 6, "g2": 7, "g3": 8, "g4": 9,
         "be1": 10, "be2": 11, "be3": 12, "be4": 13}


def make_y2h_kernel(fuse_stats: bool):
    """Build the fused y2h kernel.

    Refs:
      y_ref:   (TILE_N, 1)          f32
      a_ref:   (D, D) or (2D, 2D)   bf16  group-averaging matrix
                                         (block-diagonal doubled if fuse_stats)
      vec_ref: (16, D)              f32   packed [w1,b1,b2..b5,g1..g4,be1..be4,pad,pad]
      w_ref:   (4, D, D)            bf16  packed [w2,w3,w4,w5]
      out_ref: (TILE_N, D)
    """
    D = DIM_EMBED

    def kernel(y_ref, a_ref, vec_ref, w_ref, out_ref):
        A = a_ref[...]                                   # resident bf16

        def vec(name):                                   # (1, D) f32 parameter row
            r = _VROW[name]
            return vec_ref[r:r + 1, :]

        def gn_relu(x, gamma, beta):
            """GroupNorm(8, D) + ReLU; returns bf16, ready for the next MXU op."""
            xb = x.astype(jnp.bfloat16)
            x2b = (x * x).astype(jnp.bfloat16)
            if fuse_stats:
                # One 256-wide bf16 dot against [[A,0],[0,A]] yields both group
                # stats per sample (uses the full 256x256 MXU on v6e/v7x).
                s = jnp.dot(jnp.concatenate([xb, x2b], axis=-1), A,
                            preferred_element_type=jnp.float32)        # (N, 2D)
                mean, ex2 = s[:, :D], s[:, D:]
            else:
                mean = jnp.dot(xb, A, preferred_element_type=jnp.float32)
                ex2 = jnp.dot(x2b, A, preferred_element_type=jnp.float32)
            var = jnp.maximum(ex2 - mean * mean, 0.0)    # clamp cancellation
            inv = lax.rsqrt(var + GN_EPS)
            out = (x - mean) * (inv * gamma) + beta      # f32 affine
            return jnp.maximum(out, 0.0).astype(jnp.bfloat16)  # ReLU, bf16 out

        def mm(h_bf16, w_bf16, b):
            # bf16 operands, f32 MXU accumulation.
            return jnp.dot(h_bf16, w_bf16, preferred_element_type=jnp.float32) + b

        # y.view(-1, 1) + 1e-8, then Linear(1, D) as a broadcast mul on the VPU.
        y = y_ref[...] + 1e-8                            # (N, 1) f32
        h = y * vec("w1") + vec("b1")                    # (N, D) f32
        h = gn_relu(h, vec("g1"), vec("be1"))
        h = gn_relu(mm(h, w_ref[0], vec("b2")), vec("g2"), vec("be2"))
        h = gn_relu(mm(h, w_ref[1], vec("b3")), vec("g3"), vec("be3"))
        h = gn_relu(mm(h, w_ref[2], vec("b4")), vec("g4"), vec("be4"))
        out = jnp.maximum(mm(h, w_ref[3], vec("b5")), 0.0)
        out_ref[...] = out.astype(out_ref.dtype)

    return kernel


def make_group_avg_matrix(fused: bool):
    """Block-diagonal group-averaging matrix, bf16 (1/16 is exact in bf16)."""
    c = jnp.arange(DIM_EMBED)
    same = (c[:, None] // GROUP_SIZE) == (c[None, :] // GROUP_SIZE)
    A = same.astype(jnp.float32) / GROUP_SIZE            # (D, D)
    if fused:
        Z = jnp.zeros_like(A)
        A = jnp.block([[A, Z], [Z, A]])                  # (2D, 2D)
    return A.astype(jnp.bfloat16)


def pack_params(params):
    """Pack small vectors into (16,128) f32 and w2..w5 into (4,128,128) bf16."""
    D = DIM_EMBED
    order = ["w1", "b1", "b2", "b3", "b4", "b5",
             "g1", "g2", "g3", "g4", "be1", "be2", "be3", "be4"]
    rows = [params[name].reshape(1, D).astype(jnp.float32) for name in order]
    rows.append(jnp.zeros((2, D), jnp.float32))          # pad to 16 sublanes
    vecs = jnp.concatenate(rows, axis=0)                 # (16, D)
    wpack = jnp.stack([params["w2"], params["w3"], params["w4"], params["w5"]],
                      axis=0).astype(jnp.bfloat16)       # (4, D, D)
    return vecs, wpack


def init_params(key, dim=DIM_EMBED):
    """Deterministic synthetic parameters (module shapes from __init__)."""
    keys = jax.random.split(key, 10)
    p = {}
    # Linear(1, dim): weights stored (in, out) so the kernel does x @ w.
    p["w1"] = 0.5 * jax.random.normal(keys[0], (1, dim), jnp.float32)
    p["b1"] = 0.1 * jax.random.normal(keys[1], (1, dim), jnp.float32)
    for i, k in zip(range(2, 6), range(2, 6)):
        p[f"w{i}"] = (1.0 / jnp.sqrt(dim)) * jax.random.normal(
            keys[k], (dim, dim), jnp.float32)
        p[f"b{i}"] = 0.1 * jax.random.normal(keys[k + 4], (1, dim), jnp.float32)
    # GroupNorm affine params (PyTorch init: weight=1, bias=0); perturb
    # deterministically so the affine path is exercised.
    for i in range(1, 5):
        p[f"g{i}"] = jnp.ones((1, dim), jnp.float32) + 0.01 * i
        p[f"be{i}"] = jnp.full((1, dim), 0.001 * i, jnp.float32)
    return p


def _ceil_to(x, m):
    return ((x + m - 1) // m) * m


def _tpu_flags():
    """Per-generation knobs: (fuse_stats, min_grid_steps, vmem_limit, tile_cap)."""
    kind = ""
    try:
        kind = jax.devices()[0].device_kind.lower()
    except Exception:
        pass
    small_mxu = any(v in kind for v in ("v2", "v3", "v4", "v5"))  # 128x128 MXU
    is_v7 = "v7" in kind
    fuse_stats = not small_mxu            # 256-wide stat fusion only on v6e/v7x
    min_steps = 2 if is_v7 else 1         # give both v7x TensorCores work
    vmem_limit = (48 << 20) if is_v7 else (64 << 20)   # v7x has 64 MiB VMEM/TC
    tile_cap = 4096 if is_v7 else 8192
    return fuse_stats, min_steps, vmem_limit, tile_cap


def model_y2h_forward(y, params, tile_n=4096, out_dtype=jnp.float32):
    """y: any shape; flattened to (N, 1) like y.view(-1, 1)."""
    D = DIM_EMBED
    y2 = y.reshape(-1, 1).astype(jnp.float32)
    N = y2.shape[0]

    fuse_stats, min_steps, vmem_limit, tile_cap = _tpu_flags()

    # Tile: multiple of 8 sublanes, per-generation cap, no bigger than the
    # padded batch, and small enough that the grid has >= min_steps steps.
    ceil8 = lambda v: ((v + 7) // 8) * 8
    t = min(tile_n, tile_cap)
    t = min(t, ceil8(max(1, (N + min_steps - 1) // min_steps)))
    t = ceil8(max(8, min(t, ceil8(N))))

    n_pad = _ceil_to(N, t)
    if n_pad != N:
        y2 = jnp.pad(y2, ((0, n_pad - N), (0, 0)))

    vecs, wpack = pack_params(params)
    A = make_group_avg_matrix(fused=fuse_stats)          # bf16, (D,D) or (2D,2D)

    out = pl.pallas_call(
        make_y2h_kernel(fuse_stats),
        out_shape=jax.ShapeDtypeStruct((n_pad, D), out_dtype),
        grid=(n_pad // t,),
        in_specs=[
            pl.BlockSpec((t, 1), lambda i: (i, 0)),      # y: tiled over batch
            pl.BlockSpec(A.shape, lambda i: (0, 0)),     # group-avg matrix, resident
            pl.BlockSpec((16, D), lambda i: (0, 0)),     # packed vector params
            pl.BlockSpec((4, D, D), lambda i: (0, 0, 0)),  # packed weights
        ],
        out_specs=pl.BlockSpec((t, D), lambda i: (i, 0)),
        compiler_params=pltpu.CompilerParams(
            dimension_semantics=("parallel",),           # megacore on v7x
            vmem_limit_bytes=vmem_limit,
        ),
    )(y2, A, vecs, wpack)
    return out[:N]


def model_y2h_reference(y, params):
    """Pure-JAX reference mirroring the PyTorch module.

    GroupNorm statistics in f32 with two-pass variance; Linear matmuls use bf16
    operands with f32 accumulation (the kernel's MXU numerics).
    """
    def gn(x, gamma, beta):
        Nb = x.shape[0]
        xg = x.reshape(Nb, NUM_GROUPS, GROUP_SIZE)
        mean = xg.mean(axis=-1, keepdims=True)
        var = ((xg - mean) ** 2).mean(axis=-1, keepdims=True)
        xn = ((xg - mean) * lax.rsqrt(var + GN_EPS)).reshape(Nb, DIM_EMBED)
        return xn * gamma + beta

    def mm(h, w):
        return jnp.dot(h.astype(jnp.bfloat16), w.astype(jnp.bfloat16),
                       preferred_element_type=jnp.float32)

    relu = lambda x: jnp.maximum(x, 0.0)
    h = y.reshape(-1, 1).astype(jnp.float32) + 1e-8
    h = h * params["w1"] + params["b1"]
    h = relu(gn(h, params["g1"], params["be1"]))
    for i in range(2, 5):
        h = mm(h, params[f"w{i}"]) + params[f"b{i}"]
        h = relu(gn(h, params[f"g{i}"], params[f"be{i}"]))
    h = mm(h, params["w5"]) + params["b5"]
    return relu(h)


if __name__ == "__main__":
    key = jax.random.PRNGKey(0)
    k_y, k_p = jax.random.split(key)

    # Small batch of scalar labels y (the module maps scalars -> 128-d embeddings).
    N = 300
    y = jax.random.uniform(k_y, (N,), jnp.float32)
    params = init_params(k_p)
    ref = model_y2h_reference(y, params)

    # Default path: large (clamped) tile, per-generation settings.
    out = jax.block_until_ready(model_y2h_forward(y, params))
    assert out.shape == (N, DIM_EMBED)
    err = float(jnp.max(jnp.abs(out - ref)))
    assert jnp.allclose(out, ref, atol=2e-2, rtol=2e-2), err

    # Small explicit tile: exercises the multi-step grid + batch-padding path.
    out2 = jax.block_until_ready(model_y2h_forward(y, params, tile_n=128))
    err2 = float(jnp.max(jnp.abs(out2 - ref)))
    assert jnp.allclose(out2, ref, atol=2e-2, rtol=2e-2), err2

    print("KERNEL_OK")
</pallas_src>

<mosaic_0001>
module attributes {stable_mosaic.version = 11 : i64} {
  func.func @kernel(%arg0: i32, %arg1: memref<304x1xf32, #tpu.memory_space<vmem>>, %arg2: memref<256x256xbf16, #tpu.memory_space<vmem>>, %arg3: memref<16x128xf32, #tpu.memory_space<vmem>>, %arg4: memref<4x128x128xbf16, #tpu.memory_space<vmem>>, %arg5: memref<304x128xf32, #tpu.memory_space<vmem>>) attributes {dimension_semantics = [#tpu.dimension_semantics<parallel>], iteration_bounds = array<i64: 1>, scalar_prefetch = 0 : i64, scratch_operands = 0 : i64, tpu.core_type = #tpu.core_type<tc>, window_params = [{transform_indices = @transform_0, window_bounds = array<i64: 304, 1>}, {pipeline_mode = #tpu.pipeline_mode<synchronous>, transform_indices = @transform_1, window_bounds = array<i64: 256, 256>}, {pipeline_mode = #tpu.pipeline_mode<synchronous>, transform_indices = @transform_2, window_bounds = array<i64: 16, 128>}, {pipeline_mode = #tpu.pipeline_mode<synchronous>, transform_indices = @transform_3, window_bounds = array<i64: 4, 128, 128>}, {transform_indices = @transform_4, window_bounds = array<i64: 304, 128>}]} {
    %c0 = arith.constant 0 : index
    %c0_0 = arith.constant 0 : index
    %0 = vector.load %arg2[%c0, %c0_0] : memref<256x256xbf16, #tpu.memory_space<vmem>>, vector<256x256xbf16>
    %c0_1 = arith.constant 0 : index
    %c0_2 = arith.constant 0 : index
    %1 = vector.load %arg1[%c0_1, %c0_2] : memref<304x1xf32, #tpu.memory_space<vmem>>, vector<304x1xf32>
    %cst = arith.constant 9.99999993E-9 : f32
    %2 = vector.broadcast %cst : f32 to vector<304x1xf32>
    %3 = arith.addf %1, %2 : vector<304x1xf32>
    %c0_3 = arith.constant 0 : index
    %c0_4 = arith.constant 0 : index
    %4 = vector.load %arg3[%c0_3, %c0_4] : memref<16x128xf32, #tpu.memory_space<vmem>>, vector<1x128xf32>
    %5 = vector.broadcast %3 : vector<304x1xf32> to vector<304x128xf32>
    %6 = vector.broadcast %4 : vector<1x128xf32> to vector<304x128xf32>
    %7 = arith.mulf %5, %6 : vector<304x128xf32>
    %c1 = arith.constant 1 : index
    %c0_5 = arith.constant 0 : index
    %8 = vector.load %arg3[%c1, %c0_5] : memref<16x128xf32, #tpu.memory_space<vmem>>, vector<1x128xf32>
    %9 = vector.broadcast %8 : vector<1x128xf32> to vector<304x128xf32>
    %10 = arith.addf %7, %9 : vector<304x128xf32>
    %c6 = arith.constant 6 : index
    %c0_6 = arith.constant 0 : index
    %11 = vector.load %arg3[%c6, %c0_6] : memref<16x128xf32, #tpu.memory_space<vmem>>, vector<1x128xf32>
    %c10 = arith.constant 10 : index
    %c0_7 = arith.constant 0 : index
    %12 = vector.load %arg3[%c10, %c0_7] : memref<16x128xf32, #tpu.memory_space<vmem>>, vector<1x128xf32>
    %13 = arith.truncf %10 : vector<304x128xf32> to vector<304x128xbf16>
    %14 = arith.mulf %10, %10 : vector<304x128xf32>
    %15 = arith.truncf %14 : vector<304x128xf32> to vector<304x128xbf16>
    %16 = tpu.concatenate %13, %15 in 1 : vector<304x128xbf16>, vector<304x128xbf16> -> vector<304x256xbf16>
    %cst_8 = arith.constant dense<0.000000e+00> : vector<304x256xf32>
    %17 = tpu.matmul %16, %0, %cst_8 {dimension_numbers = #tpu.dot_dimension_numbers<[1], [0], [0], [1], [0, 0, 1, 1], [], []>} : vector<304x256xbf16>, vector<256x256xbf16>, vector<304x256xf32> -> vector<304x256xf32>
    %18 = vector.extract_strided_slice %17 {offsets = [0, 0], sizes = [304, 128], strides = [1, 1]} : vector<304x256xf32> to vector<304x128xf32>
    %19 = vector.extract_strided_slice %17 {offsets = [0, 128], sizes = [304, 128], strides = [1, 1]} : vector<304x256xf32> to vector<304x128xf32>
    %20 = arith.mulf %18, %18 : vector<304x128xf32>
    %21 = arith.subf %19, %20 : vector<304x128xf32>
    %cst_9 = arith.constant 0.000000e+00 : f32
    %22 = vector.broadcast %cst_9 : f32 to vector<304x128xf32>
    %23 = arith.maximumf %21, %22 : vector<304x128xf32>
    %cst_10 = arith.constant 9.99999974E-6 : f32
    %24 = vector.broadcast %cst_10 : f32 to vector<304x128xf32>
    %25 = arith.addf %23, %24 : vector<304x128xf32>
    %26 = math.rsqrt %25 : vector<304x128xf32>
    %27 = arith.subf %10, %18 : vector<304x128xf32>
    %28 = vector.broadcast %11 : vector<1x128xf32> to vector<304x128xf32>
    %29 = arith.mulf %26, %28 : vector<304x128xf32>
    %30 = arith.mulf %27, %29 : vector<304x128xf32>
    %31 = vector.broadcast %12 : vector<1x128xf32> to vector<304x128xf32>
    %32 = arith.addf %30, %31 : vector<304x128xf32>
    %cst_11 = arith.constant 0.000000e+00 : f32
    %33 = vector.broadcast %cst_11 : f32 to vector<304x128xf32>
    %34 = arith.maximumf %32, %33 : vector<304x128xf32>
    %35 = arith.truncf %34 : vector<304x128xf32> to vector<304x128xbf16>
    %c0_12 = arith.constant 0 : index
    %c0_13 = arith.constant 0 : index
    %c0_14 = arith.constant 0 : index
    %36 = vector.load %arg4[%c0_12, %c0_13, %c0_14] : memref<4x128x128xbf16, #tpu.memory_space<vmem>>, vector<1x128x128xbf16>
    %37 = vector.shape_cast %36 : vector<1x128x128xbf16> to vector<128x128xbf16>
    %c2 = arith.constant 2 : index
    %c0_15 = arith.constant 0 : index
    %38 = vector.load %arg3[%c2, %c0_15] : memref<16x128xf32, #tpu.memory_space<vmem>>, vector<1x128xf32>
    %cst_16 = arith.constant dense<0.000000e+00> : vector<304x128xf32>
    %39 = tpu.matmul %35, %37, %cst_16 {dimension_numbers = #tpu.dot_dimension_numbers<[1], [0], [0], [1], [0, 0, 1, 1], [], []>} : vector<304x128xbf16>, vector<128x128xbf16>, vector<304x128xf32> -> vector<304x128xf32>
    %40 = vector.broadcast %38 : vector<1x128xf32> to vector<304x128xf32>
    %41 = arith.addf %39, %40 : vector<304x128xf32>
    %c7 = arith.constant 7 : index
    %c0_17 = arith.constant 0 : index
    %42 = vector.load %arg3[%c7, %c0_17] : memref<16x128xf32, #tpu.memory_space<vmem>>, vector<1x128xf32>
    %c11 = arith.constant 11 : index
    %c0_18 = arith.constant 0 : index
    %43 = vector.load %arg3[%c11, %c0_18] : memref<16x128xf32, #tpu.memory_space<vmem>>, vector<1x128xf32>
    %44 = arith.truncf %41 : vector<304x128xf32> to vector<304x128xbf16>
    %45 = arith.mulf %41, %41 : vector<304x128xf32>
    %46 = arith.truncf %45 : vector<304x128xf32> to vector<304x128xbf16>
    %47 = tpu.concatenate %44, %46 in 1 : vector<304x128xbf16>, vector<304x128xbf16> -> vector<304x256xbf16>
    %cst_19 = arith.constant dense<0.000000e+00> : vector<304x256xf32>
    %48 = tpu.matmul %47, %0, %cst_19 {dimension_numbers = #tpu.dot_dimension_numbers<[1], [0], [0], [1], [0, 0, 1, 1], [], []>} : vector<304x256xbf16>, vector<256x256xbf16>, vector<304x256xf32> -> vector<304x256xf32>
    %49 = vector.extract_strided_slice %48 {offsets = [0, 0], sizes = [304, 128], strides = [1, 1]} : vector<304x256xf32> to vector<304x128xf32>
    %50 = vector.extract_strided_slice %48 {offsets = [0, 128], sizes = [304, 128], strides = [1, 1]} : vector<304x256xf32> to vector<304x128xf32>
    %51 = arith.mulf %49, %49 : vector<304x128xf32>
    %52 = arith.subf %50, %51 : vector<304x128xf32>
    %cst_20 = arith.constant 0.000000e+00 : f32
    %53 = vector.broadcast %cst_20 : f32 to vector<304x128xf32>
    %54 = arith.maximumf %52, %53 : vector<304x128xf32>
    %cst_21 = arith.constant 9.99999974E-6 : f32
    %55 = vector.broadcast %cst_21 : f32 to vector<304x128xf32>
    %56 = arith.addf %54, %55 : vector<304x128xf32>
    %57 = math.rsqrt %56 : vector<304x128xf32>
    %58 = arith.subf %41, %49 : vector<304x128xf32>
    %59 = vector.broadcast %42 : vector<1x128xf32> to vector<304x128xf32>
    %60 = arith.mulf %57, %59 : vector<304x128xf32>
    %61 = arith.mulf %58, %60 : vector<304x128xf32>
    %62 = vector.broadcast %43 : vector<1x128xf32> to vector<304x128xf32>
    %63 = arith.addf %61, %62 : vector<304x128xf32>
    %cst_22 = arith.constant 0.000000e+00 : f32
    %64 = vector.broadcast %cst_22 : f32 to vector<304x128xf32>
    %65 = arith.maximumf %63, %64 : vector<304x128xf32>
    %66 = arith.truncf %65 : vector<304x128xf32> to vector<304x128xbf16>
    %c1_23 = arith.constant 1 : index
    %c0_24 = arith.constant 0 : index
    %c0_25 = arith.constant 0 : index
    %67 = vector.load %arg4[%c1_23, %c0_24, %c0_25] : memref<4x128x128xbf16, #tpu.memory_space<vmem>>, vector<1x128x128xbf16>
    %68 = vector.shape_cast %67 : vector<1x128x128xbf16> to vector<128x128xbf16>
    %c3 = arith.constant 3 : index
    %c0_26 = arith.constant 0 : index
    %69 = vector.load %arg3[%c3, %c0_26] : memref<16x128xf32, #tpu.memory_space<vmem>>, vector<1x128xf32>
    %cst_27 = arith.constant dense<0.000000e+00> : vector<304x128xf32>
    %70 = tpu.matmul %66, %68, %cst_27 {dimension_numbers = #tpu.dot_dimension_numbers<[1], [0], [0], [1], [0, 0, 1, 1], [], []>} : vector<304x128xbf16>, vector<128x128xbf16>, vector<304x128xf32> -> vector<304x128xf32>
    %71 = vector.broadcast %69 : vector<1x128xf32> to vector<304x128xf32>
    %72 = arith.addf %70, %71 : vector<304x128xf32>
    %c8 = arith.constant 8 : index
    %c0_28 = arith.constant 0 : index
    %73 = vector.load %arg3[%c8, %c0_28] : memref<16x128xf32, #tpu.memory_space<vmem>>, vector<1x128xf32>
    %c12 = arith.constant 12 : index
    %c0_29 = arith.constant 0 : index
    %74 = vector.load %arg3[%c12, %c0_29] : memref<16x128xf32, #tpu.memory_space<vmem>>, vector<1x128xf32>
    %75 = arith.truncf %72 : vector<304x128xf32> to vector<304x128xbf16>
    %76 = arith.mulf %72, %72 : vector<304x128xf32>
    %77 = arith.truncf %76 : vector<304x128xf32> to vector<304x128xbf16>
    %78 = tpu.concatenate %75, %77 in 1 : vector<304x128xbf16>, vector<304x128xbf16> -> vector<304x256xbf16>
    %cst_30 = arith.constant dense<0.000000e+00> : vector<304x256xf32>
    %79 = tpu.matmul %78, %0, %cst_30 {dimension_numbers = #tpu.dot_dimension_numbers<[1], [0], [0], [1], [0, 0, 1, 1], [], []>} : vector<304x256xbf16>, vector<256x256xbf16>, vector<304x256xf32> -> vector<304x256xf32>
    %80 = vector.extract_strided_slice %79 {offsets = [0, 0], sizes = [304, 128], strides = [1, 1]} : vector<304x256xf32> to vector<304x128xf32>
    %81 = vector.extract_strided_slice %79 {offsets = [0, 128], sizes = [304, 128], strides = [1, 1]} : vector<304x256xf32> to vector<304x128xf32>
    %82 = arith.mulf %80, %80 : vector<304x128xf32>
    %83 = arith.subf %81, %82 : vector<304x128xf32>
    %cst_31 = arith.constant 0.000000e+00 : f32
    %84 = vector.broadcast %cst_31 : f32 to vector<304x128xf32>
    %85 = arith.maximumf %83, %84 : vector<304x128xf32>
    %cst_32 = arith.constant 9.99999974E-6 : f32
    %86 = vector.broadcast %cst_32 : f32 to vector<304x128xf32>
    %87 = arith.addf %85, %86 : vector<304x128xf32>
    %88 = math.rsqrt %87 : vector<304x128xf32>
    %89 = arith.subf %72, %80 : vector<304x128xf32>
    %90 = vector.broadcast %73 : vector<1x128xf32> to vector<304x128xf32>
    %91 = arith.mulf %88, %90 : vector<304x128xf32>
    %92 = arith.mulf %89, %91 : vector<304x128xf32>
    %93 = vector.broadcast %74 : vector<1x128xf32> to vector<304x128xf32>
    %94 = arith.addf %92, %93 : vector<304x128xf32>
    %cst_33 = arith.constant 0.000000e+00 : f32
    %95 = vector.broadcast %cst_33 : f32 to vector<304x128xf32>
    %96 = arith.maximumf %94, %95 : vector<304x128xf32>
    %97 = arith.truncf %96 : vector<304x128xf32> to vector<304x128xbf16>
    %c2_34 = arith.constant 2 : index
    %c0_35 = arith.constant 0 : index
    %c0_36 = arith.constant 0 : index
    %98 = vector.load %arg4[%c2_34, %c0_35, %c0_36] : memref<4x128x128xbf16, #tpu.memory_space<vmem>>, vector<1x128x128xbf16>
    %99 = vector.shape_cast %98 : vector<1x128x128xbf16> to vector<128x128xbf16>
    %c4 = arith.constant 4 : index
    %c0_37 = arith.constant 0 : index
    %100 = vector.load %arg3[%c4, %c0_37] : memref<16x128xf32, #tpu.memory_space<vmem>>, vector<1x128xf32>
    %cst_38 = arith.constant dense<0.000000e+00> : vector<304x128xf32>
    %101 = tpu.matmul %97, %99, %cst_38 {dimension_numbers = #tpu.dot_dimension_numbers<[1], [0], [0], [1], [0, 0, 1, 1], [], []>} : vector<304x128xbf16>, vector<128x128xbf16>, vector<304x128xf32> -> vector<304x128xf32>
    %102 = vector.broadcast %100 : vector<1x128xf32> to vector<304x128xf32>
    %103 = arith.addf %101, %102 : vector<304x128xf32>
    %c9 = arith.constant 9 : index
    %c0_39 = arith.constant 0 : index
    %104 = vector.load %arg3[%c9, %c0_39] : memref<16x128xf32, #tpu.memory_space<vmem>>, vector<1x128xf32>
    %c13 = arith.constant 13 : index
    %c0_40 = arith.constant 0 : index
    %105 = vector.load %arg3[%c13, %c0_40] : memref<16x128xf32, #tpu.memory_space<vmem>>, vector<1x128xf32>
    %106 = arith.truncf %103 : vector<304x128xf32> to vector<304x128xbf16>
    %107 = arith.mulf %103, %103 : vector<304x128xf32>
    %108 = arith.truncf %107 : vector<304x128xf32> to vector<304x128xbf16>
    %109 = tpu.concatenate %106, %108 in 1 : vector<304x128xbf16>, vector<304x128xbf16> -> vector<304x256xbf16>
    %cst_41 = arith.constant dense<0.000000e+00> : vector<304x256xf32>
    %110 = tpu.matmul %109, %0, %cst_41 {dimension_numbers = #tpu.dot_dimension_numbers<[1], [0], [0], [1], [0, 0, 1, 1], [], []>} : vector<304x256xbf16>, vector<256x256xbf16>, vector<304x256xf32> -> vector<304x256xf32>
    %111 = vector.extract_strided_slice %110 {offsets = [0, 0], sizes = [304, 128], strides = [1, 1]} : vector<304x256xf32> to vector<304x128xf32>
    %112 = vector.extract_strided_slice %110 {offsets = [0, 128], sizes = [304, 128], strides = [1, 1]} : vector<304x256xf32> to vector<304x128xf32>
    %113 = arith.mulf %111, %111 : vector<304x128xf32>
    %114 = arith.subf %112, %113 : vector<304x128xf32>
    %cst_42 = arith.constant 0.000000e+00 : f32
    %115 = vector.broadcast %cst_42 : f32 to vector<304x128xf32>
    %116 = arith.maximumf %114, %115 : vector<304x128xf32>
    %cst_43 = arith.constant 9.99999974E-6 : f32
    %117 = vector.broadcast %cst_43 : f32 to vector<304x128xf32>
    %118 = arith.addf %116, %117 : vector<304x128xf32>
    %119 = math.rsqrt %118 : vector<304x128xf32>
    %120 = arith.subf %103, %111 : vector<304x128xf32>
    %121 = vector.broadcast %104 : vector<1x128xf32> to vector<304x128xf32>
    %122 = arith.mulf %119, %121 : vector<304x128xf32>
    %123 = arith.mulf %120, %122 : vector<304x128xf32>
    %124 = vector.broadcast %105 : vector<1x128xf32> to vector<304x128xf32>
    %125 = arith.addf %123, %124 : vector<304x128xf32>
    %cst_44 = arith.constant 0.000000e+00 : f32
    %126 = vector.broadcast %cst_44 : f32 to vector<304x128xf32>
    %127 = arith.maximumf %125, %126 : vector<304x128xf32>
    %128 = arith.truncf %127 : vector<304x128xf32> to vector<304x128xbf16>
    %c3_45 = arith.constant 3 : index
    %c0_46 = arith.constant 0 : index
    %c0_47 = arith.constant 0 : index
    %129 = vector.load %arg4[%c3_45, %c0_46, %c0_47] : memref<4x128x128xbf16, #tpu.memory_space<vmem>>, vector<1x128x128xbf16>
    %130 = vector.shape_cast %129 : vector<1x128x128xbf16> to vector<128x128xbf16>
    %c5 = arith.constant 5 : index
    %c0_48 = arith.constant 0 : index
    %131 = vector.load %arg3[%c5, %c0_48] : memref<16x128xf32, #tpu.memory_space<vmem>>, vector<1x128xf32>
    %cst_49 = arith.constant dense<0.000000e+00> : vector<304x128xf32>
    %132 = tpu.matmul %128, %130, %cst_49 {dimension_numbers = #tpu.dot_dimension_numbers<[1], [0], [0], [1], [0, 0, 1, 1], [], []>} : vector<304x128xbf16>, vector<128x128xbf16>, vector<304x128xf32> -> vector<304x128xf32>
    %133 = vector.broadcast %131 : vector<1x128xf32> to vector<304x128xf32>
    %134 = arith.addf %132, %133 : vector<304x128xf32>
    %cst_50 = arith.constant 0.000000e+00 : f32
    %135 = vector.broadcast %cst_50 : f32 to vector<304x128xf32>
    %136 = arith.maximumf %134, %135 : vector<304x128xf32>
    %c0_51 = arith.constant 0 : index
    %c0_52 = arith.constant 0 : index
    %137 = vector.load %arg5[%c0_51, %c0_52] : memref<304x128xf32, #tpu.memory_space<vmem>>, vector<304x128xf32>
    tpu.vector_store %arg5[%c0_51, %c0_52], %136 {strides = array<i32>} : memref<304x128xf32, #tpu.memory_space<vmem>>, vector<304x128xf32>,
    return
  }
  func.func @transform_0(%arg0: i32) -> (i32, i32) {
    %c0_i32 = arith.constant 0 : i32
    %c0_i32_0 = arith.constant 0 : i32
    return %arg0, %c0_i32 : i32, i32
  }
  func.func @transform_1(%arg0: i32) -> (i32, i32) {
    %c0_i32 = arith.constant 0 : i32
    %c0_i32_0 = arith.constant 0 : i32
    %c0_i32_1 = arith.constant 0 : i32
    return %c0_i32, %c0_i32_0 : i32, i32
  }
  func.func @transform_2(%arg0: i32) -> (i32, i32) {
    %c0_i32 = arith.constant 0 : i32
    %c0_i32_0 = arith.constant 0 : i32
    %c0_i32_1 = arith.constant 0 : i32
    return %c0_i32, %c0_i32_0 : i32, i32
  }
  func.func @transform_3(%arg0: i32) -> (i32, i32, i32) {
    %c0_i32 = arith.constant 0 : i32
    %c0_i32_0 = arith.constant 0 : i32
    %c0_i32_1 = arith.constant 0 : i32
    %c0_i32_2 = arith.constant 0 : i32
    return %c0_i32, %c0_i32_0, %c0_i32_1 : i32, i32, i32
  }
  func.func @transform_4(%arg0: i32) -> (i32, i32) {
    %c0_i32 = arith.constant 0 : i32
    %c0_i32_0 = arith.constant 0 : i32
    return %arg0, %c0_i32 : i32, i32
  }
}

</mosaic_0001>

<llo_original>
// kernel: tpu_custom_call.1
$region0: #{tpu_custom_call.1}
  #allocation0 [shape = 'u32[]', space=smem, size = 0x4, offset = 0x4, fixed_abs, tag = 'smem constant byte address 0x4 - core index']
  #allocation1 [shape = 'u32[144,128]{1,0:T(1,128)}', space=vmem, size = 0x12000, scoped, tag = 'internal scratch']
  %s0 = inlined_call_operand.hbm [shape: f32[304,1], index: 0, kind: input, shape index: {}]
  %s1 = inlined_call_operand.hbm [shape: bf16[256,256], index: 1, kind: input, shape index: {}]
  %s2 = inlined_call_operand.hbm [shape: f32[16,128], index: 2, kind: input, shape index: {}]
  %s3 = inlined_call_operand.hbm [shape: bf16[4,128,128], index: 3, kind: input, shape index: {}]
  %s4 = inlined_call_operand.hbm [shape: f32[304,128], index: 4, kind: output, shape index: {}]
  %s5 = sld [smem:[#allocation0]]
  $region42: #{tpu_custom_call.1} parent=0
    _
  %s7 = ssub.s32 1, %s5
  %s8 = scalar_select 0, %s7, %s5
  $region1: #{tpu_custom_call.1} parent=0
    #allocation2 [shape = 'u8[155648]{0}', space=vmem, size = 0x26000, scoped, tag = 'input window, operand 0, single buffered']
    #allocation3 [shape = 's32[1]{0}', space=sflag, size = 0x4, scoped, tag = 'scoped memory for tpu_custom_call.1']
    #allocation4 [shape = 's32[1]{0}', space=sflag, size = 0x4, scoped, tag = 'scoped memory for tpu_custom_call.1']
    #allocation5 [shape = 'u8[131072]{0}', space=vmem, size = 0x20000, scoped, tag = 'input window, operand 1, single buffered']
    #allocation6 [shape = 's32[1]{0}', space=sflag, size = 0x4, scoped, tag = 'scoped memory for tpu_custom_call.1']
    #allocation7 [shape = 'u8[8192]{0}', space=vmem, size = 0x2000, scoped, tag = 'input window, operand 2, single buffered']
    #allocation8 [shape = 'u8[131072]{0}', space=vmem, size = 0x20000, scoped, tag = 'input window, operand 3, single buffered']
    #allocation9 [shape = 's32[1]{0}', space=sflag, size = 0x4, scoped, tag = 'scoped memory for tpu_custom_call.1']
    #allocation10 [shape = 'u8[155648]{0}', space=vmem, size = 0x26000, scoped, tag = 'output window, operand 0, single buffered']
    %9 = vsyncpa [#allocation3], 0
    %10 = vsyncpa [#allocation6], 0
    %11 = vsyncpa [#allocation9], 0
    %12 = vsyncpa [#allocation4], 0
    // Predicated region
    $region2: #{tpu_custom_call.1} parent=1 // pred_check
      _
    $region3: #{tpu_custom_call.1} parent=1 // pred_check_branch
      %14 = sbr.rel (0) target = $region5
    $region4: #{tpu_custom_call.1} parent=1 // pred_region
      %s16 = ssub.s32 4864, 4864
      %17 = vsyncadd [#allocation3], %s16
      %s18 = sshll.u32 [#allocation2], 4
      %s19 = int_to_ptr.vmem [resolvable:$true] %s18
      %24 = dma.hbm_to_vmem [thread:$0]  %s0, 4864, %s19, [#allocation3], 128, 128, 8
    $region5: #{tpu_custom_call.1} parent=1 // pred_fallthru
      _
    // Predicated region
    $region6: #{tpu_custom_call.1} parent=1 // pred_check
      _
    $region7: #{tpu_custom_call.1} parent=1 // pred_check_branch
      %26 = sbr.rel (0) target = $region9
    $region8: #{tpu_custom_call.1} parent=1 // pred_region
      %s28 = ssub.s32 4096, 4096
      %29 = vsyncadd [#allocation6], %s28
      %s30 = sshll.u32 [#allocation5], 4
      %s31 = int_to_ptr.vmem [resolvable:$true] %s30
      %36 = dma.hbm_to_vmem [thread:$0]  %s1, 4096, %s31, [#allocation6], 128, 128, 8
    $region9: #{tpu_custom_call.1} parent=1 // pred_fallthru
      _
    // Predicated region
    $region10: #{tpu_custom_call.1} parent=1 // pred_check
      _
    $region11: #{tpu_custom_call.1} parent=1 // pred_check_branch
      %38 = sbr.rel (0) target = $region13
    $region12: #{tpu_custom_call.1} parent=1 // pred_region
      %s40 = ssub.s32 256, 256
      %41 = vsyncadd [#allocation6], %s40
      %s42 = sshll.u32 [#allocation7], 4
      %s43 = int_to_ptr.vmem [resolvable:$true] %s42
      %48 = dma.hbm_to_vmem [thread:$0]  %s2, 256, %s43, [#allocation6], 128, 128, 8
    $region13: #{tpu_custom_call.1} parent=1 // pred_fallthru
      _
    // Predicated region
    $region14: #{tpu_custom_call.1} parent=1 // pred_check
      _
    $region15: #{tpu_custom_call.1} parent=1 // pred_check_branch
      %50 = sbr.rel (0) target = $region17
    $region16: #{tpu_custom_call.1} parent=1 // pred_region
      %s52 = ssub.s32 4096, 4096
      %53 = vsyncadd [#allocation9], %s52
      %s54 = sshll.u32 [#allocation8], 4
      %s55 = int_to_ptr.vmem [resolvable:$true] %s54
      %60 = dma.hbm_to_vmem [thread:$0]  %s3, 4096, %s55, [#allocation9], 64, 64, 4
    $region17: #{tpu_custom_call.1} parent=1 // pred_fallthru
      _
    // Predicated region
    $region18: #{tpu_custom_call.1} parent=1 // pred_check
      _
    $region19: #{tpu_custom_call.1} parent=1 // pred_check_branch
      %62 = sbr.rel (0) target = $region21
    $region20: #{tpu_custom_call.1} parent=1 // pred_region
      %63 = dma.done [#allocation3], 4864
    $region21: #{tpu_custom_call.1} parent=1 // pred_fallthru
      _
    // Predicated region
    $region22: #{tpu_custom_call.1} parent=1 // pred_check
      _
    $region23: #{tpu_custom_call.1} parent=1 // pred_check_branch
      %65 = sbr.rel (0) target = $region25
    $region24: #{tpu_custom_call.1} parent=1 // pred_region
      %66 = dma.done [#allocation6], 4096
    $region25: #{tpu_custom_call.1} parent=1 // pred_fallthru
      _
    // Predicated region
    $region26: #{tpu_custom_call.1} parent=1 // pred_check
      _
    $region27: #{tpu_custom_call.1} parent=1 // pred_check_branch
      %68 = sbr.rel (0) target = $region29
    $region28: #{tpu_custom_call.1} parent=1 // pred_region
      %69 = dma.done [#allocation6], 256
    $region29: #{tpu_custom_call.1} parent=1 // pred_fallthru
      _
    // Predicated region
    $region30: #{tpu_custom_call.1} parent=1 // pred_check
      _
    $region31: #{tpu_custom_call.1} parent=1 // pred_check_branch
      %71 = sbr.rel (0) target = $region33
    $region32: #{tpu_custom_call.1} parent=1 // pred_region
      %72 = dma.done [#allocation9], 4096
    $region33: #{tpu_custom_call.1} parent=1 // pred_fallthru
      _
    %v74 = vld [vmem:[#allocation5] sm:$0xff]
    %v75 = vld [vmem:[#allocation5 + $0x8] sm:$0xff]
    %v76 = vld [vmem:[#allocation5 + $0x10] sm:$0xff]
    %v77 = vld [vmem:[#allocation5 + $0x18] sm:$0xff]
    %v78 = vld [vmem:[#allocation5 + $0x20] sm:$0xff]
    %v79 = vld [vmem:[#allocation5 + $0x28] sm:$0xff]
    %v80 = vld [vmem:[#allocation5 + $0x30] sm:$0xff]
    %v81 = vld [vmem:[#allocation5 + $0x38] sm:$0xff]
    %v82 = vld [vmem:[#allocation5 + $0x40] sm:$0xff]
    %v83 = vld [vmem:[#allocation5 + $0x48] sm:$0xff]
    %v84 = vld [vmem:[#allocation5 + $0x50] sm:$0xff]
    %v85 = vld [vmem:[#allocation5 + $0x58] sm:$0xff]
    %v86 = vld [vmem:[#allocation5 + $0x60] sm:$0xff]
    %v87 = vld [vmem:[#allocation5 + $0x68] sm:$0xff]
    %v88 = vld [vmem:[#allocation5 + $0x70] sm:$0xff]
    %v89 = vld [vmem:[#allocation5 + $0x78] sm:$0xff]
    %v90 = vld [vmem:[#allocation5 + $0x80] sm:$0xff]
    %v91 = vld [vmem:[#allocation5 + $0x88] sm:$0xff]
    %v92 = vld [vmem:[#allocation5 + $0x90] sm:$0xff]
    %v93 = vld [vmem:[#allocation5 + $0x98] sm:$0xff]
    %v94 = vld [vmem:[#allocation5 + $0xa0] sm:$0xff]
    %v95 = vld [vmem:[#allocation5 + $0xa8] sm:$0xff]
    %v96 = vld [vmem:[#allocation5 + $0xb0] sm:$0xff]
    %v97 = vld [vmem:[#allocation5 + $0xb8] sm:$0xff]
    %v98 = vld [vmem:[#allocation5 + $0xc0] sm:$0xff]
    %v99 = vld [vmem:[#allocation5 + $0xc8] sm:$0xff]
    %v100 = vld [vmem:[#allocation5 + $0xd0] sm:$0xff]
    %v101 = vld [vmem:[#allocation5 + $0xd8] sm:$0xff]
    %v102 = vld [vmem:[#allocation5 + $0xe0] sm:$0xff]
    %v103 = vld [vmem:[#allocation5 + $0xe8] sm:$0xff]
    %v104 = vld [vmem:[#allocation5 + $0xf0] sm:$0xff]
    %v105 = vld [vmem:[#allocation5 + $0xf8] sm:$0xff]
    %v106 = vld [vmem:[#allocation2] sm:$0xff]
    %v107 = vld [vmem:[#allocation2 + $0x8] sm:$0xff]
    %v108 = vld [vmem:[#allocation2 + $0x10] sm:$0xff]
    %v109 = vld [vmem:[#allocation2 + $0x18] sm:$0xff]
    %v110 = vld [vmem:[#allocation2 + $0x20] sm:$0xff]
    %v111 = vld [vmem:[#allocation2 + $0x28] sm:$0xff]
    %v112 = vld [vmem:[#allocation2 + $0x30] sm:$0xff]
    %v113 = vld [vmem:[#allocation2 + $0x38] sm:$0xff]
    %v114 = vld [vmem:[#allocation2 + $0x40] sm:$0xff]
    %v115 = vld [vmem:[#allocation2 + $0x48] sm:$0xff]
    %v116 = vld [vmem:[#allocation2 + $0x50] sm:$0xff]
    %v117 = vld [vmem:[#allocation2 + $0x58] sm:$0xff]
    %v118 = vld [vmem:[#allocation2 + $0x60] sm:$0xff]
    %v119 = vld [vmem:[#allocation2 + $0x68] sm:$0xff]
    %v120 = vld [vmem:[#allocation2 + $0x70] sm:$0xff]
    %v121 = vld [vmem:[#allocation2 + $0x78] sm:$0xff]
    %v122 = vld [vmem:[#allocation2 + $0x80] sm:$0xff]
    %v123 = vld [vmem:[#allocation2 + $0x88] sm:$0xff]
    %v124 = vld [vmem:[#allocation2 + $0x90] sm:$0xff]
    %v125 = vld [vmem:[#allocation2 + $0x98] sm:$0xff]
    %v126 = vld [vmem:[#allocation2 + $0xa0] sm:$0xff]
    %v127 = vld [vmem:[#allocation2 + $0xa8] sm:$0xff]
    %v128 = vld [vmem:[#allocation2 + $0xb0] sm:$0xff]
    %v129 = vld [vmem:[#allocation2 + $0xb8] sm:$0xff]
    %v130 = vld [vmem:[#allocation2 + $0xc0] sm:$0xff]
    %v131 = vld [vmem:[#allocation2 + $0xc8] sm:$0xff]
    %v132 = vld [vmem:[#allocation2 + $0xd0] sm:$0xff]
    %v133 = vld [vmem:[#allocation2 + $0xd8] sm:$0xff]
    %v134 = vld [vmem:[#allocation2 + $0xe0] sm:$0xff]
    %v135 = vld [vmem:[#allocation2 + $0xe8] sm:$0xff]
    %v136 = vld [vmem:[#allocation2 + $0xf0] sm:$0xff]
    %v137 = vld [vmem:[#allocation2 + $0xf8] sm:$0xff]
    %v138 = vld [vmem:[#allocation2 + $0x100] sm:$0xff]
    %v139 = vld [vmem:[#allocation2 + $0x108] sm:$0xff]
    %v140 = vld [vmem:[#allocation2 + $0x110] sm:$0xff]
    %v141 = vld [vmem:[#allocation2 + $0x118] sm:$0xff]
    %v142 = vld [vmem:[#allocation2 + $0x120] sm:$0xff]
    %v143 = vld [vmem:[#allocation2 + $0x128] sm:$0xff]
    %v144 = vadd.f32 %v106, 1e-08
    %v145 = vadd.f32 %v107, 1e-08
    %v146 = vadd.f32 %v108, 1e-08
    %v147 = vadd.f32 %v109, 1e-08
    %v148 = vadd.f32 %v110, 1e-08
    %v149 = vadd.f32 %v111, 1e-08
    %v150 = vadd.f32 %v112, 1e-08
    %v151 = vadd.f32 %v113, 1e-08
    %v152 = vadd.f32 %v114, 1e-08
    %v153 = vadd.f32 %v115, 1e-08
    %v154 = vadd.f32 %v116, 1e-08
    %v155 = vadd.f32 %v117, 1e-08
    %v156 = vadd.f32 %v118, 1e-08
    %v157 = vadd.f32 %v119, 1e-08
    %v158 = vadd.f32 %v120, 1e-08
    %v159 = vadd.f32 %v121, 1e-08
    %v160 = vadd.f32 %v122, 1e-08
    %v161 = vadd.f32 %v123, 1e-08
    %v162 = vadd.f32 %v124, 1e-08
    %v163 = vadd.f32 %v125, 1e-08
    %v164 = vadd.f32 %v126, 1e-08
    %v165 = vadd.f32 %v127, 1e-08
    %v166 = vadd.f32 %v128, 1e-08
    %v167 = vadd.f32 %v129, 1e-08
    %v168 = vadd.f32 %v130, 1e-08
    %v169 = vadd.f32 %v131, 1e-08
    %v170 = vadd.f32 %v132, 1e-08
    %v171 = vadd.f32 %v133, 1e-08
    %v172 = vadd.f32 %v134, 1e-08
    %v173 = vadd.f32 %v135, 1e-08
    %v174 = vadd.f32 %v136, 1e-08
    %v175 = vadd.f32 %v137, 1e-08
    %v176 = vadd.f32 %v138, 1e-08
    %v177 = vadd.f32 %v139, 1e-08
    %v178 = vadd.f32 %v140, 1e-08
    %v179 = vadd.f32 %v141, 1e-08
    %v180 = vadd.f32 %v142, 1e-08
    %v181 = vadd.f32 %v143, 1e-08
    %v182 = vld [vmem:[#allocation7] sm:$0x1]
    %184 = vset.pattern.permute.xlu0 0
    %185 = vperm.xlu0 %184, %v144
    %v186 = vpop.permute.xlu0 %185
    %189 = vset.pattern.permute.xlu0 0
    %190 = vperm.xlu0 %189, %v145
    %v191 = vpop.permute.xlu0 %190
    %194 = vset.pattern.permute.xlu0 0
    %195 = vperm.xlu0 %194, %v146
    %v196 = vpop.permute.xlu0 %195
    %199 = vset.pattern.permute.xlu0 0
    %200 = vperm.xlu0 %199, %v147
    %v201 = vpop.permute.xlu0 %200
    %204 = vset.pattern.permute.xlu0 0
    %205 = vperm.xlu0 %204, %v148
    %v206 = vpop.permute.xlu0 %205
    %209 = vset.pattern.permute.xlu0 0
    %210 = vperm.xlu0 %209, %v149
    %v211 = vpop.permute.xlu0 %210
    %214 = vset.pattern.permute.xlu0 0
    %215 = vperm.xlu0 %214, %v150
    %v216 = vpop.permute.xlu0 %215
    %219 = vset.pattern.permute.xlu0 0
    %220 = vperm.xlu0 %219, %v151
    %v221 = vpop.permute.xlu0 %220
    %224 = vset.pattern.permute.xlu0 0
    %225 = vperm.xlu0 %224, %v152
    %v226 = vpop.permute.xlu0 %225
    %229 = vset.pattern.permute.xlu0 0
    %230 = vperm.xlu0 %229, %v153
    %v231 = vpop.permute.xlu0 %230
    %234 = vset.pattern.permute.xlu0 0
    %235 = vperm.xlu0 %234, %v154
    %v236 = vpop.permute.xlu0 %235
    %239 = vset.pattern.permute.xlu0 0
    %240 = vperm.xlu0 %239, %v155
    %v241 = vpop.permute.xlu0 %240
    %244 = vset.pattern.permute.xlu0 0
    %245 = vperm.xlu0 %244, %v156
    %v246 = vpop.permute.xlu0 %245
    %249 = vset.pattern.permute.xlu0 0
    %250 = vperm.xlu0 %249, %v157
    %v251 = vpop.permute.xlu0 %250
    %254 = vset.pattern.permute.xlu0 0
    %255 = vperm.xlu0 %254, %v158
    %v256 = vpop.permute.xlu0 %255
    %259 = vset.pattern.permute.xlu0 0
    %260 = vperm.xlu0 %259, %v159
    %v261 = vpop.permute.xlu0 %260
    %264 = vset.pattern.permute.xlu0 0
    %265 = vperm.xlu0 %264, %v160
    %v266 = vpop.permute.xlu0 %265
    %269 = vset.pattern.permute.xlu0 0
    %270 = vperm.xlu0 %269, %v161
    %v271 = vpop.permute.xlu0 %270
    %274 = vset.pattern.permute.xlu0 0
    %275 = vperm.xlu0 %274, %v162
    %v276 = vpop.permute.xlu0 %275
    %279 = vset.pattern.permute.xlu0 0
    %280 = vperm.xlu0 %279, %v163
    %v281 = vpop.permute.xlu0 %280
    %284 = vset.pattern.permute.xlu0 0
    %285 = vperm.xlu0 %284, %v164
    %v286 = vpop.permute.xlu0 %285
    %289 = vset.pattern.permute.xlu0 0
    %290 = vperm.xlu0 %289, %v165
    %v291 = vpop.permute.xlu0 %290
    %294 = vset.pattern.permute.xlu0 0
    %295 = vperm.xlu0 %294, %v166
    %v296 = vpop.permute.xlu0 %295
    %299 = vset.pattern.permute.xlu0 0
    %300 = vperm.xlu0 %299, %v167
    %v301 = vpop.permute.xlu0 %300
    %304 = vset.pattern.permute.xlu0 0
    %305 = vperm.xlu0 %304, %v168
    %v306 = vpop.permute.xlu0 %305
    %309 = vset.pattern.permute.xlu0 0
    %310 = vperm.xlu0 %309, %v169
    %v311 = vpop.permute.xlu0 %310
    %314 = vset.pattern.permute.xlu0 0
    %315 = vperm.xlu0 %314, %v170
    %v316 = vpop.permute.xlu0 %315
    %319 = vset.pattern.permute.xlu0 0
    %320 = vperm.xlu0 %319, %v171
    %v321 = vpop.permute.xlu0 %320
    %324 = vset.pattern.permute.xlu0 0
    %325 = vperm.xlu0 %324, %v172
    %v326 = vpop.permute.xlu0 %325
    %329 = vset.pattern.permute.xlu0 0
    %330 = vperm.xlu0 %329, %v173
    %v331 = vpop.permute.xlu0 %330
    %334 = vset.pattern.permute.xlu0 0
    %335 = vperm.xlu0 %334, %v174
    %v336 = vpop.permute.xlu0 %335
    %339 = vset.pattern.permute.xlu0 0
    %340 = vperm.xlu0 %339, %v175
    %v341 = vpop.permute.xlu0 %340
    %344 = vset.pattern.permute.xlu0 0
    %345 = vperm.xlu0 %344, %v176
    %v346 = vpop.permute.xlu0 %345
    %349 = vset.pattern.permute.xlu0 0
    %350 = vperm.xlu0 %349, %v177
    %v351 = vpop.permute.xlu0 %350
    %354 = vset.pattern.permute.xlu0 0
    %355 = vperm.xlu0 %354, %v178
    %v356 = vpop.permute.xlu0 %355
    %359 = vset.pattern.permute.xlu0 0
    %360 = vperm.xlu0 %359, %v179
    %v361 = vpop.permute.xlu0 %360
    %364 = vset.pattern.permute.xlu0 0
    %365 = vperm.xlu0 %364, %v180
    %v366 = vpop.permute.xlu0 %365
    %369 = vset.pattern.permute.xlu0 0
    %370 = vperm.xlu0 %369, %v181
    %v371 = vpop.permute.xlu0 %370
    %v373 = vlaneseq
    %v374 = vshrl.u32 %v373, 7
    %v375 = vsub.s32 0, %v374
    %v376 = vrot.slane %v182, %v375
    %v377 = vmul.f32 %v186, %v376
    %v378 = vmul.f32 %v191, %v376
    %v379 = vmul.f32 %v196, %v376
    %v380 = vmul.f32 %v201, %v376
    %v381 = vmul.f32 %v206, %v376
    %v382 = vmul.f32 %v211, %v376
    %v383 = vmul.f32 %v216, %v376
    %v384 = vmul.f32 %v221, %v376
    %v385 = vmul.f32 %v226, %v376
    %v386 = vmul.f32 %v231, %v376
    %v387 = vmul.f32 %v236, %v376
    %v388 = vmul.f32 %v241, %v376
    %v389 = vmul.f32 %v246, %v376
    %v390 = vmul.f32 %v251, %v376
    %v391 = vmul.f32 %v256, %v376
    %v392 = vmul.f32 %v261, %v376
    %v393 = vmul.f32 %v266, %v376
    %v394 = vmul.f32 %v271, %v376
    %v395 = vmul.f32 %v276, %v376
    %v396 = vmul.f32 %v281, %v376
    %v397 = vmul.f32 %v286, %v376
    %v398 = vmul.f32 %v291, %v376
    %v399 = vmul.f32 %v296, %v376
    %v400 = vmul.f32 %v301, %v376
    %v401 = vmul.f32 %v306, %v376
    %v402 = vmul.f32 %v311, %v376
    %v403 = vmul.f32 %v316, %v376
    %v404 = vmul.f32 %v321, %v376
    %v405 = vmul.f32 %v326, %v376
    %v406 = vmul.f32 %v331, %v376
    %v407 = vmul.f32 %v336, %v376
    %v408 = vmul.f32 %v341, %v376
    %v409 = vmul.f32 %v346, %v376
    %v410 = vmul.f32 %v351, %v376
    %v411 = vmul.f32 %v356, %v376
    %v412 = vmul.f32 %v361, %v376
    %v413 = vmul.f32 %v366, %v376
    %v414 = vmul.f32 %v371, %v376
    %v415 = vld [vmem:[#allocation7 + $0x1] sm:$0x1]
    %v416 = vlaneseq
    %v417 = vshrl.u32 %v416, 7
    %v418 = vsub.s32 0, %v417
    %v419 = vrot.slane %v415, %v418
    %v420 = vadd.f32 %v377, %v419
    %v421 = vadd.f32 %v378, %v419
    %v422 = vadd.f32 %v379, %v419
    %v423 = vadd.f32 %v380, %v419
    %v424 = vadd.f32 %v381, %v419
    %v425 = vadd.f32 %v382, %v419
    %v426 = vadd.f32 %v383, %v419
    %v427 = vadd.f32 %v384, %v419
    %v428 = vadd.f32 %v385, %v419
    %v429 = vadd.f32 %v386, %v419
    %v430 = vadd.f32 %v387, %v419
    %v431 = vadd.f32 %v388, %v419
    %v432 = vadd.f32 %v389, %v419
    %v433 = vadd.f32 %v390, %v419
    %v434 = vadd.f32 %v391, %v419
    %v435 = vadd.f32 %v392, %v419
    %v436 = vadd.f32 %v393, %v419
    %v437 = vadd.f32 %v394, %v419
    %v438 = vadd.f32 %v395, %v419
    %v439 = vadd.f32 %v396, %v419
    %v440 = vadd.f32 %v397, %v419
    %v441 = vadd.f32 %v398, %v419
    %v442 = vadd.f32 %v399, %v419
    %v443 = vadd.f32 %v400, %v419
    %v444 = vadd.f32 %v401, %v419
    %v445 = vadd.f32 %v402, %v419
    %v446 = vadd.f32 %v403, %v419
    %v447 = vadd.f32 %v404, %v419
    %v448 = vadd.f32 %v405, %v419
    %v449 = vadd.f32 %v406, %v419
    %v450 = vadd.f32 %v407, %v419
    %v451 = vadd.f32 %v408, %v419
    %v452 = vadd.f32 %v409, %v419
    %v453 = vadd.f32 %v410, %v419
    %v454 = vadd.f32 %v411, %v419
    %v455 = vadd.f32 %v412, %v419
    %v456 = vadd.f32 %v413, %v419
    %v457 = vadd.f32 %v414, %v419
    %v458 = vld [vmem:[#allocation7 + $0x6] sm:$0x1]
    %v459 = vld [vmem:[#allocation7 + $0xa] sm:$0x1]
    %v460 = vpack.c.bf16 %v421, %v420
    %v461 = vpack.c.bf16 %v423, %v422
    %v462 = vpack.c.bf16 %v425, %v424
    %v463 = vpack.c.bf16 %v427, %v426
    %v464 = vpack.c.bf16 %v429, %v428
    %v465 = vpack.c.bf16 %v431, %v430
    %v466 = vpack.c.bf16 %v433, %v432
    %v467 = vpack.c.bf16 %v435, %v434
    %v468 = vpack.c.bf16 %v437, %v436
    %v469 = vpack.c.bf16 %v439, %v438
    %v470 = vpack.c.bf16 %v441, %v440
    %v471 = vpack.c.bf16 %v443, %v442
    %v472 = vpack.c.bf16 %v445, %v444
    %v473 = vpack.c.bf16 %v447, %v446
    %v474 = vpack.c.bf16 %v449, %v448
    %v475 = vpack.c.bf16 %v451, %v450
    %v476 = vpack.c.bf16 %v453, %v452
    %v477 = vpack.c.bf16 %v455, %v454
    %v478 = vpack.c.bf16 %v457, %v456
    %v479 = vmul.f32 %v420, %v420
    %v480 = vmul.f32 %v421, %v421
    %v481 = vmul.f32 %v422, %v422
    %v482 = vmul.f32 %v423, %v423
    %v483 = vmul.f32 %v424, %v424
    %v484 = vmul.f32 %v425, %v425
    %v485 = vmul.f32 %v426, %v426
    %v486 = vmul.f32 %v427, %v427
    %v487 = vmul.f32 %v428, %v428
    %v488 = vmul.f32 %v429, %v429
    %v489 = vmul.f32 %v430, %v430
    %v490 = vmul.f32 %v431, %v431
    %v491 = vmul.f32 %v432, %v432
    %v492 = vmul.f32 %v433, %v433
    %v493 = vmul.f32 %v434, %v434
    %v494 = vmul.f32 %v435, %v435
    %v495 = vmul.f32 %v436, %v436
    %v496 = vmul.f32 %v437, %v437
    %v497 = vmul.f32 %v438, %v438
    %v498 = vmul.f32 %v439, %v439
    %v499 = vmul.f32 %v440, %v440
    %v500 = vmul.f32 %v441, %v441
    %v501 = vmul.f32 %v442, %v442
    %v502 = vmul.f32 %v443, %v443
    %v503 = vmul.f32 %v444, %v444
    %v504 = vmul.f32 %v445, %v445
    %v505 = vmul.f32 %v446, %v446
    %v506 = vmul.f32 %v447, %v447
    %v507 = vmul.f32 %v448, %v448
    %v508 = vmul.f32 %v449, %v449
    %v509 = vmul.f32 %v450, %v450
    %v510 = vmul.f32 %v451, %v451
    %v511 = vmul.f32 %v452, %v452
    %v512 = vmul.f32 %v453, %v453
    %v513 = vmul.f32 %v454, %v454
    %v514 = vmul.f32 %v455, %v455
    %v515 = vmul.f32 %v456, %v456
    %v516 = vmul.f32 %v457, %v457
    %v517 = vpack.c.bf16 %v480, %v479
    %v518 = vpack.c.bf16 %v482, %v481
    %v519 = vpack.c.bf16 %v484, %v483
    %v520 = vpack.c.bf16 %v486, %v485
    %v521 = vpack.c.bf16 %v488, %v487
    %v522 = vpack.c.bf16 %v490, %v489
    %v523 = vpack.c.bf16 %v492, %v491
    %v524 = vpack.c.bf16 %v494, %v493
    %v525 = vpack.c.bf16 %v496, %v495
    %v526 = vpack.c.bf16 %v498, %v497
    %v527 = vpack.c.bf16 %v500, %v499
    %v528 = vpack.c.bf16 %v502, %v501
    %v529 = vpack.c.bf16 %v504, %v503
    %v530 = vpack.c.bf16 %v506, %v505
    %v531 = vpack.c.bf16 %v508, %v507
    %v532 = vpack.c.bf16 %v510, %v509
    %v533 = vpack.c.bf16 %v512, %v511
    %v534 = vpack.c.bf16 %v514, %v513
    %v535 = vpack.c.bf16 %v516, %v515
    %v568 = vunpack.c.l.b16 %v74
    %v569 = vunpack.c.h.b16 %v74
    %v570 = vunpack.c.l.b16 %v75
    %v571 = vunpack.c.h.b16 %v75
    %v572 = vunpack.c.l.b16 %v76
    %v573 = vunpack.c.h.b16 %v76
    %v574 = vunpack.c.l.b16 %v77
    %v575 = vunpack.c.h.b16 %v77
    %v576 = vunpack.c.l.b16 %v78
    %v577 = vunpack.c.h.b16 %v78
    %v578 = vunpack.c.l.b16 %v79
    %v579 = vunpack.c.h.b16 %v79
    %v580 = vunpack.c.l.b16 %v80
    %v581 = vunpack.c.h.b16 %v80
    %v582 = vunpack.c.l.b16 %v81
    %v583 = vunpack.c.h.b16 %v81
    %v584 = vunpack.c.l.b16 %v82
    %v585 = vunpack.c.h.b16 %v82
    %v586 = vunpack.c.l.b16 %v83
    %v587 = vunpack.c.h.b16 %v83
    %v588 = vunpack.c.l.b16 %v84
    %v589 = vunpack.c.h.b16 %v84
    %v590 = vunpack.c.l.b16 %v85
    %v591 = vunpack.c.h.b16 %v85
    %v592 = vunpack.c.l.b16 %v86
    %v593 = vunpack.c.h.b16 %v86
    %v594 = vunpack.c.l.b16 %v87
    %v595 = vunpack.c.h.b16 %v87
    %v596 = vunpack.c.l.b16 %v88
    %v597 = vunpack.c.h.b16 %v88
    %v598 = vunpack.c.l.b16 %v89
    %v599 = vunpack.c.h.b16 %v89
    %v600 = vunpack.c.l.b16 %v90
    %v601 = vunpack.c.h.b16 %v90
    %v602 = vunpack.c.l.b16 %v91
    %v603 = vunpack.c.h.b16 %v91
    %v604 = vunpack.c.l.b16 %v92
    %v605 = vunpack.c.h.b16 %v92
    %v606 = vunpack.c.l.b16 %v93
    %v607 = vunpack.c.h.b16 %v93
    %v608 = vunpack.c.l.b16 %v94
    %v609 = vunpack.c.h.b16 %v94
    %v610 = vunpack.c.l.b16 %v95
    %v611 = vunpack.c.h.b16 %v95
    %v612 = vunpack.c.l.b16 %v96
    %v613 = vunpack.c.h.b16 %v96
    %v614 = vunpack.c.l.b16 %v97
    %v615 = vunpack.c.h.b16 %v97
    %v616 = vunpack.c.l.b16 %v98
    %v617 = vunpack.c.h.b16 %v98
    %v618 = vunpack.c.l.b16 %v99
    %v619 = vunpack.c.h.b16 %v99
    %v620 = vunpack.c.l.b16 %v100
    %v621 = vunpack.c.h.b16 %v100
    %v622 = vunpack.c.l.b16 %v101
    %v623 = vunpack.c.h.b16 %v101
    %v624 = vunpack.c.l.b16 %v102
    %v625 = vunpack.c.h.b16 %v102
    %v626 = vunpack.c.l.b16 %v103
    %v627 = vunpack.c.h.b16 %v103
    %v628 = vunpack.c.l.b16 %v104
    %v629 = vunpack.c.h.b16 %v104
    %v630 = vunpack.c.l.b16 %v105
    %v631 = vunpack.c.h.b16 %v105
    %v632 = vpack.c.b16 %v570, %v568
    %v633 = vpack.c.b16 %v571, %v569
    %v634 = vpack.c.b16 %v574, %v572
    %v635 = vpack.c.b16 %v575, %v573
    %v636 = vpack.c.b16 %v578, %v576
    %v637 = vpack.c.b16 %v579, %v577
    %v638 = vpack.c.b16 %v582, %v580
    %v639 = vpack.c.b16 %v583, %v581
    %v640 = vpack.c.b16 %v586, %v584
    %v641 = vpack.c.b16 %v587, %v585
    %v642 = vpack.c.b16 %v590, %v588
    %v643 = vpack.c.b16 %v591, %v589
    %v644 = vpack.c.b16 %v594, %v592
    %v645 = vpack.c.b16 %v595, %v593
    %v646 = vpack.c.b16 %v598, %v596
    %v647 = vpack.c.b16 %v599, %v597
    %v648 = vpack.c.b16 %v602, %v600
    %v649 = vpack.c.b16 %v603, %v601
    %v650 = vpack.c.b16 %v606, %v604
    %v651 = vpack.c.b16 %v607, %v605
    %v652 = vpack.c.b16 %v610, %v608
    %v653 = vpack.c.b16 %v611, %v609
    %v654 = vpack.c.b16 %v614, %v612
    %v655 = vpack.c.b16 %v615, %v613
    %v656 = vpack.c.b16 %v618, %v616
    %v657 = vpack.c.b16 %v619, %v617
    %v658 = vpack.c.b16 %v622, %v620
    %v659 = vpack.c.b16 %v623, %v621
    %v660 = vpack.c.b16 %v626, %v624
    %v661 = vpack.c.b16 %v627, %v625
    %v662 = vpack.c.b16 %v630, %v628
    %v663 = vpack.c.b16 %v631, %v629
    %696 = vmatprep.subr.bf16.mxu0 %v633
    %697 = vmatpush1.bf16.msra.mxu0 %v632
    %698 = vmatprep.subr.bf16.mxu0 %v635
    %699 = vmatpush1.bf16.msra.mxu0 %v634
    %700 = vmatprep.subr.bf16.mxu0 %v637
    %701 = vmatpush1.bf16.msra.mxu0 %v636
    %702 = vmatprep.subr.bf16.mxu0 %v639
    %703 = vmatpush1.bf16.msra.mxu0 %v638
    %704 = vmatprep.subr.bf16.mxu0 %v641
    %705 = vmatpush1.bf16.msra.mxu0 %v640
    %706 = vmatprep.subr.bf16.mxu0 %v643
    %707 = vmatpush1.bf16.msra.mxu0 %v642
    %708 = vmatprep.subr.bf16.mxu0 %v645
    %709 = vmatpush1.bf16.msra.mxu0 %v644
    %710 = vmatprep.subr.bf16.mxu0 %v647
    %711 = vmatpush1.bf16.msra.mxu0 %v646
    %712 = vmatprep.subr.bf16.mxu0 %v649
    %713 = vmatpush1.bf16.msra.mxu0 %v648
    %714 = vmatprep.subr.bf16.mxu0 %v651
    %715 = vmatpush1.bf16.msra.mxu0 %v650
    %716 = vmatprep.subr.bf16.mxu0 %v653
    %717 = vmatpush1.bf16.msra.mxu0 %v652
    %718 = vmatprep.subr.bf16.mxu0 %v655
    %719 = vmatpush1.bf16.msra.mxu0 %v654
    %720 = vmatprep.subr.bf16.mxu0 %v657
    %721 = vmatpush1.bf16.msra.mxu0 %v656
    %722 = vmatprep.subr.bf16.mxu0 %v659
    %723 = vmatpush1.bf16.msra.mxu0 %v658
    %724 = vmatprep.subr.bf16.mxu0 %v661
    %725 = vmatpush1.bf16.msra.mxu0 %v660
    %726 = vmatprep.subr.bf16.mxu0 %v663
    %727 = vmatpush1.bf16.msra.mxu0 %v662
    %728 = vmatprep.mubr.bf16.mxu0 %v517
    %729 = vmatmul.mubr.bf16.gmra.mrb[0].mxu0 %v460
    %v730 = vpop.f32.mrb[0].mxu0
    %v731 = vadd.f32 0.0, %v730
    %v732 = vpop.f32.mrb[0].mxu0
    %v733 = vadd.f32 0.0, %v732
    %v734 = vpop.f32.mrb[0].mxu0
    %v735 = vadd.f32 0.0, %v734
    %v736 = vpop.f32.mrb[0].mxu0
    %v737 = vadd.f32 0.0, %v736
    %738 = vmatprep.mubr.bf16.mxu0 %v518
    %739 = vmatmul.mubr.bf16.gmra.mrb[0].mxu0 %v461
    %v740 = vpop.f32.mrb[0].mxu0
    %v741 = vadd.f32 0.0, %v740
    %v742 = vpop.f32.mrb[0].mxu0
    %v743 = vadd.f32 0.0, %v742
    %v744 = vpop.f32.mrb[0].mxu0
    %v745 = vadd.f32 0.0, %v744
    %v746 = vpop.f32.mrb[0].mxu0
    %v747 = vadd.f32 0.0, %v746
    %748 = vmatprep.mubr.bf16.mxu0 %v519
    %749 = vmatmul.mubr.bf16.gmra.mrb[0].mxu0 %v462
    %v750 = vpop.f32.mrb[0].mxu0
    %v751 = vadd.f32 0.0, %v750
    %v752 = vpop.f32.mrb[0].mxu0
    %v753 = vadd.f32 0.0, %v752
    %v754 = vpop.f32.mrb[0].mxu0
    %v755 = vadd.f32 0.0, %v754
    %v756 = vpop.f32.mrb[0].mxu0
    %v757 = vadd.f32 0.0, %v756
    %758 = vmatprep.mubr.bf16.mxu0 %v520
    %759 = vmatmul.mubr.bf16.gmra.mrb[0].mxu0 %v463
    %v760 = vpop.f32.mrb[0].mxu0
    %v761 = vadd.f32 0.0, %v760
    %v762 = vpop.f32.mrb[0].mxu0
    %v763 = vadd.f32 0.0, %v762
    %v764 = vpop.f32.mrb[0].mxu0
    %v765 = vadd.f32 0.0, %v764
    %v766 = vpop.f32.mrb[0].mxu0
    %v767 = vadd.f32 0.0, %v766
    %768 = vmatprep.mubr.bf16.mxu0 %v521
    %769 = vmatmul.mubr.bf16.gmra.mrb[0].mxu0 %v464
    %v770 = vpop.f32.mrb[0].mxu0
    %v771 = vadd.f32 0.0, %v770
    %v772 = vpop.f32.mrb[0].mxu0
    %v773 = vadd.f32 0.0, %v772
    %v774 = vpop.f32.mrb[0].mxu0
    %v775 = vadd.f32 0.0, %v774
    %v776 = vpop.f32.mrb[0].mxu0
    %v777 = vadd.f32 0.0, %v776
    %778 = vmatprep.mubr.bf16.mxu0 %v522
    %779 = vmatmul.mubr.bf16.gmra.mrb[0].mxu0 %v465
    %v780 = vpop.f32.mrb[0].mxu0
    %v781 = vadd.f32 0.0, %v780
    %v782 = vpop.f32.mrb[0].mxu0
    %v783 = vadd.f32 0.0, %v782
    %v784 = vpop.f32.mrb[0].mxu0
    %v785 = vadd.f32 0.0, %v784
    %v786 = vpop.f32.mrb[0].mxu0
    %v787 = vadd.f32 0.0, %v786
    %788 = vmatprep.mubr.bf16.mxu0 %v523
    %789 = vmatmul.mubr.bf16.gmra.mrb[0].mxu0 %v466
    %v790 = vpop.f32.mrb[0].mxu0
    %v791 = vadd.f32 0.0, %v790
    %v792 = vpop.f32.mrb[0].mxu0
    %v793 = vadd.f32 0.0, %v792
    %v794 = vpop.f32.mrb[0].mxu0
    %v795 = vadd.f32 0.0, %v794
    %v796 = vpop.f32.mrb[0].mxu0
    %v797 = vadd.f32 0.0, %v796
    %798 = vmatprep.mubr.bf16.mxu0 %v524
    %799 = vmatmul.mubr.bf16.gmra.mrb[0].mxu0 %v467
    %v800 = vpop.f32.mrb[0].mxu0
    %v801 = vadd.f32 0.0, %v800
    %v802 = vpop.f32.mrb[0].mxu0
    %v803 = vadd.f32 0.0, %v802
    %v804 = vpop.f32.mrb[0].mxu0
    %v805 = vadd.f32 0.0, %v804
    %v806 = vpop.f32.mrb[0].mxu0
    %v807 = vadd.f32 0.0, %v806
    %808 = vmatprep.mubr.bf16.mxu0 %v525
    %809 = vmatmul.mubr.bf16.gmra.mrb[0].mxu0 %v468
    %v810 = vpop.f32.mrb[0].mxu0
    %v811 = vadd.f32 0.0, %v810
    %v812 = vpop.f32.mrb[0].mxu0
    %v813 = vadd.f32 0.0, %v812
    %v814 = vpop.f32.mrb[0].mxu0
    %v815 = vadd.f32 0.0, %v814
    %v816 = vpop.f32.mrb[0].mxu0
    %v817 = vadd.f32 0.0, %v816
    %818 = vmatprep.mubr.bf16.mxu0 %v526
    %819 = vmatmul.mubr.bf16.gmra.mrb[0].mxu0 %v469
    %v820 = vpop.f32.mrb[0].mxu0
    %v821 = vadd.f32 0.0, %v820
    %v822 = vpop.f32.mrb[0].mxu0
    %v823 = vadd.f32 0.0, %v822
    %v824 = vpop.f32.mrb[0].mxu0
    %v825 = vadd.f32 0.0, %v824
    %v826 = vpop.f32.mrb[0].mxu0
    %v827 = vadd.f32 0.0, %v826
    %828 = vmatprep.mubr.bf16.mxu0 %v527
    %829 = vmatmul.mubr.bf16.gmra.mrb[0].mxu0 %v470
    %v830 = vpop.f32.mrb[0].mxu0
    %v831 = vadd.f32 0.0, %v830
    %v832 = vpop.f32.mrb[0].mxu0
    %v833 = vadd.f32 0.0, %v832
    %v834 = vpop.f32.mrb[0].mxu0
    %v835 = vadd.f32 0.0, %v834
    %v836 = vpop.f32.mrb[0].mxu0
    %v837 = vadd.f32 0.0, %v836
    %838 = vmatprep.mubr.bf16.mxu0 %v528
    %839 = vmatmul.mubr.bf16.gmra.mrb[0].mxu0 %v471
    %v840 = vpop.f32.mrb[0].mxu0
    %v841 = vadd.f32 0.0, %v840
    %v842 = vpop.f32.mrb[0].mxu0
    %v843 = vadd.f32 0.0, %v842
    %v844 = vpop.f32.mrb[0].mxu0
    %v845 = vadd.f32 0.0, %v844
    %v846 = vpop.f32.mrb[0].mxu0
    %v847 = vadd.f32 0.0, %v846
    %848 = vmatprep.mubr.bf16.mxu0 %v529
    %849 = vmatmul.mubr.bf16.gmra.mrb[0].mxu0 %v472
    %v850 = vpop.f32.mrb[0].mxu0
    %v851 = vadd.f32 0.0, %v850
    %v852 = vpop.f32.mrb[0].mxu0
    %v853 = vadd.f32 0.0, %v852
    %v854 = vpop.f32.mrb[0].mxu0
    %v855 = vadd.f32 0.0, %v854
    %v856 = vpop.f32.mrb[0].mxu0
    %v857 = vadd.f32 0.0, %v856
    %858 = vmatprep.mubr.bf16.mxu0 %v530
    %859 = vmatmul.mubr.bf16.gmra.mrb[0].mxu0 %v473
    %v860 = vpop.f32.mrb[0].mxu0
    %v861 = vadd.f32 0.0, %v860
    %v862 = vpop.f32.mrb[0].mxu0
    %v863 = vadd.f32 0.0, %v862
    %v864 = vpop.f32.mrb[0].mxu0
    %v865 = vadd.f32 0.0, %v864
    %v866 = vpop.f32.mrb[0].mxu0
    %v867 = vadd.f32 0.0, %v866
    %868 = vmatprep.mubr.bf16.mxu0 %v531
    %869 = vmatmul.mubr.bf16.gmra.mrb[0].mxu0 %v474
    %v870 = vpop.f32.mrb[0].mxu0
    %v871 = vadd.f32 0.0, %v870
    %v872 = vpop.f32.mrb[0].mxu0
    %v873 = vadd.f32 0.0, %v872
    %v874 = vpop.f32.mrb[0].mxu0
    %v875 = vadd.f32 0.0, %v874
    %v876 = vpop.f32.mrb[0].mxu0
    %v877 = vadd.f32 0.0, %v876
    %878 = vmatprep.mubr.bf16.mxu0 %v532
    %879 = vmatmul.mubr.bf16.gmra.mrb[0].mxu0 %v475
    %v880 = vpop.f32.mrb[0].mxu0
    %v881 = vadd.f32 0.0, %v880
    %v882 = vpop.f32.mrb[0].mxu0
    %v883 = vadd.f32 0.0, %v882
    %v884 = vpop.f32.mrb[0].mxu0
    %v885 = vadd.f32 0.0, %v884
    %v886 = vpop.f32.mrb[0].mxu0
    %v887 = vadd.f32 0.0, %v886
    %888 = vmatprep.mubr.bf16.mxu0 %v533
    %889 = vmatmul.mubr.bf16.gmra.mrb[0].mxu0 %v476
    %v890 = vpop.f32.mrb[0].mxu0
    %v891 = vadd.f32 0.0, %v890
    %v892 = vpop.f32.mrb[0].mxu0
    %v893 = vadd.f32 0.0, %v892
    %v894 = vpop.f32.mrb[0].mxu0
    %v895 = vadd.f32 0.0, %v894
    %v896 = vpop.f32.mrb[0].mxu0
    %v897 = vadd.f32 0.0, %v896
    %898 = vmatprep.mubr.bf16.mxu0 %v534
    %899 = vmatmul.mubr.bf16.gmra.mrb[0].mxu0 %v477
    %v900 = vpop.f32.mrb[0].mxu0
    %v901 = vadd.f32 0.0, %v900
    %v902 = vpop.f32.mrb[0].mxu0
    %v903 = vadd.f32 0.0, %v902
    %v904 = vpop.f32.mrb[0].mxu0
    %v905 = vadd.f32 0.0, %v904
    %v906 = vpop.f32.mrb[0].mxu0
    %v907 = vadd.f32 0.0, %v906
    %908 = vmatprep.mubr.bf16.mxu0 %v535
    %909 = vmatmul.mubr.bf16.gmra.mrb[0].mxu0 %v478
    %v910 = vpop.f32.mrb[0].mxu0
    %v911 = vadd.f32 0.0, %v910
    %v912 = vpop.f32.mrb[0].mxu0
    %v913 = vadd.f32 0.0, %v912
    %v914 = vpop.f32.mrb[0].mxu0
    %v915 = vadd.f32 0.0, %v914
    %v916 = vpop.f32.mrb[0].mxu0
    %v917 = vadd.f32 0.0, %v916
    %918 = vdwg.mxu0
    %v919 = vmul.f32 %v731, %v731
    %v920 = vmul.f32 %v735, %v735
    %v921 = vmul.f32 %v741, %v741
    %v922 = vmul.f32 %v745, %v745
    %v923 = vmul.f32 %v751, %v751
    %v924 = vmul.f32 %v755, %v755
    %v925 = vmul.f32 %v761, %v761
    %v926 = vmul.f32 %v765, %v765
    %v927 = vmul.f32 %v771, %v771
    %v928 = vmul.f32 %v775, %v775
    %v929 = vmul.f32 %v781, %v781
    %v930 = vmul.f32 %v785, %v785
    %v931 = vmul.f32 %v791, %v791
    %v932 = vmul.f32 %v795, %v795
    %v933 = vmul.f32 %v801, %v801
    %v934 = vmul.f32 %v805, %v805
    %v935 = vmul.f32 %v811, %v811
    %v936 = vmul.f32 %v815, %v815
    %v937 = vmul.f32 %v821, %v821
    %v938 = vmul.f32 %v825, %v825
    %v939 = vmul.f32 %v831, %v831
    %v940 = vmul.f32 %v835, %v835
    %v941 = vmul.f32 %v841, %v841
    %v942 = vmul.f32 %v845, %v845
    %v943 = vmul.f32 %v851, %v851
    %v944 = vmul.f32 %v855, %v855
    %v945 = vmul.f32 %v861, %v861
    %v946 = vmul.f32 %v865, %v865
    %v947 = vmul.f32 %v871, %v871
    %v948 = vmul.f32 %v875, %v875
    %v949 = vmul.f32 %v881, %v881
    %v950 = vmul.f32 %v885, %v885
    %v951 = vmul.f32 %v891, %v891
    %v952 = vmul.f32 %v895, %v895
    %v953 = vmul.f32 %v901, %v901
    %v954 = vmul.f32 %v905, %v905
    %v955 = vmul.f32 %v911, %v911
    %v956 = vmul.f32 %v915, %v915
    %v957 = vsub.f32 %v733, %v919
    %v958 = vsub.f32 %v737, %v920
    %v959 = vsub.f32 %v743, %v921
    %v960 = vsub.f32 %v747, %v922
    %v961 = vsub.f32 %v753, %v923
    %v962 = vsub.f32 %v757, %v924
    %v963 = vsub.f32 %v763, %v925
    %v964 = vsub.f32 %v767, %v926
    %v965 = vsub.f32 %v773, %v927
    %v966 = vsub.f32 %v777, %v928
    %v967 = vsub.f32 %v783, %v929
    %v968 = vsub.f32 %v787, %v930
    %v969 = vsub.f32 %v793, %v931
    %v970 = vsub.f32 %v797, %v932
    %v971 = vsub.f32 %v803, %v933
    %v972 = vsub.f32 %v807, %v934
    %v973 = vsub.f32 %v813, %v935
    %v974 = vsub.f32 %v817, %v936
    %v975 = vsub.f32 %v823, %v937
    %v976 = vsub.f32 %v827, %v938
    %v977 = vsub.f32 %v833, %v939
    %v978 = vsub.f32 %v837, %v940
    %v979 = vsub.f32 %v843, %v941
    %v980 = vsub.f32 %v847, %v942
    %v981 = vsub.f32 %v853, %v943
    %v982 = vsub.f32 %v857, %v944
    %v983 = vsub.f32 %v863, %v945
    %v984 = vsub.f32 %v867, %v946
    %v985 = vsub.f32 %v873, %v947
    %v986 = vsub.f32 %v877, %v948
    %v987 = vsub.f32 %v883, %v949
    %v988 = vsub.f32 %v887, %v950
    %v989 = vsub.f32 %v893, %v951
    %v990 = vsub.f32 %v897, %v952
    %v991 = vsub.f32 %v903, %v953
    %v992 = vsub.f32 %v907, %v954
    %v993 = vsub.f32 %v913, %v955
    %v994 = vsub.f32 %v917, %v956
    %v995 = vmax.f32 %v957, 0.0
    %v996 = vmax.f32 %v958, 0.0
    %v997 = vmax.f32 %v959, 0.0
    %v998 = vmax.f32 %v960, 0.0
    %v999 = vmax.f32 %v961, 0.0
    %v1000 = vmax.f32 %v962, 0.0
    %v1001 = vmax.f32 %v963, 0.0
    %v1002 = vmax.f32 %v964, 0.0
    %v1003 = vmax.f32 %v965, 0.0
    %v1004 = vmax.f32 %v966, 0.0
    %v1005 = vmax.f32 %v967, 0.0
    %v1006 = vmax.f32 %v968, 0.0
    %v1007 = vmax.f32 %v969, 0.0
    %v1008 = vmax.f32 %v970, 0.0
    %v1009 = vmax.f32 %v971, 0.0
    %v1010 = vmax.f32 %v972, 0.0
    %v1011 = vmax.f32 %v973, 0.0
    %v1012 = vmax.f32 %v974, 0.0
    %v1013 = vmax.f32 %v975, 0.0
    %v1014 = vmax.f32 %v976, 0.0
    %v1015 = vmax.f32 %v977, 0.0
    %v1016 = vmax.f32 %v978, 0.0
    %v1017 = vmax.f32 %v979, 0.0
    %v1018 = vmax.f32 %v980, 0.0
    %v1019 = vmax.f32 %v981, 0.0
    %v1020 = vmax.f32 %v982, 0.0
    %v1021 = vmax.f32 %v983, 0.0
    %v1022 = vmax.f32 %v984, 0.0
    %v1023 = vmax.f32 %v985, 0.0
    %v1024 = vmax.f32 %v986, 0.0
    %v1025 = vmax.f32 %v987, 0.0
    %v1026 = vmax.f32 %v988, 0.0
    %v1027 = vmax.f32 %v989, 0.0
    %v1028 = vmax.f32 %v990, 0.0
    %v1029 = vmax.f32 %v991, 0.0
    %v1030 = vmax.f32 %v992, 0.0
    %v1031 = vmax.f32 %v993, 0.0
    %v1032 = vmax.f32 %v994, 0.0
    %v1033 = vadd.f32 %v995, 1e-05
    %v1034 = vadd.f32 %v996, 1e-05
    %v1035 = vadd.f32 %v997, 1e-05
    %v1036 = vadd.f32 %v998, 1e-05
    %v1037 = vadd.f32 %v999, 1e-05
    %v1038 = vadd.f32 %v1000, 1e-05
    %v1039 = vadd.f32 %v1001, 1e-05
    %v1040 = vadd.f32 %v1002, 1e-05
    %v1041 = vadd.f32 %v1003, 1e-05
    %v1042 = vadd.f32 %v1004, 1e-05
    %v1043 = vadd.f32 %v1005, 1e-05
    %v1044 = vadd.f32 %v1006, 1e-05
    %v1045 = vadd.f32 %v1007, 1e-05
    %v1046 = vadd.f32 %v1008, 1e-05
    %v1047 = vadd.f32 %v1009, 1e-05
    %v1048 = vadd.f32 %v1010, 1e-05
    %v1049 = vadd.f32 %v1011, 1e-05
    %v1050 = vadd.f32 %v1012, 1e-05
    %v1051 = vadd.f32 %v1013, 1e-05
    %v1052 = vadd.f32 %v1014, 1e-05
    %v1053 = vadd.f32 %v1015, 1e-05
    %v1054 = vadd.f32 %v1016, 1e-05
    %v1055 = vadd.f32 %v1017, 1e-05
    %v1056 = vadd.f32 %v1018, 1e-05
    %v1057 = vadd.f32 %v1019, 1e-05
    %v1058 = vadd.f32 %v1020, 1e-05
    %v1059 = vadd.f32 %v1021, 1e-05
    %v1060 = vadd.f32 %v1022, 1e-05
    %v1061 = vadd.f32 %v1023, 1e-05
    %v1062 = vadd.f32 %v1024, 1e-05
    %v1063 = vadd.f32 %v1025, 1e-05
    %v1064 = vadd.f32 %v1026, 1e-05
    %v1065 = vadd.f32 %v1027, 1e-05
    %v1066 = vadd.f32 %v1028, 1e-05
    %v1067 = vadd.f32 %v1029, 1e-05
    %v1068 = vadd.f32 %v1030, 1e-05
    %v1069 = vadd.f32 %v1031, 1e-05
    %v1070 = vadd.f32 %v1032, 1e-05
    %v1071 = vrsqrt.pop %v1033
    %v1072 = vrsqrt.pop %v1034
    %v1073 = vrsqrt.pop %v1035
    %v1074 = vrsqrt.pop %v1036
    %v1075 = vrsqrt.pop %v1037
    %v1076 = vrsqrt.pop %v1038
    %v1077 = vrsqrt.pop %v1039
    %v1078 = vrsqrt.pop %v1040
    %v1079 = vrsqrt.pop %v1041
    %v1080 = vrsqrt.pop %v1042
    %v1081 = vrsqrt.pop %v1043
    %v1082 = vrsqrt.pop %v1044
    %v1083 = vrsqrt.pop %v1045
    %v1084 = vrsqrt.pop %v1046
    %v1085 = vrsqrt.pop %v1047
    %v1086 = vrsqrt.pop %v1048
    %v1087 = vrsqrt.pop %v1049
    %v1088 = vrsqrt.pop %v1050
    %v1089 = vrsqrt.pop %v1051
    %v1090 = vrsqrt.pop %v1052
    %v1091 = vrsqrt.pop %v1053
    %v1092 = vrsqrt.pop %v1054
    %v1093 = vrsqrt.pop %v1055
    %v1094 = vrsqrt.pop %v1056
    %v1095 = vrsqrt.pop %v1057
    %v1096 = vrsqrt.pop %v1058
    %v1097 = vrsqrt.pop %v1059
    %v1098 = vrsqrt.pop %v1060
    %v1099 = vrsqrt.pop %v1061
    %v1100 = vrsqrt.pop %v1062
    %v1101 = vrsqrt.pop %v1063
    %v1102 = vrsqrt.pop %v1064
    %v1103 = vrsqrt.pop %v1065
    %v1104 = vrsqrt.pop %v1066
    %v1105 = vrsqrt.pop %v1067
    %v1106 = vrsqrt.pop %v1068
    %v1107 = vrsqrt.pop %v1069
    %v1108 = vrsqrt.pop %v1070
    %v1109 = vsub.f32 %v420, %v731
    %v1110 = vsub.f32 %v421, %v735
    %v1111 = vsub.f32 %v422, %v741
    %v1112 = vsub.f32 %v423, %v745
    %v1113 = vsub.f32 %v424, %v751
    %v1114 = vsub.f32 %v425, %v755
    %v1115 = vsub.f32 %v426, %v761
    %v1116 = vsub.f32 %v427, %v765
    %v1117 = vsub.f32 %v428, %v771
    %v1118 = vsub.f32 %v429, %v775
    %v1119 = vsub.f32 %v430, %v781
    %v1120 = vsub.f32 %v431, %v785
    %v1121 = vsub.f32 %v432, %v791
    %v1122 = vsub.f32 %v433, %v795
    %v1123 = vsub.f32 %v434, %v801
    %v1124 = vsub.f32 %v435, %v805
    %v1125 = vsub.f32 %v436, %v811
    %v1126 = vsub.f32 %v437, %v815
    %v1127 = vsub.f32 %v438, %v821
    %v1128 = vsub.f32 %v439, %v825
    %v1129 = vsub.f32 %v440, %v831
    %v1130 = vsub.f32 %v441, %v835
    %v1131 = vsub.f32 %v442, %v841
    %v1132 = vsub.f32 %v443, %v845
    %v1133 = vsub.f32 %v444, %v851
    %v1134 = vsub.f32 %v445, %v855
    %v1135 = vsub.f32 %v446, %v861
    %v1136 = vsub.f32 %v447, %v865
    %v1137 = vsub.f32 %v448, %v871
    %v1138 = vsub.f32 %v449, %v875
    %v1139 = vsub.f32 %v450, %v881
    %v1140 = vsub.f32 %v451, %v885
    %v1141 = vsub.f32 %v452, %v891
    %v1142 = vsub.f32 %v453, %v895
    %v1143 = vsub.f32 %v454, %v901
    %v1144 = vsub.f32 %v455, %v905
    %v1145 = vsub.f32 %v456, %v911
    %v1146 = vsub.f32 %v457, %v915
    %v1147 = vlaneseq
    %v1148 = vshrl.u32 %v1147, 7
    %v1149 = vsub.s32 0, %v1148
    %v1150 = vrot.slane %v458, %v1149
    %v1151 = vmul.f32 %v1071, %v1150
    %v1152 = vmul.f32 %v1072, %v1150
    %v1153 = vmul.f32 %v1073, %v1150
    %v1154 = vmul.f32 %v1074, %v1150
    %v1155 = vmul.f32 %v1075, %v1150
    %v1156 = vmul.f32 %v1076, %v1150
    %v1157 = vmul.f32 %v1077, %v1150
    %v1158 = vmul.f32 %v1078, %v1150
    %v1159 = vmul.f32 %v1079, %v1150
    %v1160 = vmul.f32 %v1080, %v1150
    %v1161 = vmul.f32 %v1081, %v1150
    %v1162 = vmul.f32 %v1082, %v1150
    %v1163 = vmul.f32 %v1083, %v1150
    %v1164 = vmul.f32 %v1084, %v1150
    %v1165 = vmul.f32 %v1085, %v1150
    %v1166 = vmul.f32 %v1086, %v1150
    %v1167 = vmul.f32 %v1087, %v1150
    %v1168 = vmul.f32 %v1088, %v1150
    %v1169 = vmul.f32 %v1089, %v1150
    %v1170 = vmul.f32 %v1090, %v1150
    %v1171 = vmul.f32 %v1091, %v1150
    %v1172 = vmul.f32 %v1092, %v1150
    %v1173 = vmul.f32 %v1093, %v1150
    %v1174 = vmul.f32 %v1094, %v1150
    %v1175 = vmul.f32 %v1095, %v1150
    %v1176 = vmul.f32 %v1096, %v1150
    %v1177 = vmul.f32 %v1097, %v1150
    %v1178 = vmul.f32 %v1098, %v1150
    %v1179 = vmul.f32 %v1099, %v1150
    %v1180 = vmul.f32 %v1100, %v1150
    %v1181 = vmul.f32 %v1101, %v1150
    %v1182 = vmul.f32 %v1102, %v1150
    %v1183 = vmul.f32 %v1103, %v1150
    %v1184 = vmul.f32 %v1104, %v1150
    %v1185 = vmul.f32 %v1105, %v1150
    %v1186 = vmul.f32 %v1106, %v1150
    %v1187 = vmul.f32 %v1107, %v1150
    %v1188 = vmul.f32 %v1108, %v1150
    %v1189 = vmul.f32 %v1109, %v1151
    %v1190 = vmul.f32 %v1110, %v1152
    %v1191 = vmul.f32 %v1111, %v1153
    %v1192 = vmul.f32 %v1112, %v1154
    %v1193 = vmul.f32 %v1113, %v1155
    %v1194 = vmul.f32 %v1114, %v1156
    %v1195 = vmul.f32 %v1115, %v1157
    %v1196 = vmul.f32 %v1116, %v1158
    %v1197 = vmul.f32 %v1117, %v1159
    %v1198 = vmul.f32 %v1118, %v1160
    %v1199 = vmul.f32 %v1119, %v1161
    %v1200 = vmul.f32 %v1120, %v1162
    %v1201 = vmul.f32 %v1121, %v1163
    %v1202 = vmul.f32 %v1122, %v1164
    %v1203 = vmul.f32 %v1123, %v1165
    %v1204 = vmul.f32 %v1124, %v1166
    %v1205 = vmul.f32 %v1125, %v1167
    %v1206 = vmul.f32 %v1126, %v1168
    %v1207 = vmul.f32 %v1127, %v1169
    %v1208 = vmul.f32 %v1128, %v1170
    %v1209 = vmul.f32 %v1129, %v1171
    %v1210 = vmul.f32 %v1130, %v1172
    %v1211 = vmul.f32 %v1131, %v1173
    %v1212 = vmul.f32 %v1132, %v1174
    %v1213 = vmul.f32 %v1133, %v1175
    %v1214 = vmul.f32 %v1134, %v1176
    %v1215 = vmul.f32 %v1135, %v1177
    %v1216 = vmul.f32 %v1136, %v1178
    %v1217 = vmul.f32 %v1137, %v1179
    %v1218 = vmul.f32 %v1138, %v1180
    %v1219 = vmul.f32 %v1139, %v1181
    %v1220 = vmul.f32 %v1140, %v1182
    %v1221 = vmul.f32 %v1141, %v1183
    %v1222 = vmul.f32 %v1142, %v1184
    %v1223 = vmul.f32 %v1143, %v1185
    %v1224 = vmul.f32 %v1144, %v1186
    %v1225 = vmul.f32 %v1145, %v1187
    %v1226 = vmul.f32 %v1146, %v1188
    %v1227 = vlaneseq
    %v1228 = vshrl.u32 %v1227, 7
    %v1229 = vsub.s32 0, %v1228
    %v1230 = vrot.slane %v459, %v1229
    %v1231 = vadd.f32 %v1189, %v1230
    %v1232 = vadd.f32 %v1190, %v1230
    %v1233 = vadd.f32 %v1191, %v1230
    %v1234 = vadd.f32 %v1192, %v1230
    %v1235 = vadd.f32 %v1193, %v1230
    %v1236 = vadd.f32 %v1194, %v1230
    %v1237 = vadd.f32 %v1195, %v1230
    %v1238 = vadd.f32 %v1196, %v1230
    %v1239 = vadd.f32 %v1197, %v1230
    %v1240 = vadd.f32 %v1198, %v1230
    %v1241 = vadd.f32 %v1199, %v1230
    %v1242 = vadd.f32 %v1200, %v1230
    %v1243 = vadd.f32 %v1201, %v1230
    %v1244 = vadd.f32 %v1202, %v1230
    %v1245 = vadd.f32 %v1203, %v1230
    %v1246 = vadd.f32 %v1204, %v1230
    %v1247 = vadd.f32 %v1205, %v1230
    %v1248 = vadd.f32 %v1206, %v1230
    %v1249 = vadd.f32 %v1207, %v1230
    %v1250 = vadd.f32 %v1208, %v1230
    %v1251 = vadd.f32 %v1209, %v1230
    %v1252 = vadd.f32 %v1210, %v1230
    %v1253 = vadd.f32 %v1211, %v1230
    %v1254 = vadd.f32 %v1212, %v1230
    %v1255 = vadd.f32 %v1213, %v1230
    %v1256 = vadd.f32 %v1214, %v1230
    %v1257 = vadd.f32 %v1215, %v1230
    %v1258 = vadd.f32 %v1216, %v1230
    %v1259 = vadd.f32 %v1217, %v1230
    %v1260 = vadd.f32 %v1218, %v1230
    %v1261 = vadd.f32 %v1219, %v1230
    %v1262 = vadd.f32 %v1220, %v1230
    %v1263 = vadd.f32 %v1221, %v1230
    %v1264 = vadd.f32 %v1222, %v1230
    %v1265 = vadd.f32 %v1223, %v1230
    %v1266 = vadd.f32 %v1224, %v1230
    %v1267 = vadd.f32 %v1225, %v1230
    %v1268 = vadd.f32 %v1226, %v1230
    %v1269 = vmax.f32 %v1231, 0.0
    %v1270 = vmax.f32 %v1232, 0.0
    %v1271 = vmax.f32 %v1233, 0.0
    %v1272 = vmax.f32 %v1234, 0.0
    %v1273 = vmax.f32 %v1235, 0.0
    %v1274 = vmax.f32 %v1236, 0.0
    %v1275 = vmax.f32 %v1237, 0.0
    %v1276 = vmax.f32 %v1238, 0.0
    %v1277 = vmax.f32 %v1239, 0.0
    %v1278 = vmax.f32 %v1240, 0.0
    %v1279 = vmax.f32 %v1241, 0.0
    %v1280 = vmax.f32 %v1242, 0.0
    %v1281 = vmax.f32 %v1243, 0.0
    %v1282 = vmax.f32 %v1244, 0.0
    %v1283 = vmax.f32 %v1245, 0.0
    %v1284 = vmax.f32 %v1246, 0.0
    %v1285 = vmax.f32 %v1247, 0.0
    %v1286 = vmax.f32 %v1248, 0.0
    %v1287 = vmax.f32 %v1249, 0.0
    %v1288 = vmax.f32 %v1250, 0.0
    %v1289 = vmax.f32 %v1251, 0.0
    %v1290 = vmax.f32 %v1252, 0.0
    %v1291 = vmax.f32 %v1253, 0.0
    %v1292 = vmax.f32 %v1254, 0.0
    %v1293 = vmax.f32 %v1255, 0.0
    %v1294 = vmax.f32 %v1256, 0.0
    %v1295 = vmax.f32 %v1257, 0.0
    %v1296 = vmax.f32 %v1258, 0.0
    %v1297 = vmax.f32 %v1259, 0.0
    %v1298 = vmax.f32 %v1260, 0.0
    %v1299 = vmax.f32 %v1261, 0.0
    %v1300 = vmax.f32 %v1262, 0.0
    %v1301 = vmax.f32 %v1263, 0.0
    %v1302 = vmax.f32 %v1264, 0.0
    %v1303 = vmax.f32 %v1265, 0.0
    %v1304 = vmax.f32 %v1266, 0.0
    %v1305 = vmax.f32 %v1267, 0.0
    %v1306 = vmax.f32 %v1268, 0.0
    %v1307 = vpack.c.bf16 %v1270, %v1269
    %v1308 = vpack.c.bf16 %v1272, %v1271
    %v1309 = vpack.c.bf16 %v1274, %v1273
    %v1310 = vpack.c.bf16 %v1276, %v1275
    %v1311 = vpack.c.bf16 %v1278, %v1277
    %v1312 = vpack.c.bf16 %v1280, %v1279
    %v1313 = vpack.c.bf16 %v1282, %v1281
    %v1314 = vpack.c.bf16 %v1284, %v1283
    %v1315 = vpack.c.bf16 %v1286, %v1285
    %v1316 = vpack.c.bf16 %v1288, %v1287
    %v1317 = vpack.c.bf16 %v1290, %v1289
    %v1318 = vpack.c.bf16 %v1292, %v1291
    %v1319 = vpack.c.bf16 %v1294, %v1293
    %v1320 = vpack.c.bf16 %v1296, %v1295
    %v1321 = vpack.c.bf16 %v1298, %v1297
    %v1322 = vpack.c.bf16 %v1300, %v1299
    %v1323 = vpack.c.bf16 %v1302, %v1301
    %v1324 = vpack.c.bf16 %v1304, %v1303
    %v1325 = vpack.c.bf16 %v1306, %v1305
    %v1326 = vld [vmem:[#allocation8] sm:$0xf]
    %v1327 = vld [vmem:[#allocation8 + $0x4] sm:$0xf]
    %v1328 = vld [vmem:[#allocation8 + $0x8] sm:$0xf]
    %v1329 = vld [vmem:[#allocation8 + $0xc] sm:$0xf]
    %v1330 = vld [vmem:[#allocation8 + $0x10] sm:$0xf]
    %v1331 = vld [vmem:[#allocation8 + $0x14] sm:$0xf]
    %v1332 = vld [vmem:[#allocation8 + $0x18] sm:$0xf]
    %v1333 = vld [vmem:[#allocation8 + $0x1c] sm:$0xf]
    %v1334 = vld [vmem:[#allocation8 + $0x20] sm:$0xf]
    %v1335 = vld [vmem:[#allocation8 + $0x24] sm:$0xf]
    %v1336 = vld [vmem:[#allocation8 + $0x28] sm:$0xf]
    %v1337 = vld [vmem:[#allocation8 + $0x2c] sm:$0xf]
    %v1338 = vld [vmem:[#allocation8 + $0x30] sm:$0xf]
    %v1339 = vld [vmem:[#allocation8 + $0x34] sm:$0xf]
    %v1340 = vld [vmem:[#allocation8 + $0x38] sm:$0xf]
    %v1341 = vld [vmem:[#allocation8 + $0x3c] sm:$0xf]
    %v1342 = vld [vmem:[#allocation7 + $0x2] sm:$0x1]
    %v1343 = vlaneseq
    %v1344 = vshrl.u32 %v1343, 7
    %v1345 = vsub.s32 0, %v1344
    %v1346 = vrot.slane %v1342, %v1345
    %v1363 = vunpack.c.l.b16 %v1326
    %v1364 = vunpack.c.l.b16 %v1327
    %v1365 = vunpack.c.l.b16 %v1328
    %v1366 = vunpack.c.l.b16 %v1329
    %v1367 = vunpack.c.l.b16 %v1330
    %v1368 = vunpack.c.l.b16 %v1331
    %v1369 = vunpack.c.l.b16 %v1332
    %v1370 = vunpack.c.l.b16 %v1333
    %v1371 = vunpack.c.l.b16 %v1334
    %v1372 = vunpack.c.l.b16 %v1335
    %v1373 = vunpack.c.l.b16 %v1336
    %v1374 = vunpack.c.l.b16 %v1337
    %v1375 = vunpack.c.l.b16 %v1338
    %v1376 = vunpack.c.l.b16 %v1339
    %v1377 = vunpack.c.l.b16 %v1340
    %v1378 = vunpack.c.l.b16 %v1341
    %v1379 = vpack.c.b16 %v1364, %v1363
    %v1380 = vpack.c.b16 %v1366, %v1365
    %v1381 = vpack.c.b16 %v1368, %v1367
    %v1382 = vpack.c.b16 %v1370, %v1369
    %v1383 = vpack.c.b16 %v1372, %v1371
    %v1384 = vpack.c.b16 %v1374, %v1373
    %v1385 = vpack.c.b16 %v1376, %v1375
    %v1386 = vpack.c.b16 %v1378, %v1377
    %1395 = vmatprep.subr.bf16.mxu0 0
    %1396 = vmatpush1.bf16.msra.mxu0 %v1379
    %1397 = vmatprep.subr.bf16.mxu0 0
    %1398 = vmatpush1.bf16.msra.mxu0 %v1380
    %1399 = vmatprep.subr.bf16.mxu0 0
    %1400 = vmatpush1.bf16.msra.mxu0 %v1381
    %1401 = vmatprep.subr.bf16.mxu0 0
    %1402 = vmatpush1.bf16.msra.mxu0 %v1382
    %1403 = vmatprep.subr.bf16.mxu0 0
    %1404 = vmatpush1.bf16.msra.mxu0 %v1383
    %1405 = vmatprep.subr.bf16.mxu0 0
    %1406 = vmatpush1.bf16.msra.mxu0 %v1384
    %1407 = vmatprep.subr.bf16.mxu0 0
    %1408 = vmatpush1.bf16.msra.mxu0 %v1385
    %1409 = vmatprep.subr.bf16.mxu0 0
    %1410 = vmatpush1.bf16.msra.mxu0 %v1386
    %1411 = vmatprep.subr.bf16.mxu0 0
    %1412 = vmatpush1.bf16.msra.mxu0 0
    %1413 = vmatprep.subr.bf16.mxu0 0
    %1414 = vmatpush1.bf16.msra.mxu0 0
    %1415 = vmatprep.subr.bf16.mxu0 0
    %1416 = vmatpush1.bf16.msra.mxu0 0
    %1417 = vmatprep.subr.bf16.mxu0 0
    %1418 = vmatpush1.bf16.msra.mxu0 0
    %1419 = vmatprep.subr.bf16.mxu0 0
    %1420 = vmatpush1.bf16.msra.mxu0 0
    %1421 = vmatprep.subr.bf16.mxu0 0
    %1422 = vmatpush1.bf16.msra.mxu0 0
    %1423 = vmatprep.subr.bf16.mxu0 0
    %1424 = vmatpush1.bf16.msra.mxu0 0
    %1425 = vmatprep.subr.bf16.mxu0 0
    %1426 = vmatpush1.bf16.msra.mxu0 0
    %1427 = vmatprep.mubr.bf16.mxu0 0
    %1428 = vmatmul.mubr.bf16.gmra.mrb[0].mxu0 %v1307
    %v1429 = vpop.f32.mrb[0].mxu0
    %v1430 = vadd.f32 %v1346, %v1429
    %v1431 = vpop.f32.mrb[0].mxu0
    %v1432 = vpop.f32.mrb[0].mxu0
    %v1433 = vadd.f32 %v1346, %v1432
    %v1434 = vpop.f32.mrb[0].mxu0
    %1435 = vmatprep.mubr.bf16.mxu0 0
    %1436 = vmatmul.mubr.bf16.gmra.mrb[0].mxu0 %v1308
    %v1437 = vpop.f32.mrb[0].mxu0
    %v1438 = vadd.f32 %v1346, %v1437
    %v1439 = vpop.f32.mrb[0].mxu0
    %v1440 = vpop.f32.mrb[0].mxu0
    %v1441 = vadd.f32 %v1346, %v1440
    %v1442 = vpop.f32.mrb[0].mxu0
    %1443 = vmatprep.mubr.bf16.mxu0 0
    %1444 = vmatmul.mubr.bf16.gmra.mrb[0].mxu0 %v1309
    %v1445 = vpop.f32.mrb[0].mxu0
    %v1446 = vadd.f32 %v1346, %v1445
    %v1447 = vpop.f32.mrb[0].mxu0
    %v1448 = vpop.f32.mrb[0].mxu0
    %v1449 = vadd.f32 %v1346, %v1448
    %v1450 = vpop.f32.mrb[0].mxu0
    %1451 = vmatprep.mubr.bf16.mxu0 0
    %1452 = vmatmul.mubr.bf16.gmra.mrb[0].mxu0 %v1310
    %v1453 = vpop.f32.mrb[0].mxu0
    %v1454 = vadd.f32 %v1346, %v1453
    %v1455 = vpop.f32.mrb[0].mxu0
    %v1456 = vpop.f32.mrb[0].mxu0
    %v1457 = vadd.f32 %v1346, %v1456
    %v1458 = vpop.f32.mrb[0].mxu0
    %1459 = vmatprep.mubr.bf16.mxu0 0
    %1460 = vmatmul.mubr.bf16.gmra.mrb[0].mxu0 %v1311
    %v1461 = vpop.f32.mrb[0].mxu0
    %v1462 = vadd.f32 %v1346, %v1461
    %v1463 = vpop.f32.mrb[0].mxu0
    %v1464 = vpop.f32.mrb[0].mxu0
    %v1465 = vadd.f32 %v1346, %v1464
    %v1466 = vpop.f32.mrb[0].mxu0
    %1467 = vmatprep.mubr.bf16.mxu0 0
    %1468 = vmatmul.mubr.bf16.gmra.mrb[0].mxu0 %v1312
    %v1469 = vpop.f32.mrb[0].mxu0
    %v1470 = vadd.f32 %v1346, %v1469
    %v1471 = vpop.f32.mrb[0].mxu0
    %v1472 = vpop.f32.mrb[0].mxu0
    %v1473 = vadd.f32 %v1346, %v1472
    %v1474 = vpop.f32.mrb[0].mxu0
    %1475 = vmatprep.mubr.bf16.mxu0 0
    %1476 = vmatmul.mubr.bf16.gmra.mrb[0].mxu0 %v1313
    %v1477 = vpop.f32.mrb[0].mxu0
    %v1478 = vadd.f32 %v1346, %v1477
    %v1479 = vpop.f32.mrb[0].mxu0
    %v1480 = vpop.f32.mrb[0].mxu0
    %v1481 = vadd.f32 %v1346, %v1480
    %v1482 = vpop.f32.mrb[0].mxu0
    %1483 = vmatprep.mubr.bf16.mxu0 0
    %1484 = vmatmul.mubr.bf16.gmra.mrb[0].mxu0 %v1314
    %v1485 = vpop.f32.mrb[0].mxu0
    %v1486 = vadd.f32 %v1346, %v1485
    %v1487 = vpop.f32.mrb[0].mxu0
    %v1488 = vpop.f32.mrb[0].mxu0
    %v1489 = vadd.f32 %v1346, %v1488
    %v1490 = vpop.f32.mrb[0].mxu0
    %1491 = vmatprep.mubr.bf16.mxu0 0
    %1492 = vmatmul.mubr.bf16.gmra.mrb[0].mxu0 %v1315
    %v1493 = vpop.f32.mrb[0].mxu0
    %v1494 = vadd.f32 %v1346, %v1493
    %v1495 = vpop.f32.mrb[0].mxu0
    %v1496 = vpop.f32.mrb[0].mxu0
    %v1497 = vadd.f32 %v1346, %v1496
    %v1498 = vpop.f32.mrb[0].mxu0
    %1499 = vmatprep.mubr.bf16.mxu0 0
    %1500 = vmatmul.mubr.bf16.gmra.mrb[0].mxu0 %v1316
    %v1501 = vpop.f32.mrb[0].mxu0
    %v1502 = vadd.f32 %v1346, %v1501
    %v1503 = vpop.f32.mrb[0].mxu0
    %v1504 = vpop.f32.mrb[0].mxu0
    %v1505 = vadd.f32 %v1346, %v1504
    %v1506 = vpop.f32.mrb[0].mxu0
    %1507 = vmatprep.mubr.bf16.mxu0 0
    %1508 = vmatmul.mubr.bf16.gmra.mrb[0].mxu0 %v1317
    %v1509 = vpop.f32.mrb[0].mxu0
    %v1510 = vadd.f32 %v1346, %v1509
    %v1511 = vpop.f32.mrb[0].mxu0
    %v1512 = vpop.f32.mrb[0].mxu0
    %v1513 = vadd.f32 %v1346, %v1512
    %v1514 = vpop.f32.mrb[0].mxu0
    %1515 = vmatprep.mubr.bf16.mxu0 0
    %1516 = vmatmul.mubr.bf16.gmra.mrb[0].mxu0 %v1318
    %v1517 = vpop.f32.mrb[0].mxu0
    %v1518 = vadd.f32 %v1346, %v1517
    %v1519 = vpop.f32.mrb[0].mxu0
    %v1520 = vpop.f32.mrb[0].mxu0
    %v1521 = vadd.f32 %v1346, %v1520
    %v1522 = vpop.f32.mrb[0].mxu0
    %1523 = vmatprep.mubr.bf16.mxu0 0
    %1524 = vmatmul.mubr.bf16.gmra.mrb[0].mxu0 %v1319
    %v1525 = vpop.f32.mrb[0].mxu0
    %v1526 = vadd.f32 %v1346, %v1525
    %v1527 = vpop.f32.mrb[0].mxu0
    %v1528 = vpop.f32.mrb[0].mxu0
    %v1529 = vadd.f32 %v1346, %v1528
    %v1530 = vpop.f32.mrb[0].mxu0
    %1531 = vmatprep.mubr.bf16.mxu0 0
    %1532 = vmatmul.mubr.bf16.gmra.mrb[0].mxu0 %v1320
    %v1533 = vpop.f32.mrb[0].mxu0
    %v1534 = vadd.f32 %v1346, %v1533
    %v1535 = vpop.f32.mrb[0].mxu0
    %v1536 = vpop.f32.mrb[0].mxu0
    %v1537 = vadd.f32 %v1346, %v1536
    %v1538 = vpop.f32.mrb[0].mxu0
    %1539 = vmatprep.mubr.bf16.mxu0 0
    %1540 = vmatmul.mubr.bf16.gmra.mrb[0].mxu0 %v1321
    %v1541 = vpop.f32.mrb[0].mxu0
    %v1542 = vadd.f32 %v1346, %v1541
    %v1543 = vpop.f32.mrb[0].mxu0
    %v1544 = vpop.f32.mrb[0].mxu0
    %v1545 = vadd.f32 %v1346, %v1544
    %v1546 = vpop.f32.mrb[0].mxu0
    %1547 = vmatprep.mubr.bf16.mxu0 0
    %1548 = vmatmul.mubr.bf16.gmra.mrb[0].mxu0 %v1322
    %v1549 = vpop.f32.mrb[0].mxu0
    %v1550 = vadd.f32 %v1346, %v1549
    %v1551 = vpop.f32.mrb[0].mxu0
    %v1552 = vpop.f32.mrb[0].mxu0
    %v1553 = vadd.f32 %v1346, %v1552
    %v1554 = vpop.f32.mrb[0].mxu0
    %1555 = vmatprep.mubr.bf16.mxu0 0
    %1556 = vmatmul.mubr.bf16.gmra.mrb[0].mxu0 %v1323
    %v1557 = vpop.f32.mrb[0].mxu0
    %v1558 = vadd.f32 %v1346, %v1557
    %v1559 = vpop.f32.mrb[0].mxu0
    %v1560 = vpop.f32.mrb[0].mxu0
    %v1561 = vadd.f32 %v1346, %v1560
    %v1562 = vpop.f32.mrb[0].mxu0
    %1563 = vmatprep.mubr.bf16.mxu0 0
    %1564 = vmatmul.mubr.bf16.gmra.mrb[0].mxu0 %v1324
    %v1565 = vpop.f32.mrb[0].mxu0
    %v1566 = vadd.f32 %v1346, %v1565
    %v1567 = vpop.f32.mrb[0].mxu0
    %v1568 = vpop.f32.mrb[0].mxu0
    %v1569 = vadd.f32 %v1346, %v1568
    %v1570 = vpop.f32.mrb[0].mxu0
    %1571 = vmatprep.mubr.bf16.mxu0 0
    %1572 = vmatmul.mubr.bf16.gmra.mrb[0].mxu0 %v1325
    %v1573 = vpop.f32.mrb[0].mxu0
    %v1574 = vadd.f32 %v1346, %v1573
    %v1575 = vpop.f32.mrb[0].mxu0
    %v1576 = vpop.f32.mrb[0].mxu0
    %v1577 = vadd.f32 %v1346, %v1576
    %v1578 = vpop.f32.mrb[0].mxu0
    %1579 = vdwg.mxu0
    %v1580 = vld [vmem:[#allocation7 + $0x7] sm:$0x1]
    %v1581 = vld [vmem:[#allocation7 + $0xb] sm:$0x1]
    %v1582 = vpack.c.bf16 %v1433, %v1430
    %v1583 = vpack.c.bf16 %v1441, %v1438
    %v1584 = vpack.c.bf16 %v1449, %v1446
    %v1585 = vpack.c.bf16 %v1457, %v1454
    %v1586 = vpack.c.bf16 %v1465, %v1462
    %v1587 = vpack.c.bf16 %v1473, %v1470
    %v1588 = vpack.c.bf16 %v1481, %v1478
    %v1589 = vpack.c.bf16 %v1489, %v1486
    %v1590 = vpack.c.bf16 %v1497, %v1494
    %v1591 = vpack.c.bf16 %v1505, %v1502
    %v1592 = vpack.c.bf16 %v1513, %v1510
    %v1593 = vpack.c.bf16 %v1521, %v1518
    %v1594 = vpack.c.bf16 %v1529, %v1526
    %v1595 = vpack.c.bf16 %v1537, %v1534
    %v1596 = vpack.c.bf16 %v1545, %v1542
    %v1597 = vpack.c.bf16 %v1553, %v1550
    %v1598 = vpack.c.bf16 %v1561, %v1558
    %v1599 = vpack.c.bf16 %v1569, %v1566
    %v1600 = vpack.c.bf16 %v1577, %v1574
    %v1601 = vmul.f32 %v1430, %v1430
    %v1602 = vmul.f32 %v1433, %v1433
    %v1603 = vmul.f32 %v1438, %v1438
    %v1604 = vmul.f32 %v1441, %v1441
    %v1605 = vmul.f32 %v1446, %v1446
    %v1606 = vmul.f32 %v1449, %v1449
    %v1607 = vmul.f32 %v1454, %v1454
    %v1608 = vmul.f32 %v1457, %v1457
    %v1609 = vmul.f32 %v1462, %v1462
    %v1610 = vmul.f32 %v1465, %v1465
    %v1611 = vmul.f32 %v1470, %v1470
    %v1612 = vmul.f32 %v1473, %v1473
    %v1613 = vmul.f32 %v1478, %v1478
    %v1614 = vmul.f32 %v1481, %v1481
    %v1615 = vmul.f32 %v1486, %v1486
    %v1616 = vmul.f32 %v1489, %v1489
    %v1617 = vmul.f32 %v1494, %v1494
    %v1618 = vmul.f32 %v1497, %v1497
    %v1619 = vmul.f32 %v1502, %v1502
    %v1620 = vmul.f32 %v1505, %v1505
    %v1621 = vmul.f32 %v1510, %v1510
    %v1622 = vmul.f32 %v1513, %v1513
    %v1623 = vmul.f32 %v1518, %v1518
    %v1624 = vmul.f32 %v1521, %v1521
    %v1625 = vmul.f32 %v1526, %v1526
    %v1626 = vmul.f32 %v1529, %v1529
    %v1627 = vmul.f32 %v1534, %v1534
    %v1628 = vmul.f32 %v1537, %v1537
    %v1629 = vmul.f32 %v1542, %v1542
    %v1630 = vmul.f32 %v1545, %v1545
    %v1631 = vmul.f32 %v1550, %v1550
    %v1632 = vmul.f32 %v1553, %v1553
    %v1633 = vmul.f32 %v1558, %v1558
    %v1634 = vmul.f32 %v1561, %v1561
    %v1635 = vmul.f32 %v1566, %v1566
    %v1636 = vmul.f32 %v1569, %v1569
    %v1637 = vmul.f32 %v1574, %v1574
    %v1638 = vmul.f32 %v1577, %v1577
    %v1639 = vpack.c.bf16 %v1602, %v1601
    %v1640 = vpack.c.bf16 %v1604, %v1603
    %v1641 = vpack.c.bf16 %v1606, %v1605
    %v1642 = vpack.c.bf16 %v1608, %v1607
    %v1643 = vpack.c.bf16 %v1610, %v1609
    %v1644 = vpack.c.bf16 %v1612, %v1611
    %v1645 = vpack.c.bf16 %v1614, %v1613
    %v1646 = vpack.c.bf16 %v1616, %v1615
    %v1647 = vpack.c.bf16 %v1618, %v1617
    %v1648 = vpack.c.bf16 %v1620, %v1619
    %v1649 = vpack.c.bf16 %v1622, %v1621
    %v1650 = vpack.c.bf16 %v1624, %v1623
    %v1651 = vpack.c.bf16 %v1626, %v1625
    %v1652 = vpack.c.bf16 %v1628, %v1627
    %v1653 = vpack.c.bf16 %v1630, %v1629
    %v1654 = vpack.c.bf16 %v1632, %v1631
    %v1655 = vpack.c.bf16 %v1634, %v1633
    %v1656 = vpack.c.bf16 %v1636, %v1635
    %v1657 = vpack.c.bf16 %v1638, %v1637
    %1658 = vmatprep.subr.bf16.mxu0 %v633
    %1659 = vmatpush1.bf16.msra.mxu0 %v632
    %1660 = vmatprep.subr.bf16.mxu0 %v635
    %1661 = vmatpush1.bf16.msra.mxu0 %v634
    %1662 = vmatprep.subr.bf16.mxu0 %v637
    %1663 = vmatpush1.bf16.msra.mxu0 %v636
    %1664 = vmatprep.subr.bf16.mxu0 %v639
    %1665 = vmatpush1.bf16.msra.mxu0 %v638
    %1666 = vmatprep.subr.bf16.mxu0 %v641
    %1667 = vmatpush1.bf16.msra.mxu0 %v640
    %1668 = vmatprep.subr.bf16.mxu0 %v643
    %1669 = vmatpush1.bf16.msra.mxu0 %v642
    %1670 = vmatprep.subr.bf16.mxu0 %v645
    %1671 = vmatpush1.bf16.msra.mxu0 %v644
    %1672 = vmatprep.subr.bf16.mxu0 %v647
    %1673 = vmatpush1.bf16.msra.mxu0 %v646
    %1674 = vmatprep.subr.bf16.mxu0 %v649
    %1675 = vmatpush1.bf16.msra.mxu0 %v648
    %1676 = vmatprep.subr.bf16.mxu0 %v651
    %1677 = vmatpush1.bf16.msra.mxu0 %v650
    %1678 = vmatprep.subr.bf16.mxu0 %v653
    %1679 = vmatpush1.bf16.msra.mxu0 %v652
    %1680 = vmatprep.subr.bf16.mxu0 %v655
    %1681 = vmatpush1.bf16.msra.mxu0 %v654
    %1682 = vmatprep.subr.bf16.mxu0 %v657
    %1683 = vmatpush1.bf16.msra.mxu0 %v656
    %1684 = vmatprep.subr.bf16.mxu0 %v659
    %1685 = vmatpush1.bf16.msra.mxu0 %v658
    %1686 = vmatprep.subr.bf16.mxu0 %v661
    %1687 = vmatpush1.bf16.msra.mxu0 %v660
    %1688 = vmatprep.subr.bf16.mxu0 %v663
    %1689 = vmatpush1.bf16.msra.mxu0 %v662
    %1690 = vmatprep.mubr.bf16.mxu0 %v1639
    %1691 = vmatmul.mubr.bf16.gmra.mrb[0].mxu0 %v1582
    %v1692 = vpop.f32.mrb[0].mxu0
    %v1693 = vadd.f32 0.0, %v1692
    %v1694 = vpop.f32.mrb[0].mxu0
    %v1695 = vadd.f32 0.0, %v1694
    %v1696 = vpop.f32.mrb[0].mxu0
    %v1697 = vadd.f32 0.0, %v1696
    %v1698 = vpop.f32.mrb[0].mxu0
    %v1699 = vadd.f32 0.0, %v1698
    %1700 = vmatprep.mubr.bf16.mxu0 %v1640
    %1701 = vmatmul.mubr.bf16.gmra.mrb[0].mxu0 %v1583
    %v1702 = vpop.f32.mrb[0].mxu0
    %v1703 = vadd.f32 0.0, %v1702
    %v1704 = vpop.f32.mrb[0].mxu0
    %v1705 = vadd.f32 0.0, %v1704
    %v1706 = vpop.f32.mrb[0].mxu0
    %v1707 = vadd.f32 0.0, %v1706
    %v1708 = vpop.f32.mrb[0].mxu0
    %v1709 = vadd.f32 0.0, %v1708
    %1710 = vmatprep.mubr.bf16.mxu0 %v1641
    %1711 = vmatmul.mubr.bf16.gmra.mrb[0].mxu0 %v1584
    %v1712 = vpop.f32.mrb[0].mxu0
    %v1713 = vadd.f32 0.0, %v1712
    %v1714 = vpop.f32.mrb[0].mxu0
    %v1715 = vadd.f32 0.0, %v1714
    %v1716 = vpop.f32.mrb[0].mxu0
    %v1717 = vadd.f32 0.0, %v1716
    %v1718 = vpop.f32.mrb[0].mxu0
    %v1719 = vadd.f32 0.0, %v1718
    %1720 = vmatprep.mubr.bf16.mxu0 %v1642
    %1721 = vmatmul.mubr.bf16.gmra.mrb[0].mxu0 %v1585
    %v1722 = vpop.f32.mrb[0].mxu0
    %v1723 = vadd.f32 0.0, %v1722
    %v1724 = vpop.f32.mrb[0].mxu0
    %v1725 = vadd.f32 0.0, %v1724
    %v1726 = vpop.f32.mrb[0].mxu0
    %v1727 = vadd.f32 0.0, %v1726
    %v1728 = vpop.f32.mrb[0].mxu0
    %v1729 = vadd.f32 0.0, %v1728
    %1730 = vmatprep.mubr.bf16.mxu0 %v1643
    %1731 = vmatmul.mubr.bf16.gmra.mrb[0].mxu0 %v1586
    %v1732 = vpop.f32.mrb[0].mxu0
    %v1733 = vadd.f32 0.0, %v1732
    %v1734 = vpop.f32.mrb[0].mxu0
    %v1735 = vadd.f32 0.0, %v1734
    %v1736 = vpop.f32.mrb[0].mxu0
    %v1737 = vadd.f32 0.0, %v1736
    %v1738 = vpop.f32.mrb[0].mxu0
    %v1739 = vadd.f32 0.0, %v1738
    %1740 = vmatprep.mubr.bf16.mxu0 %v1644
    %1741 = vmatmul.mubr.bf16.gmra.mrb[0].mxu0 %v1587
    %v1742 = vpop.f32.mrb[0].mxu0
    %v1743 = vadd.f32 0.0, %v1742
    %v1744 = vpop.f32.mrb[0].mxu0
    %v1745 = vadd.f32 0.0, %v1744
    %v1746 = vpop.f32.mrb[0].mxu0
    %v1747 = vadd.f32 0.0, %v1746
    %v1748 = vpop.f32.mrb[0].mxu0
    %v1749 = vadd.f32 0.0, %v1748
    %1750 = vmatprep.mubr.bf16.mxu0 %v1645
    %1751 = vmatmul.mubr.bf16.gmra.mrb[0].mxu0 %v1588
    %v1752 = vpop.f32.mrb[0].mxu0
    %v1753 = vadd.f32 0.0, %v1752
    %v1754 = vpop.f32.mrb[0].mxu0
    %v1755 = vadd.f32 0.0, %v1754
    %v1756 = vpop.f32.mrb[0].mxu0
    %v1757 = vadd.f32 0.0, %v1756
    %v1758 = vpop.f32.mrb[0].mxu0
    %v1759 = vadd.f32 0.0, %v1758
    %1760 = vmatprep.mubr.bf16.mxu0 %v1646
    %1761 = vmatmul.mubr.bf16.gmra.mrb[0].mxu0 %v1589
    %v1762 = vpop.f32.mrb[0].mxu0
    %v1763 = vadd.f32 0.0, %v1762
    %v1764 = vpop.f32.mrb[0].mxu0
    %v1765 = vadd.f32 0.0, %v1764
    %v1766 = vpop.f32.mrb[0].mxu0
    %v1767 = vadd.f32 0.0, %v1766
    %v1768 = vpop.f32.mrb[0].mxu0
    %v1769 = vadd.f32 0.0, %v1768
    %1770 = vmatprep.mubr.bf16.mxu0 %v1647
    %1771 = vmatmul.mubr.bf16.gmra.mrb[0].mxu0 %v1590
    %v1772 = vpop.f32.mrb[0].mxu0
    %v1773 = vadd.f32 0.0, %v1772
    %v1774 = vpop.f32.mrb[0].mxu0
    %v1775 = vadd.f32 0.0, %v1774
    %v1776 = vpop.f32.mrb[0].mxu0
    %v1777 = vadd.f32 0.0, %v1776
    %v1778 = vpop.f32.mrb[0].mxu0
    %v1779 = vadd.f32 0.0, %v1778
    %1780 = vmatprep.mubr.bf16.mxu0 %v1648
    %1781 = vmatmul.mubr.bf16.gmra.mrb[0].mxu0 %v1591
    %v1782 = vpop.f32.mrb[0].mxu0
    %v1783 = vadd.f32 0.0, %v1782
    %v1784 = vpop.f32.mrb[0].mxu0
    %v1785 = vadd.f32 0.0, %v1784
    %v1786 = vpop.f32.mrb[0].mxu0
    %v1787 = vadd.f32 0.0, %v1786
    %v1788 = vpop.f32.mrb[0].mxu0
    %v1789 = vadd.f32 0.0, %v1788
    %1790 = vmatprep.mubr.bf16.mxu0 %v1649
    %1791 = vmatmul.mubr.bf16.gmra.mrb[0].mxu0 %v1592
    %v1792 = vpop.f32.mrb[0].mxu0
    %v1793 = vadd.f32 0.0, %v1792
    %v1794 = vpop.f32.mrb[0].mxu0
    %v1795 = vadd.f32 0.0, %v1794
    %v1796 = vpop.f32.mrb[0].mxu0
    %v1797 = vadd.f32 0.0, %v1796
    %v1798 = vpop.f32.mrb[0].mxu0
    %v1799 = vadd.f32 0.0, %v1798
    %1800 = vmatprep.mubr.bf16.mxu0 %v1650
    %1801 = vmatmul.mubr.bf16.gmra.mrb[0].mxu0 %v1593
    %v1802 = vpop.f32.mrb[0].mxu0
    %v1803 = vadd.f32 0.0, %v1802
    %v1804 = vpop.f32.mrb[0].mxu0
    %v1805 = vadd.f32 0.0, %v1804
    %v1806 = vpop.f32.mrb[0].mxu0
    %v1807 = vadd.f32 0.0, %v1806
    %v1808 = vpop.f32.mrb[0].mxu0
    %v1809 = vadd.f32 0.0, %v1808
    %1810 = vmatprep.mubr.bf16.mxu0 %v1651
    %1811 = vmatmul.mubr.bf16.gmra.mrb[0].mxu0 %v1594
    %v1812 = vpop.f32.mrb[0].mxu0
    %v1813 = vadd.f32 0.0, %v1812
    %v1814 = vpop.f32.mrb[0].mxu0
    %v1815 = vadd.f32 0.0, %v1814
    %v1816 = vpop.f32.mrb[0].mxu0
    %v1817 = vadd.f32 0.0, %v1816
    %v1818 = vpop.f32.mrb[0].mxu0
    %v1819 = vadd.f32 0.0, %v1818
    %1820 = vmatprep.mubr.bf16.mxu0 %v1652
    %1821 = vmatmul.mubr.bf16.gmra.mrb[0].mxu0 %v1595
    %v1822 = vpop.f32.mrb[0].mxu0
    %v1823 = vadd.f32 0.0, %v1822
    %v1824 = vpop.f32.mrb[0].mxu0
    %v1825 = vadd.f32 0.0, %v1824
    %v1826 = vpop.f32.mrb[0].mxu0
    %v1827 = vadd.f32 0.0, %v1826
    %v1828 = vpop.f32.mrb[0].mxu0
    %v1829 = vadd.f32 0.0, %v1828
    %1830 = vmatprep.mubr.bf16.mxu0 %v1653
    %1831 = vmatmul.mubr.bf16.gmra.mrb[0].mxu0 %v1596
    %v1832 = vpop.f32.mrb[0].mxu0
    %v1833 = vadd.f32 0.0, %v1832
    %v1834 = vpop.f32.mrb[0].mxu0
    %v1835 = vadd.f32 0.0, %v1834
    %v1836 = vpop.f32.mrb[0].mxu0
    %v1837 = vadd.f32 0.0, %v1836
    %v1838 = vpop.f32.mrb[0].mxu0
    %v1839 = vadd.f32 0.0, %v1838
    %1840 = vmatprep.mubr.bf16.mxu0 %v1654
    %1841 = vmatmul.mubr.bf16.gmra.mrb[0].mxu0 %v1597
    %v1842 = vpop.f32.mrb[0].mxu0
    %v1843 = vadd.f32 0.0, %v1842
    %v1844 = vpop.f32.mrb[0].mxu0
    %v1845 = vadd.f32 0.0, %v1844
    %v1846 = vpop.f32.mrb[0].mxu0
    %v1847 = vadd.f32 0.0, %v1846
    %v1848 = vpop.f32.mrb[0].mxu0
    %v1849 = vadd.f32 0.0, %v1848
    %1850 = vmatprep.mubr.bf16.mxu0 %v1655
    %1851 = vmatmul.mubr.bf16.gmra.mrb[0].mxu0 %v1598
    %v1852 = vpop.f32.mrb[0].mxu0
    %v1853 = vadd.f32 0.0, %v1852
    %v1854 = vpop.f32.mrb[0].mxu0
    %v1855 = vadd.f32 0.0, %v1854
    %v1856 = vpop.f32.mrb[0].mxu0
    %v1857 = vadd.f32 0.0, %v1856
    %v1858 = vpop.f32.mrb[0].mxu0
    %v1859 = vadd.f32 0.0, %v1858
    %1860 = vmatprep.mubr.bf16.mxu0 %v1656
    %1861 = vmatmul.mubr.bf16.gmra.mrb[0].mxu0 %v1599
    %v1862 = vpop.f32.mrb[0].mxu0
    %v1863 = vadd.f32 0.0, %v1862
    %v1864 = vpop.f32.mrb[0].mxu0
    %v1865 = vadd.f32 0.0, %v1864
    %v1866 = vpop.f32.mrb[0].mxu0
    %v1867 = vadd.f32 0.0, %v1866
    %v1868 = vpop.f32.mrb[0].mxu0
    %v1869 = vadd.f32 0.0, %v1868
    %1870 = vmatprep.mubr.bf16.mxu0 %v1657
    %1871 = vmatmul.mubr.bf16.gmra.mrb[0].mxu0 %v1600
    %v1872 = vpop.f32.mrb[0].mxu0
    %v1873 = vadd.f32 0.0, %v1872
    %v1874 = vpop.f32.mrb[0].mxu0
    %v1875 = vadd.f32 0.0, %v1874
    %v1876 = vpop.f32.mrb[0].mxu0
    %v1877 = vadd.f32 0.0, %v1876
    %v1878 = vpop.f32.mrb[0].mxu0
    %v1879 = vadd.f32 0.0, %v1878
    %1880 = vdwg.mxu0
    %v1881 = vmul.f32 %v1693, %v1693
    %v1882 = vmul.f32 %v1697, %v1697
    %v1883 = vmul.f32 %v1703, %v1703
    %v1884 = vmul.f32 %v1707, %v1707
    %v1885 = vmul.f32 %v1713, %v1713
    %v1886 = vmul.f32 %v1717, %v1717
    %v1887 = vmul.f32 %v1723, %v1723
    %v1888 = vmul.f32 %v1727, %v1727
    %v1889 = vmul.f32 %v1733, %v1733
    %v1890 = vmul.f32 %v1737, %v1737
    %v1891 = vmul.f32 %v1743, %v1743
    %v1892 = vmul.f32 %v1747, %v1747
    %v1893 = vmul.f32 %v1753, %v1753
    %v1894 = vmul.f32 %v1757, %v1757
    %v1895 = vmul.f32 %v1763, %v1763
    %v1896 = vmul.f32 %v1767, %v1767
    %v1897 = vmul.f32 %v1773, %v1773
    %v1898 = vmul.f32 %v1777, %v1777
    %v1899 = vmul.f32 %v1783, %v1783
    %v1900 = vmul.f32 %v1787, %v1787
    %v1901 = vmul.f32 %v1793, %v1793
    %v1902 = vmul.f32 %v1797, %v1797
    %v1903 = vmul.f32 %v1803, %v1803
    %v1904 = vmul.f32 %v1807, %v1807
    %v1905 = vmul.f32 %v1813, %v1813
    %v1906 = vmul.f32 %v1817, %v1817
    %v1907 = vmul.f32 %v1823, %v1823
    %v1908 = vmul.f32 %v1827, %v1827
    %v1909 = vmul.f32 %v1833, %v1833
    %v1910 = vmul.f32 %v1837, %v1837
    %v1911 = vmul.f32 %v1843, %v1843
    %v1912 = vmul.f32 %v1847, %v1847
    %v1913 = vmul.f32 %v1853, %v1853
    %v1914 = vmul.f32 %v1857, %v1857
    %v1915 = vmul.f32 %v1863, %v1863
    %v1916 = vmul.f32 %v1867, %v1867
    %v1917 = vmul.f32 %v1873, %v1873
    %v1918 = vmul.f32 %v1877, %v1877
    %v1919 = vsub.f32 %v1695, %v1881
    %v1920 = vsub.f32 %v1699, %v1882
    %v1921 = vsub.f32 %v1705, %v1883
    %v1922 = vsub.f32 %v1709, %v1884
    %v1923 = vsub.f32 %v1715, %v1885
    %v1924 = vsub.f32 %v1719, %v1886
    %v1925 = vsub.f32 %v1725, %v1887
    %v1926 = vsub.f32 %v1729, %v1888
    %v1927 = vsub.f32 %v1735, %v1889
    %v1928 = vsub.f32 %v1739, %v1890
    %v1929 = vsub.f32 %v1745, %v1891
    %v1930 = vsub.f32 %v1749, %v1892
    %v1931 = vsub.f32 %v1755, %v1893
    %v1932 = vsub.f32 %v1759, %v1894
    %v1933 = vsub.f32 %v1765, %v1895
    %v1934 = vsub.f32 %v1769, %v1896
    %v1935 = vsub.f32 %v1775, %v1897
    %v1936 = vsub.f32 %v1779, %v1898
    %v1937 = vsub.f32 %v1785, %v1899
    %v1938 = vsub.f32 %v1789, %v1900
    %v1939 = vsub.f32 %v1795, %v1901
    %v1940 = vsub.f32 %v1799, %v1902
    %v1941 = vsub.f32 %v1805, %v1903
    %v1942 = vsub.f32 %v1809, %v1904
    %v1943 = vsub.f32 %v1815, %v1905
    %v1944 = vsub.f32 %v1819, %v1906
    %v1945 = vsub.f32 %v1825, %v1907
    %v1946 = vsub.f32 %v1829, %v1908
    %v1947 = vsub.f32 %v1835, %v1909
    %v1948 = vsub.f32 %v1839, %v1910
    %v1949 = vsub.f32 %v1845, %v1911
    %v1950 = vsub.f32 %v1849, %v1912
    %v1951 = vsub.f32 %v1855, %v1913
    %v1952 = vsub.f32 %v1859, %v1914
    %v1953 = vsub.f32 %v1865, %v1915
    %v1954 = vsub.f32 %v1869, %v1916
    %v1955 = vsub.f32 %v1875, %v1917
    %v1956 = vsub.f32 %v1879, %v1918
    %v1957 = vmax.f32 %v1919, 0.0
    %v1958 = vmax.f32 %v1920, 0.0
    %v1959 = vmax.f32 %v1921, 0.0
    %v1960 = vmax.f32 %v1922, 0.0
    %v1961 = vmax.f32 %v1923, 0.0
    %v1962 = vmax.f32 %v1924, 0.0
    %v1963 = vmax.f32 %v1925, 0.0
    %v1964 = vmax.f32 %v1926, 0.0
    %v1965 = vmax.f32 %v1927, 0.0
    %v1966 = vmax.f32 %v1928, 0.0
    %v1967 = vmax.f32 %v1929, 0.0
    %v1968 = vmax.f32 %v1930, 0.0
    %v1969 = vmax.f32 %v1931, 0.0
    %v1970 = vmax.f32 %v1932, 0.0
    %v1971 = vmax.f32 %v1933, 0.0
    %v1972 = vmax.f32 %v1934, 0.0
    %v1973 = vmax.f32 %v1935, 0.0
    %v1974 = vmax.f32 %v1936, 0.0
    %v1975 = vmax.f32 %v1937, 0.0
    %v1976 = vmax.f32 %v1938, 0.0
    %v1977 = vmax.f32 %v1939, 0.0
    %v1978 = vmax.f32 %v1940, 0.0
    %v1979 = vmax.f32 %v1941, 0.0
    %v1980 = vmax.f32 %v1942, 0.0
    %v1981 = vmax.f32 %v1943, 0.0
    %v1982 = vmax.f32 %v1944, 0.0
    %v1983 = vmax.f32 %v1945, 0.0
    %v1984 = vmax.f32 %v1946, 0.0
    %v1985 = vmax.f32 %v1947, 0.0
    %v1986 = vmax.f32 %v1948, 0.0
    %v1987 = vmax.f32 %v1949, 0.0
    %v1988 = vmax.f32 %v1950, 0.0
    %v1989 = vmax.f32 %v1951, 0.0
    %v1990 = vmax.f32 %v1952, 0.0
    %v1991 = vmax.f32 %v1953, 0.0
    %v1992 = vmax.f32 %v1954, 0.0
    %v1993 = vmax.f32 %v1955, 0.0
    %v1994 = vmax.f32 %v1956, 0.0
    %v1995 = vadd.f32 %v1957, 1e-05
    %v1996 = vadd.f32 %v1958, 1e-05
    %v1997 = vadd.f32 %v1959, 1e-05
    %v1998 = vadd.f32 %v1960, 1e-05
    %v1999 = vadd.f32 %v1961, 1e-05
    %v2000 = vadd.f32 %v1962, 1e-05
    %v2001 = vadd.f32 %v1963, 1e-05
    %v2002 = vadd.f32 %v1964, 1e-05
    %v2003 = vadd.f32 %v1965, 1e-05
    %v2004 = vadd.f32 %v1966, 1e-05
    %v2005 = vadd.f32 %v1967, 1e-05
    %v2006 = vadd.f32 %v1968, 1e-05
    %v2007 = vadd.f32 %v1969, 1e-05
    %v2008 = vadd.f32 %v1970, 1e-05
    %v2009 = vadd.f32 %v1971, 1e-05
    %v2010 = vadd.f32 %v1972, 1e-05
    %v2011 = vadd.f32 %v1973, 1e-05
    %v2012 = vadd.f32 %v1974, 1e-05
    %v2013 = vadd.f32 %v1975, 1e-05
    %v2014 = vadd.f32 %v1976, 1e-05
    %v2015 = vadd.f32 %v1977, 1e-05
    %v2016 = vadd.f32 %v1978, 1e-05
    %v2017 = vadd.f32 %v1979, 1e-05
    %v2018 = vadd.f32 %v1980, 1e-05
    %v2019 = vadd.f32 %v1981, 1e-05
    %v2020 = vadd.f32 %v1982, 1e-05
    %v2021 = vadd.f32 %v1983, 1e-05
    %v2022 = vadd.f32 %v1984, 1e-05
    %v2023 = vadd.f32 %v1985, 1e-05
    %v2024 = vadd.f32 %v1986, 1e-05
    %v2025 = vadd.f32 %v1987, 1e-05
    %v2026 = vadd.f32 %v1988, 1e-05
    %v2027 = vadd.f32 %v1989, 1e-05
    %v2028 = vadd.f32 %v1990, 1e-05
    %v2029 = vadd.f32 %v1991, 1e-05
    %v2030 = vadd.f32 %v1992, 1e-05
    %v2031 = vadd.f32 %v1993, 1e-05
    %v2032 = vadd.f32 %v1994, 1e-05
    %v2033 = vrsqrt.pop %v1995
    %v2034 = vrsqrt.pop %v1996
    %v2035 = vrsqrt.pop %v1997
    %v2036 = vrsqrt.pop %v1998
    %v2037 = vrsqrt.pop %v1999
    %v2038 = vrsqrt.pop %v2000
    %v2039 = vrsqrt.pop %v2001
    %v2040 = vrsqrt.pop %v2002
    %v2041 = vrsqrt.pop %v2003
    %v2042 = vrsqrt.pop %v2004
    %v2043 = vrsqrt.pop %v2005
    %v2044 = vrsqrt.pop %v2006
    %v2045 = vrsqrt.pop %v2007
    %v2046 = vrsqrt.pop %v2008
    %v2047 = vrsqrt.pop %v2009
    %v2048 = vrsqrt.pop %v2010
    %v2049 = vrsqrt.pop %v2011
    %v2050 = vrsqrt.pop %v2012
    %v2051 = vrsqrt.pop %v2013
    %v2052 = vrsqrt.pop %v2014
    %v2053 = vrsqrt.pop %v2015
    %v2054 = vrsqrt.pop %v2016
    %v2055 = vrsqrt.pop %v2017
    %v2056 = vrsqrt.pop %v2018
    %v2057 = vrsqrt.pop %v2019
    %v2058 = vrsqrt.pop %v2020
    %v2059 = vrsqrt.pop %v2021
    %v2060 = vrsqrt.pop %v2022
    %v2061 = vrsqrt.pop %v2023
    %v2062 = vrsqrt.pop %v2024
    %v2063 = vrsqrt.pop %v2025
    %v2064 = vrsqrt.pop %v2026
    %v2065 = vrsqrt.pop %v2027
    %v2066 = vrsqrt.pop %v2028
    %v2067 = vrsqrt.pop %v2029
    %v2068 = vrsqrt.pop %v2030
    %v2069 = vrsqrt.pop %v2031
    %v2070 = vrsqrt.pop %v2032
    %v2071 = vsub.f32 %v1430, %v1693
    %v2072 = vsub.f32 %v1433, %v1697
    %v2073 = vsub.f32 %v1438, %v1703
    %v2074 = vsub.f32 %v1441, %v1707
    %v2075 = vsub.f32 %v1446, %v1713
    %v2076 = vsub.f32 %v1449, %v1717
    %v2077 = vsub.f32 %v1454, %v1723
    %v2078 = vsub.f32 %v1457, %v1727
    %v2079 = vsub.f32 %v1462, %v1733
    %v2080 = vsub.f32 %v1465, %v1737
    %v2081 = vsub.f32 %v1470, %v1743
    %v2082 = vsub.f32 %v1473, %v1747
    %v2083 = vsub.f32 %v1478, %v1753
    %v2084 = vsub.f32 %v1481, %v1757
    %v2085 = vsub.f32 %v1486, %v1763
    %v2086 = vsub.f32 %v1489, %v1767
    %v2087 = vsub.f32 %v1494, %v1773
    %v2088 = vsub.f32 %v1497, %v1777
    %v2089 = vsub.f32 %v1502, %v1783
    %v2090 = vsub.f32 %v1505, %v1787
    %v2091 = vsub.f32 %v1510, %v1793
    %v2092 = vsub.f32 %v1513, %v1797
    %v2093 = vsub.f32 %v1518, %v1803
    %v2094 = vsub.f32 %v1521, %v1807
    %v2095 = vsub.f32 %v1526, %v1813
    %v2096 = vsub.f32 %v1529, %v1817
    %v2097 = vsub.f32 %v1534, %v1823
    %v2098 = vsub.f32 %v1537, %v1827
    %v2099 = vsub.f32 %v1542, %v1833
    %v2100 = vsub.f32 %v1545, %v1837
    %v2101 = vsub.f32 %v1550, %v1843
    %v2102 = vsub.f32 %v1553, %v1847
    %v2103 = vsub.f32 %v1558, %v1853
    %v2104 = vsub.f32 %v1561, %v1857
    %v2105 = vsub.f32 %v1566, %v1863
    %v2106 = vsub.f32 %v1569, %v1867
    %v2107 = vsub.f32 %v1574, %v1873
    %v2108 = vsub.f32 %v1577, %v1877
    %v2109 = vlaneseq
    %v2110 = vshrl.u32 %v2109, 7
    %v2111 = vsub.s32 0, %v2110
    %v2112 = vrot.slane %v1580, %v2111
    %v2113 = vmul.f32 %v2033, %v2112
    %v2114 = vmul.f32 %v2034, %v2112
    %v2115 = vmul.f32 %v2035, %v2112
    %v2116 = vmul.f32 %v2036, %v2112
    %v2117 = vmul.f32 %v2037, %v2112
    %v2118 = vmul.f32 %v2038, %v2112
    %v2119 = vmul.f32 %v2039, %v2112
    %v2120 = vmul.f32 %v2040, %v2112
    %v2121 = vmul.f32 %v2041, %v2112
    %v2122 = vmul.f32 %v2042, %v2112
    %v2123 = vmul.f32 %v2043, %v2112
    %v2124 = vmul.f32 %v2044, %v2112
    %v2125 = vmul.f32 %v2045, %v2112
    %v2126 = vmul.f32 %v2046, %v2112
    %v2127 = vmul.f32 %v2047, %v2112
    %v2128 = vmul.f32 %v2048, %v2112
    %v2129 = vmul.f32 %v2049, %v2112
    %v2130 = vmul.f32 %v2050, %v2112
    %v2131 = vmul.f32 %v2051, %v2112
    %v2132 = vmul.f32 %v2052, %v2112
    %v2133 = vmul.f32 %v2053, %v2112
    %v2134 = vmul.f32 %v2054, %v2112
    %v2135 = vmul.f32 %v2055, %v2112
    %v2136 = vmul.f32 %v2056, %v2112
    %v2137 = vmul.f32 %v2057, %v2112
    %v2138 = vmul.f32 %v2058, %v2112
    %v2139 = vmul.f32 %v2059, %v2112
    %v2140 = vmul.f32 %v2060, %v2112
    %v2141 = vmul.f32 %v2061, %v2112
    %v2142 = vmul.f32 %v2062, %v2112
    %v2143 = vmul.f32 %v2063, %v2112
    %v2144 = vmul.f32 %v2064, %v2112
    %v2145 = vmul.f32 %v2065, %v2112
    %v2146 = vmul.f32 %v2066, %v2112
    %v2147 = vmul.f32 %v2067, %v2112
    %v2148 = vmul.f32 %v2068, %v2112
    %v2149 = vmul.f32 %v2069, %v2112
    %v2150 = vmul.f32 %v2070, %v2112
    %v2151 = vmul.f32 %v2071, %v2113
    %v2152 = vmul.f32 %v2072, %v2114
    %v2153 = vmul.f32 %v2073, %v2115
    %v2154 = vmul.f32 %v2074, %v2116
    %v2155 = vmul.f32 %v2075, %v2117
    %v2156 = vmul.f32 %v2076, %v2118
    %v2157 = vmul.f32 %v2077, %v2119
    %v2158 = vmul.f32 %v2078, %v2120
    %v2159 = vmul.f32 %v2079, %v2121
    %v2160 = vmul.f32 %v2080, %v2122
    %v2161 = vmul.f32 %v2081, %v2123
    %v2162 = vmul.f32 %v2082, %v2124
    %v2163 = vmul.f32 %v2083, %v2125
    %v2164 = vmul.f32 %v2084, %v2126
    %v2165 = vmul.f32 %v2085, %v2127
    %v2166 = vmul.f32 %v2086, %v2128
    %v2167 = vmul.f32 %v2087, %v2129
    %v2168 = vmul.f32 %v2088, %v2130
    %v2169 = vmul.f32 %v2089, %v2131
    %v2170 = vmul.f32 %v2090, %v2132
    %v2171 = vmul.f32 %v2091, %v2133
    %v2172 = vmul.f32 %v2092, %v2134
    %v2173 = vmul.f32 %v2093, %v2135
    %v2174 = vmul.f32 %v2094, %v2136
    %v2175 = vmul.f32 %v2095, %v2137
    %v2176 = vmul.f32 %v2096, %v2138
    %v2177 = vmul.f32 %v2097, %v2139
    %v2178 = vmul.f32 %v2098, %v2140
    %v2179 = vmul.f32 %v2099, %v2141
    %v2180 = vmul.f32 %v2100, %v2142
    %v2181 = vmul.f32 %v2101, %v2143
    %v2182 = vmul.f32 %v2102, %v2144
    %v2183 = vmul.f32 %v2103, %v2145
    %v2184 = vmul.f32 %v2104, %v2146
    %v2185 = vmul.f32 %v2105, %v2147
    %v2186 = vmul.f32 %v2106, %v2148
    %v2187 = vmul.f32 %v2107, %v2149
    %v2188 = vmul.f32 %v2108, %v2150
    %v2189 = vlaneseq
    %v2190 = vshrl.u32 %v2189, 7
    %v2191 = vsub.s32 0, %v2190
    %v2192 = vrot.slane %v1581, %v2191
    %v2193 = vadd.f32 %v2151, %v2192
    %v2194 = vadd.f32 %v2152, %v2192
    %v2195 = vadd.f32 %v2153, %v2192
    %v2196 = vadd.f32 %v2154, %v2192
    %v2197 = vadd.f32 %v2155, %v2192
    %v2198 = vadd.f32 %v2156, %v2192
    %v2199 = vadd.f32 %v2157, %v2192
    %v2200 = vadd.f32 %v2158, %v2192
    %v2201 = vadd.f32 %v2159, %v2192
    %v2202 = vadd.f32 %v2160, %v2192
    %v2203 = vadd.f32 %v2161, %v2192
    %v2204 = vadd.f32 %v2162, %v2192
    %v2205 = vadd.f32 %v2163, %v2192
    %v2206 = vadd.f32 %v2164, %v2192
    %v2207 = vadd.f32 %v2165, %v2192
    %v2208 = vadd.f32 %v2166, %v2192
    %v2209 = vadd.f32 %v2167, %v2192
    %v2210 = vadd.f32 %v2168, %v2192
    %v2211 = vadd.f32 %v2169, %v2192
    %v2212 = vadd.f32 %v2170, %v2192
    %v2213 = vadd.f32 %v2171, %v2192
    %v2214 = vadd.f32 %v2172, %v2192
    %v2215 = vadd.f32 %v2173, %v2192
    %v2216 = vadd.f32 %v2174, %v2192
    %v2217 = vadd.f32 %v2175, %v2192
    %v2218 = vadd.f32 %v2176, %v2192
    %v2219 = vadd.f32 %v2177, %v2192
    %v2220 = vadd.f32 %v2178, %v2192
    %v2221 = vadd.f32 %v2179, %v2192
    %v2222 = vadd.f32 %v2180, %v2192
    %v2223 = vadd.f32 %v2181, %v2192
    %v2224 = vadd.f32 %v2182, %v2192
    %v2225 = vadd.f32 %v2183, %v2192
    %v2226 = vadd.f32 %v2184, %v2192
    %v2227 = vadd.f32 %v2185, %v2192
    %v2228 = vadd.f32 %v2186, %v2192
    %v2229 = vadd.f32 %v2187, %v2192
    %v2230 = vadd.f32 %v2188, %v2192
    %v2231 = vmax.f32 %v2193, 0.0
    %v2232 = vmax.f32 %v2194, 0.0
    %v2233 = vmax.f32 %v2195, 0.0
    %v2234 = vmax.f32 %v2196, 0.0
    %v2235 = vmax.f32 %v2197, 0.0
    %v2236 = vmax.f32 %v2198, 0.0
    %v2237 = vmax.f32 %v2199, 0.0
    %v2238 = vmax.f32 %v2200, 0.0
    %v2239 = vmax.f32 %v2201, 0.0
    %v2240 = vmax.f32 %v2202, 0.0
    %v2241 = vmax.f32 %v2203, 0.0
    %v2242 = vmax.f32 %v2204, 0.0
    %v2243 = vmax.f32 %v2205, 0.0
    %v2244 = vmax.f32 %v2206, 0.0
    %v2245 = vmax.f32 %v2207, 0.0
    %v2246 = vmax.f32 %v2208, 0.0
    %v2247 = vmax.f32 %v2209, 0.0
    %v2248 = vmax.f32 %v2210, 0.0
    %v2249 = vmax.f32 %v2211, 0.0
    %v2250 = vmax.f32 %v2212, 0.0
    %v2251 = vmax.f32 %v2213, 0.0
    %v2252 = vmax.f32 %v2214, 0.0
    %v2253 = vmax.f32 %v2215, 0.0
    %v2254 = vmax.f32 %v2216, 0.0
    %v2255 = vmax.f32 %v2217, 0.0
    %v2256 = vmax.f32 %v2218, 0.0
    %v2257 = vmax.f32 %v2219, 0.0
    %v2258 = vmax.f32 %v2220, 0.0
    %v2259 = vmax.f32 %v2221, 0.0
    %v2260 = vmax.f32 %v2222, 0.0
    %v2261 = vmax.f32 %v2223, 0.0
    %v2262 = vmax.f32 %v2224, 0.0
    %v2263 = vmax.f32 %v2225, 0.0
    %v2264 = vmax.f32 %v2226, 0.0
    %v2265 = vmax.f32 %v2227, 0.0
    %v2266 = vmax.f32 %v2228, 0.0
    %v2267 = vmax.f32 %v2229, 0.0
    %v2268 = vmax.f32 %v2230, 0.0
    %v2269 = vpack.c.bf16 %v2232, %v2231
    %v2270 = vpack.c.bf16 %v2234, %v2233
    %v2271 = vpack.c.bf16 %v2236, %v2235
    %v2272 = vpack.c.bf16 %v2238, %v2237
    %v2273 = vpack.c.bf16 %v2240, %v2239
    %v2274 = vpack.c.bf16 %v2242, %v2241
    %v2275 = vpack.c.bf16 %v2244, %v2243
    %v2276 = vpack.c.bf16 %v2246, %v2245
    %v2277 = vpack.c.bf16 %v2248, %v2247
    %v2278 = vpack.c.bf16 %v2250, %v2249
    %v2279 = vpack.c.bf16 %v2252, %v2251
    %v2280 = vpack.c.bf16 %v2254, %v2253
    %v2281 = vpack.c.bf16 %v2256, %v2255
    %v2282 = vpack.c.bf16 %v2258, %v2257
    %v2283 = vpack.c.bf16 %v2260, %v2259
    %v2284 = vpack.c.bf16 %v2262, %v2261
    %v2285 = vpack.c.bf16 %v2264, %v2263
    %v2286 = vpack.c.bf16 %v2266, %v2265
    %v2287 = vpack.c.bf16 %v2268, %v2267
    %s2288 = scalar_lea.vmem [#allocation8], 64
    %v2289 = vld [vmem:[%s2288] sm:$0xf]
    %v2290 = vld [vmem:[%s2288 + $0x4] sm:$0xf]
    %v2291 = vld [vmem:[%s2288 + $0x8] sm:$0xf]
    %v2292 = vld [vmem:[%s2288 + $0xc] sm:$0xf]
    %v2293 = vld [vmem:[%s2288 + $0x10] sm:$0xf]
    %v2294 = vld [vmem:[%s2288 + $0x14] sm:$0xf]
    %v2295 = vld [vmem:[%s2288 + $0x18] sm:$0xf]
    %v2296 = vld [vmem:[%s2288 + $0x1c] sm:$0xf]
    %v2297 = vld [vmem:[%s2288 + $0x20] sm:$0xf]
    %v2298 = vld [vmem:[%s2288 + $0x24] sm:$0xf]
    %v2299 = vld [vmem:[%s2288 + $0x28] sm:$0xf]
    %v2300 = vld [vmem:[%s2288 + $0x2c] sm:$0xf]
    %v2301 = vld [vmem:[%s2288 + $0x30] sm:$0xf]
    %v2302 = vld [vmem:[%s2288 + $0x34] sm:$0xf]
    %v2303 = vld [vmem:[%s2288 + $0x38] sm:$0xf]
    %v2304 = vld [vmem:[%s2288 + $0x3c] sm:$0xf]
    %v2305 = vld [vmem:[#allocation7 + $0x3] sm:$0x1]
    %v2306 = vlaneseq
    %v2307 = vshrl.u32 %v2306, 7
    %v2308 = vsub.s32 0, %v2307
    %v2309 = vrot.slane %v2305, %v2308
    %v2326 = vunpack.c.l.b16 %v2289
    %v2327 = vunpack.c.l.b16 %v2290
    %v2328 = vunpack.c.l.b16 %v2291
    %v2329 = vunpack.c.l.b16 %v2292
    %v2330 = vunpack.c.l.b16 %v2293
    %v2331 = vunpack.c.l.b16 %v2294
    %v2332 = vunpack.c.l.b16 %v2295
    %v2333 = vunpack.c.l.b16 %v2296
    %v2334 = vunpack.c.l.b16 %v2297
    %v2335 = vunpack.c.l.b16 %v2298
    %v2336 = vunpack.c.l.b16 %v2299
    %v2337 = vunpack.c.l.b16 %v2300
    %v2338 = vunpack.c.l.b16 %v2301
    %v2339 = vunpack.c.l.b16 %v2302
    %v2340 = vunpack.c.l.b16 %v2303
    %v2341 = vunpack.c.l.b16 %v2304
    %v2342 = vpack.c.b16 %v2327, %v2326
    %v2343 = vpack.c.b16 %v2329, %v2328
    %v2344 = vpack.c.b16 %v2331, %v2330
    %v2345 = vpack.c.b16 %v2333, %v2332
    %v2346 = vpack.c.b16 %v2335, %v2334
    %v2347 = vpack.c.b16 %v2337, %v2336
    %v2348 = vpack.c.b16 %v2339, %v2338
    %v2349 = vpack.c.b16 %v2341, %v2340
    %2358 = vmatprep.subr.bf16.mxu0 0
    %2359 = vmatpush1.bf16.msra.mxu0 %v2342
    %2360 = vmatprep.subr.bf16.mxu0 0
    %2361 = vmatpush1.bf16.msra.mxu0 %v2343
    %2362 = vmatprep.subr.bf16.mxu0 0
    %2363 = vmatpush1.bf16.msra.mxu0 %v2344
    %2364 = vmatprep.subr.bf16.mxu0 0
    %2365 = vmatpush1.bf16.msra.mxu0 %v2345
    %2366 = vmatprep.subr.bf16.mxu0 0
    %2367 = vmatpush1.bf16.msra.mxu0 %v2346
    %2368 = vmatprep.subr.bf16.mxu0 0
    %2369 = vmatpush1.bf16.msra.mxu0 %v2347
    %2370 = vmatprep.subr.bf16.mxu0 0
    %2371 = vmatpush1.bf16.msra.mxu0 %v2348
    %2372 = vmatprep.subr.bf16.mxu0 0
    %2373 = vmatpush1.bf16.msra.mxu0 %v2349
    %2374 = vmatprep.subr.bf16.mxu0 0
    %2375 = vmatpush1.bf16.msra.mxu0 0
    %2376 = vmatprep.subr.bf16.mxu0 0
    %2377 = vmatpush1.bf16.msra.mxu0 0
    %2378 = vmatprep.subr.bf16.mxu0 0
    %2379 = vmatpush1.bf16.msra.mxu0 0
    %2380 = vmatprep.subr.bf16.mxu0 0
    %2381 = vmatpush1.bf16.msra.mxu0 0
    %2382 = vmatprep.subr.bf16.mxu0 0
    %2383 = vmatpush1.bf16.msra.mxu0 0
    %2384 = vmatprep.subr.bf16.mxu0 0
    %2385 = vmatpush1.bf16.msra.mxu0 0
    %2386 = vmatprep.subr.bf16.mxu0 0
    %2387 = vmatpush1.bf16.msra.mxu0 0
    %2388 = vmatprep.subr.bf16.mxu0 0
    %2389 = vmatpush1.bf16.msra.mxu0 0
    %2390 = vmatprep.mubr.bf16.mxu0 0
    %2391 = vmatmul.mubr.bf16.gmra.mrb[0].mxu0 %v2269
    %v2392 = vpop.f32.mrb[0].mxu0
    %v2393 = vadd.f32 %v2309, %v2392
    %v2394 = vpop.f32.mrb[0].mxu0
    %v2395 = vpop.f32.mrb[0].mxu0
    %v2396 = vadd.f32 %v2309, %v2395
    %v2397 = vpop.f32.mrb[0].mxu0
    %2398 = vmatprep.mubr.bf16.mxu0 0
    %2399 = vmatmul.mubr.bf16.gmra.mrb[0].mxu0 %v2270
    %v2400 = vpop.f32.mrb[0].mxu0
    %v2401 = vadd.f32 %v2309, %v2400
    %v2402 = vpop.f32.mrb[0].mxu0
    %v2403 = vpop.f32.mrb[0].mxu0
    %v2404 = vadd.f32 %v2309, %v2403
    %v2405 = vpop.f32.mrb[0].mxu0
    %2406 = vmatprep.mubr.bf16.mxu0 0
    %2407 = vmatmul.mubr.bf16.gmra.mrb[0].mxu0 %v2271
    %v2408 = vpop.f32.mrb[0].mxu0
    %v2409 = vadd.f32 %v2309, %v2408
    %v2410 = vpop.f32.mrb[0].mxu0
    %v2411 = vpop.f32.mrb[0].mxu0
    %v2412 = vadd.f32 %v2309, %v2411
    %v2413 = vpop.f32.mrb[0].mxu0
    %2414 = vmatprep.mubr.bf16.mxu0 0
    %2415 = vmatmul.mubr.bf16.gmra.mrb[0].mxu0 %v2272
    %v2416 = vpop.f32.mrb[0].mxu0
    %v2417 = vadd.f32 %v2309, %v2416
    %v2418 = vpop.f32.mrb[0].mxu0
    %v2419 = vpop.f32.mrb[0].mxu0
    %v2420 = vadd.f32 %v2309, %v2419
    %v2421 = vpop.f32.mrb[0].mxu0
    %2422 = vmatprep.mubr.bf16.mxu0 0
    %2423 = vmatmul.mubr.bf16.gmra.mrb[0].mxu0 %v2273
    %v2424 = vpop.f32.mrb[0].mxu0
    %v2425 = vadd.f32 %v2309, %v2424
    %v2426 = vpop.f32.mrb[0].mxu0
    %v2427 = vpop.f32.mrb[0].mxu0
    %v2428 = vadd.f32 %v2309, %v2427
    %v2429 = vpop.f32.mrb[0].mxu0
    %2430 = vmatprep.mubr.bf16.mxu0 0
    %2431 = vmatmul.mubr.bf16.gmra.mrb[0].mxu0 %v2274
    %v2432 = vpop.f32.mrb[0].mxu0
    %v2433 = vadd.f32 %v2309, %v2432
    %v2434 = vpop.f32.mrb[0].mxu0
    %v2435 = vpop.f32.mrb[0].mxu0
    %v2436 = vadd.f32 %v2309, %v2435
    %v2437 = vpop.f32.mrb[0].mxu0
    %2438 = vmatprep.mubr.bf16.mxu0 0
    %2439 = vmatmul.mubr.bf16.gmra.mrb[0].mxu0 %v2275
    %v2440 = vpop.f32.mrb[0].mxu0
    %v2441 = vadd.f32 %v2309, %v2440
    %v2442 = vpop.f32.mrb[0].mxu0
    %v2443 = vpop.f32.mrb[0].mxu0
    %v2444 = vadd.f32 %v2309, %v2443
    %v2445 = vpop.f32.mrb[0].mxu0
    %2446 = vmatprep.mubr.bf16.mxu0 0
    %2447 = vmatmul.mubr.bf16.gmra.mrb[0].mxu0 %v2276
    %v2448 = vpop.f32.mrb[0].mxu0
    %v2449 = vadd.f32 %v2309, %v2448
    %v2450 = vpop.f32.mrb[0].mxu0
    %v2451 = vpop.f32.mrb[0].mxu0
    %v2452 = vadd.f32 %v2309, %v2451
    %v2453 = vpop.f32.mrb[0].mxu0
    %2454 = vmatprep.mubr.bf16.mxu0 0
    %2455 = vmatmul.mubr.bf16.gmra.mrb[0].mxu0 %v2277
    %v2456 = vpop.f32.mrb[0].mxu0
    %v2457 = vadd.f32 %v2309, %v2456
    %v2458 = vpop.f32.mrb[0].mxu0
    %v2459 = vpop.f32.mrb[0].mxu0
    %v2460 = vadd.f32 %v2309, %v2459
    %v2461 = vpop.f32.mrb[0].mxu0
    %2462 = vmatprep.mubr.bf16.mxu0 0
    %2463 = vmatmul.mubr.bf16.gmra.mrb[0].mxu0 %v2278
    %v2464 = vpop.f32.mrb[0].mxu0
    %v2465 = vadd.f32 %v2309, %v2464
    %v2466 = vpop.f32.mrb[0].mxu0
    %v2467 = vpop.f32.mrb[0].mxu0
    %v2468 = vadd.f32 %v2309, %v2467
    %v2469 = vpop.f32.mrb[0].mxu0
    %2470 = vmatprep.mubr.bf16.mxu0 0
    %2471 = vmatmul.mubr.bf16.gmra.mrb[0].mxu0 %v2279
    %v2472 = vpop.f32.mrb[0].mxu0
    %v2473 = vadd.f32 %v2309, %v2472
    %v2474 = vpop.f32.mrb[0].mxu0
    %v2475 = vpop.f32.mrb[0].mxu0
    %v2476 = vadd.f32 %v2309, %v2475
    %v2477 = vpop.f32.mrb[0].mxu0
    %2478 = vmatprep.mubr.bf16.mxu0 0
    %2479 = vmatmul.mubr.bf16.gmra.mrb[0].mxu0 %v2280
    %v2480 = vpop.f32.mrb[0].mxu0
    %v2481 = vadd.f32 %v2309, %v2480
    %v2482 = vpop.f32.mrb[0].mxu0
    %v2483 = vpop.f32.mrb[0].mxu0
    %v2484 = vadd.f32 %v2309, %v2483
    %v2485 = vpop.f32.mrb[0].mxu0
    %2486 = vmatprep.mubr.bf16.mxu0 0
    %2487 = vmatmul.mubr.bf16.gmra.mrb[0].mxu0 %v2281
    %v2488 = vpop.f32.mrb[0].mxu0
    %v2489 = vadd.f32 %v2309, %v2488
    %v2490 = vpop.f32.mrb[0].mxu0
    %v2491 = vpop.f32.mrb[0].mxu0
    %v2492 = vadd.f32 %v2309, %v2491
    %v2493 = vpop.f32.mrb[0].mxu0
    %2494 = vmatprep.mubr.bf16.mxu0 0
    %2495 = vmatmul.mubr.bf16.gmra.mrb[0].mxu0 %v2282
    %v2496 = vpop.f32.mrb[0].mxu0
    %v2497 = vadd.f32 %v2309, %v2496
    %v2498 = vpop.f32.mrb[0].mxu0
    %v2499 = vpop.f32.mrb[0].mxu0
    %v2500 = vadd.f32 %v2309, %v2499
    %v2501 = vpop.f32.mrb[0].mxu0
    %2502 = vmatprep.mubr.bf16.mxu0 0
    %2503 = vmatmul.mubr.bf16.gmra.mrb[0].mxu0 %v2283
    %v2504 = vpop.f32.mrb[0].mxu0
    %v2505 = vadd.f32 %v2309, %v2504
    %v2506 = vpop.f32.mrb[0].mxu0
    %v2507 = vpop.f32.mrb[0].mxu0
    %v2508 = vadd.f32 %v2309, %v2507
    %v2509 = vpop.f32.mrb[0].mxu0
    %2510 = vmatprep.mubr.bf16.mxu0 0
    %2511 = vmatmul.mubr.bf16.gmra.mrb[0].mxu0 %v2284
    %v2512 = vpop.f32.mrb[0].mxu0
    %v2513 = vadd.f32 %v2309, %v2512
    %v2514 = vpop.f32.mrb[0].mxu0
    %v2515 = vpop.f32.mrb[0].mxu0
    %v2516 = vadd.f32 %v2309, %v2515
    %v2517 = vpop.f32.mrb[0].mxu0
    %2518 = vmatprep.mubr.bf16.mxu0 0
    %2519 = vmatmul.mubr.bf16.gmra.mrb[0].mxu0 %v2285
    %v2520 = vpop.f32.mrb[0].mxu0
    %v2521 = vadd.f32 %v2309, %v2520
    %v2522 = vpop.f32.mrb[0].mxu0
    %v2523 = vpop.f32.mrb[0].mxu0
    %v2524 = vadd.f32 %v2309, %v2523
    %v2525 = vpop.f32.mrb[0].mxu0
    %2526 = vmatprep.mubr.bf16.mxu0 0
    %2527 = vmatmul.mubr.bf16.gmra.mrb[0].mxu0 %v2286
    %v2528 = vpop.f32.mrb[0].mxu0
    %v2529 = vadd.f32 %v2309, %v2528
    %v2530 = vpop.f32.mrb[0].mxu0
    %v2531 = vpop.f32.mrb[0].mxu0
    %v2532 = vadd.f32 %v2309, %v2531
    %v2533 = vpop.f32.mrb[0].mxu0
    %2534 = vmatprep.mubr.bf16.mxu0 0
    %2535 = vmatmul.mubr.bf16.gmra.mrb[0].mxu0 %v2287
    %v2536 = vpop.f32.mrb[0].mxu0
    %v2537 = vadd.f32 %v2309, %v2536
    %v2538 = vpop.f32.mrb[0].mxu0
    %v2539 = vpop.f32.mrb[0].mxu0
    %v2540 = vadd.f32 %v2309, %v2539
    %v2541 = vpop.f32.mrb[0].mxu0
    %2542 = vdwg.mxu0
    %v2543 = vld [vmem:[#allocation7 + $0x8] sm:$0x1]
    %v2544 = vld [vmem:[#allocation7 + $0xc] sm:$0x1]
    %v2545 = vpack.c.bf16 %v2396, %v2393
    %v2546 = vpack.c.bf16 %v2404, %v2401
    %v2547 = vpack.c.bf16 %v2412, %v2409
    %v2548 = vpack.c.bf16 %v2420, %v2417
    %v2549 = vpack.c.bf16 %v2428, %v2425
    %v2550 = vpack.c.bf16 %v2436, %v2433
    %v2551 = vpack.c.bf16 %v2444, %v2441
    %v2552 = vpack.c.bf16 %v2452, %v2449
    %v2553 = vpack.c.bf16 %v2460, %v2457
    %v2554 = vpack.c.bf16 %v2468, %v2465
    %v2555 = vpack.c.bf16 %v2476, %v2473
    %v2556 = vpack.c.bf16 %v2484, %v2481
    %v2557 = vpack.c.bf16 %v2492, %v2489
    %v2558 = vpack.c.bf16 %v2500, %v2497
    %v2559 = vpack.c.bf16 %v2508, %v2505
    %v2560 = vpack.c.bf16 %v2516, %v2513
    %v2561 = vpack.c.bf16 %v2524, %v2521
    %v2562 = vpack.c.bf16 %v2532, %v2529
    %v2563 = vpack.c.bf16 %v2540, %v2537
    %v2564 = vmul.f32 %v2393, %v2393
    %v2565 = vmul.f32 %v2396, %v2396
    %v2566 = vmul.f32 %v2401, %v2401
    %v2567 = vmul.f32 %v2404, %v2404
    %v2568 = vmul.f32 %v2409, %v2409
    %v2569 = vmul.f32 %v2412, %v2412
    %v2570 = vmul.f32 %v2417, %v2417
    %v2571 = vmul.f32 %v2420, %v2420
    %v2572 = vmul.f32 %v2425, %v2425
    %v2573 = vmul.f32 %v2428, %v2428
    %v2574 = vmul.f32 %v2433, %v2433
    %v2575 = vmul.f32 %v2436, %v2436
    %v2576 = vmul.f32 %v2441, %v2441
    %v2577 = vmul.f32 %v2444, %v2444
    %v2578 = vmul.f32 %v2449, %v2449
    %v2579 = vmul.f32 %v2452, %v2452
    %v2580 = vmul.f32 %v2457, %v2457
    %v2581 = vmul.f32 %v2460, %v2460
    %v2582 = vmul.f32 %v2465, %v2465
    %v2583 = vmul.f32 %v2468, %v2468
    %v2584 = vmul.f32 %v2473, %v2473
    %v2585 = vmul.f32 %v2476, %v2476
    %v2586 = vmul.f32 %v2481, %v2481
    %v2587 = vmul.f32 %v2484, %v2484
    %v2588 = vmul.f32 %v2489, %v2489
    %v2589 = vmul.f32 %v2492, %v2492
    %v2590 = vmul.f32 %v2497, %v2497
    %v2591 = vmul.f32 %v2500, %v2500
    %v2592 = vmul.f32 %v2505, %v2505
    %v2593 = vmul.f32 %v2508, %v2508
    %v2594 = vmul.f32 %v2513, %v2513
    %v2595 = vmul.f32 %v2516, %v2516
    %v2596 = vmul.f32 %v2521, %v2521
    %v2597 = vmul.f32 %v2524, %v2524
    %v2598 = vmul.f32 %v2529, %v2529
    %v2599 = vmul.f32 %v2532, %v2532
    %v2600 = vmul.f32 %v2537, %v2537
    %v2601 = vmul.f32 %v2540, %v2540
    %v2602 = vpack.c.bf16 %v2565, %v2564
    %v2603 = vpack.c.bf16 %v2567, %v2566
    %v2604 = vpack.c.bf16 %v2569, %v2568
    %v2605 = vpack.c.bf16 %v2571, %v2570
    %v2606 = vpack.c.bf16 %v2573, %v2572
    %v2607 = vpack.c.bf16 %v2575, %v2574
    %v2608 = vpack.c.bf16 %v2577, %v2576
    %v2609 = vpack.c.bf16 %v2579, %v2578
    %v2610 = vpack.c.bf16 %v2581, %v2580
    %v2611 = vpack.c.bf16 %v2583, %v2582
    %v2612 = vpack.c.bf16 %v2585, %v2584
    %v2613 = vpack.c.bf16 %v2587, %v2586
    %v2614 = vpack.c.bf16 %v2589, %v2588
    %v2615 = vpack.c.bf16 %v2591, %v2590
    %v2616 = vpack.c.bf16 %v2593, %v2592
    %v2617 = vpack.c.bf16 %v2595, %v2594
    %v2618 = vpack.c.bf16 %v2597, %v2596
    %v2619 = vpack.c.bf16 %v2599, %v2598
    %v2620 = vpack.c.bf16 %v2601, %v2600
    %2621 = vmatprep.subr.bf16.mxu0 %v633
    %2622 = vmatpush1.bf16.msra.mxu0 %v632
    %2623 = vmatprep.subr.bf16.mxu0 %v635
    %2624 = vmatpush1.bf16.msra.mxu0 %v634
    %2625 = vmatprep.subr.bf16.mxu0 %v637
    %2626 = vmatpush1.bf16.msra.mxu0 %v636
    %2627 = vmatprep.subr.bf16.mxu0 %v639
    %2628 = vmatpush1.bf16.msra.mxu0 %v638
    %2629 = vmatprep.subr.bf16.mxu0 %v641
    %2630 = vmatpush1.bf16.msra.mxu0 %v640
    %2631 = vmatprep.subr.bf16.mxu0 %v643
    %2632 = vmatpush1.bf16.msra.mxu0 %v642
    %2633 = vmatprep.subr.bf16.mxu0 %v645
    %2634 = vmatpush1.bf16.msra.mxu0 %v644
    %2635 = vmatprep.subr.bf16.mxu0 %v647
    %2636 = vmatpush1.bf16.msra.mxu0 %v646
    %2637 = vmatprep.subr.bf16.mxu0 %v649
    %2638 = vmatpush1.bf16.msra.mxu0 %v648
    %2639 = vmatprep.subr.bf16.mxu0 %v651
    %2640 = vmatpush1.bf16.msra.mxu0 %v650
    %2641 = vmatprep.subr.bf16.mxu0 %v653
    %2642 = vmatpush1.bf16.msra.mxu0 %v652
    %2643 = vmatprep.subr.bf16.mxu0 %v655
    %2644 = vmatpush1.bf16.msra.mxu0 %v654
    %2645 = vmatprep.subr.bf16.mxu0 %v657
    %2646 = vmatpush1.bf16.msra.mxu0 %v656
    %2647 = vmatprep.subr.bf16.mxu0 %v659
    %2648 = vmatpush1.bf16.msra.mxu0 %v658
    %2649 = vmatprep.subr.bf16.mxu0 %v661
    %2650 = vmatpush1.bf16.msra.mxu0 %v660
    %2651 = vmatprep.subr.bf16.mxu0 %v663
    %2652 = vmatpush1.bf16.msra.mxu0 %v662
    %2653 = vmatprep.mubr.bf16.mxu0 %v2602
    %2654 = vmatmul.mubr.bf16.gmra.mrb[0].mxu0 %v2545
    %v2655 = vpop.f32.mrb[0].mxu0
    %v2656 = vadd.f32 0.0, %v2655
    %v2657 = vpop.f32.mrb[0].mxu0
    %v2658 = vadd.f32 0.0, %v2657
    %v2659 = vpop.f32.mrb[0].mxu0
    %v2660 = vadd.f32 0.0, %v2659
    %v2661 = vpop.f32.mrb[0].mxu0
    %v2662 = vadd.f32 0.0, %v2661
    %2663 = vmatprep.mubr.bf16.mxu0 %v2603
    %2664 = vmatmul.mubr.bf16.gmra.mrb[0].mxu0 %v2546
    %v2665 = vpop.f32.mrb[0].mxu0
    %v2666 = vadd.f32 0.0, %v2665
    %v2667 = vpop.f32.mrb[0].mxu0
    %v2668 = vadd.f32 0.0, %v2667
    %v2669 = vpop.f32.mrb[0].mxu0
    %v2670 = vadd.f32 0.0, %v2669
    %v2671 = vpop.f32.mrb[0].mxu0
    %v2672 = vadd.f32 0.0, %v2671
    %2673 = vmatprep.mubr.bf16.mxu0 %v2604
    %2674 = vmatmul.mubr.bf16.gmra.mrb[0].mxu0 %v2547
    %v2675 = vpop.f32.mrb[0].mxu0
    %v2676 = vadd.f32 0.0, %v2675
    %v2677 = vpop.f32.mrb[0].mxu0
    %v2678 = vadd.f32 0.0, %v2677
    %v2679 = vpop.f32.mrb[0].mxu0
    %v2680 = vadd.f32 0.0, %v2679
    %v2681 = vpop.f32.mrb[0].mxu0
    %v2682 = vadd.f32 0.0, %v2681
    %2683 = vmatprep.mubr.bf16.mxu0 %v2605
    %2684 = vmatmul.mubr.bf16.gmra.mrb[0].mxu0 %v2548
    %v2685 = vpop.f32.mrb[0].mxu0
    %v2686 = vadd.f32 0.0, %v2685
    %v2687 = vpop.f32.mrb[0].mxu0
    %v2688 = vadd.f32 0.0, %v2687
    %v2689 = vpop.f32.mrb[0].mxu0
    %v2690 = vadd.f32 0.0, %v2689
    %v2691 = vpop.f32.mrb[0].mxu0
    %v2692 = vadd.f32 0.0, %v2691
    %2693 = vmatprep.mubr.bf16.mxu0 %v2606
    %2694 = vmatmul.mubr.bf16.gmra.mrb[0].mxu0 %v2549
    %v2695 = vpop.f32.mrb[0].mxu0
    %v2696 = vadd.f32 0.0, %v2695
    %v2697 = vpop.f32.mrb[0].mxu0
    %v2698 = vadd.f32 0.0, %v2697
    %v2699 = vpop.f32.mrb[0].mxu0
    %v2700 = vadd.f32 0.0, %v2699
    %v2701 = vpop.f32.mrb[0].mxu0
    %v2702 = vadd.f32 0.0, %v2701
    %2703 = vmatprep.mubr.bf16.mxu0 %v2607
    %2704 = vmatmul.mubr.bf16.gmra.mrb[0].mxu0 %v2550
    %v2705 = vpop.f32.mrb[0].mxu0
    %v2706 = vadd.f32 0.0, %v2705
    %v2707 = vpop.f32.mrb[0].mxu0
    %v2708 = vadd.f32 0.0, %v2707
    %v2709 = vpop.f32.mrb[0].mxu0
    %v2710 = vadd.f32 0.0, %v2709
    %v2711 = vpop.f32.mrb[0].mxu0
    %v2712 = vadd.f32 0.0, %v2711
    %2713 = vmatprep.mubr.bf16.mxu0 %v2608
    %2714 = vmatmul.mubr.bf16.gmra.mrb[0].mxu0 %v2551
    %v2715 = vpop.f32.mrb[0].mxu0
    %v2716 = vadd.f32 0.0, %v2715
    %v2717 = vpop.f32.mrb[0].mxu0
    %v2718 = vadd.f32 0.0, %v2717
    %v2719 = vpop.f32.mrb[0].mxu0
    %v2720 = vadd.f32 0.0, %v2719
    %v2721 = vpop.f32.mrb[0].mxu0
    %v2722 = vadd.f32 0.0, %v2721
    %2723 = vmatprep.mubr.bf16.mxu0 %v2609
    %2724 = vmatmul.mubr.bf16.gmra.mrb[0].mxu0 %v2552
    %v2725 = vpop.f32.mrb[0].mxu0
    %v2726 = vadd.f32 0.0, %v2725
    %v2727 = vpop.f32.mrb[0].mxu0
    %v2728 = vadd.f32 0.0, %v2727
    %v2729 = vpop.f32.mrb[0].mxu0
    %v2730 = vadd.f32 0.0, %v2729
    %v2731 = vpop.f32.mrb[0].mxu0
    %v2732 = vadd.f32 0.0, %v2731
    %2733 = vmatprep.mubr.bf16.mxu0 %v2610
    %2734 = vmatmul.mubr.bf16.gmra.mrb[0].mxu0 %v2553
    %v2735 = vpop.f32.mrb[0].mxu0
    %v2736 = vadd.f32 0.0, %v2735
    %v2737 = vpop.f32.mrb[0].mxu0
    %v2738 = vadd.f32 0.0, %v2737
    %v2739 = vpop.f32.mrb[0].mxu0
    %v2740 = vadd.f32 0.0, %v2739
    %v2741 = vpop.f32.mrb[0].mxu0
    %v2742 = vadd.f32 0.0, %v2741
    %2743 = vmatprep.mubr.bf16.mxu0 %v2611
    %2744 = vmatmul.mubr.bf16.gmra.mrb[0].mxu0 %v2554
    %v2745 = vpop.f32.mrb[0].mxu0
    %v2746 = vadd.f32 0.0, %v2745
    %v2747 = vpop.f32.mrb[0].mxu0
    %v2748 = vadd.f32 0.0, %v2747
    %v2749 = vpop.f32.mrb[0].mxu0
    %v2750 = vadd.f32 0.0, %v2749
    %v2751 = vpop.f32.mrb[0].mxu0
    %v2752 = vadd.f32 0.0, %v2751
    %2753 = vmatprep.mubr.bf16.mxu0 %v2612
    %2754 = vmatmul.mubr.bf16.gmra.mrb[0].mxu0 %v2555
    %v2755 = vpop.f32.mrb[0].mxu0
    %v2756 = vadd.f32 0.0, %v2755
    %v2757 = vpop.f32.mrb[0].mxu0
    %v2758 = vadd.f32 0.0, %v2757
    %v2759 = vpop.f32.mrb[0].mxu0
    %v2760 = vadd.f32 0.0, %v2759
    %v2761 = vpop.f32.mrb[0].mxu0
    %v2762 = vadd.f32 0.0, %v2761
    %2763 = vmatprep.mubr.bf16.mxu0 %v2613
    %2764 = vmatmul.mubr.bf16.gmra.mrb[0].mxu0 %v2556
    %v2765 = vpop.f32.mrb[0].mxu0
    %v2766 = vadd.f32 0.0, %v2765
    %v2767 = vpop.f32.mrb[0].mxu0
    %v2768 = vadd.f32 0.0, %v2767
    %v2769 = vpop.f32.mrb[0].mxu0
    %v2770 = vadd.f32 0.0, %v2769
    %v2771 = vpop.f32.mrb[0].mxu0
    %v2772 = vadd.f32 0.0, %v2771
    %2773 = vmatprep.mubr.bf16.mxu0 %v2614
    %2774 = vmatmul.mubr.bf16.gmra.mrb[0].mxu0 %v2557
    %v2775 = vpop.f32.mrb[0].mxu0
    %v2776 = vadd.f32 0.0, %v2775
    %v2777 = vpop.f32.mrb[0].mxu0
    %v2778 = vadd.f32 0.0, %v2777
    %v2779 = vpop.f32.mrb[0].mxu0
    %v2780 = vadd.f32 0.0, %v2779
    %v2781 = vpop.f32.mrb[0].mxu0
    %v2782 = vadd.f32 0.0, %v2781
    %2783 = vmatprep.mubr.bf16.mxu0 %v2615
    %2784 = vmatmul.mubr.bf16.gmra.mrb[0].mxu0 %v2558
    %v2785 = vpop.f32.mrb[0].mxu0
    %v2786 = vadd.f32 0.0, %v2785
    %v2787 = vpop.f32.mrb[0].mxu0
    %v2788 = vadd.f32 0.0, %v2787
    %v2789 = vpop.f32.mrb[0].mxu0
    %v2790 = vadd.f32 0.0, %v2789
    %v2791 = vpop.f32.mrb[0].mxu0
    %v2792 = vadd.f32 0.0, %v2791
    %2793 = vmatprep.mubr.bf16.mxu0 %v2616
    %2794 = vmatmul.mubr.bf16.gmra.mrb[0].mxu0 %v2559
    %v2795 = vpop.f32.mrb[0].mxu0
    %v2796 = vadd.f32 0.0, %v2795
    %v2797 = vpop.f32.mrb[0].mxu0
    %v2798 = vadd.f32 0.0, %v2797
    %v2799 = vpop.f32.mrb[0].mxu0
    %v2800 = vadd.f32 0.0, %v2799
    %v2801 = vpop.f32.mrb[0].mxu0
    %v2802 = vadd.f32 0.0, %v2801
    %2803 = vmatprep.mubr.bf16.mxu0 %v2617
    %2804 = vmatmul.mubr.bf16.gmra.mrb[0].mxu0 %v2560
    %v2805 = vpop.f32.mrb[0].mxu0
    %v2806 = vadd.f32 0.0, %v2805
    %v2807 = vpop.f32.mrb[0].mxu0
    %v2808 = vadd.f32 0.0, %v2807
    %v2809 = vpop.f32.mrb[0].mxu0
    %v2810 = vadd.f32 0.0, %v2809
    %v2811 = vpop.f32.mrb[0].mxu0
    %v2812 = vadd.f32 0.0, %v2811
    %2813 = vmatprep.mubr.bf16.mxu0 %v2618
    %2814 = vmatmul.mubr.bf16.gmra.mrb[0].mxu0 %v2561
    %v2815 = vpop.f32.mrb[0].mxu0
    %v2816 = vadd.f32 0.0, %v2815
    %v2817 = vpop.f32.mrb[0].mxu0
    %v2818 = vadd.f32 0.0, %v2817
    %v2819 = vpop.f32.mrb[0].mxu0
    %v2820 = vadd.f32 0.0, %v2819
    %v2821 = vpop.f32.mrb[0].mxu0
    %v2822 = vadd.f32 0.0, %v2821
    %2823 = vmatprep.mubr.bf16.mxu0 %v2619
    %2824 = vmatmul.mubr.bf16.gmra.mrb[0].mxu0 %v2562
    %v2825 = vpop.f32.mrb[0].mxu0
    %v2826 = vadd.f32 0.0, %v2825
    %v2827 = vpop.f32.mrb[0].mxu0
    %v2828 = vadd.f32 0.0, %v2827
    %v2829 = vpop.f32.mrb[0].mxu0
    %v2830 = vadd.f32 0.0, %v2829
    %v2831 = vpop.f32.mrb[0].mxu0
    %v2832 = vadd.f32 0.0, %v2831
    %2833 = vmatprep.mubr.bf16.mxu0 %v2620
    %2834 = vmatmul.mubr.bf16.gmra.mrb[0].mxu0 %v2563
    %v2835 = vpop.f32.mrb[0].mxu0
    %v2836 = vadd.f32 0.0, %v2835
    %v2837 = vpop.f32.mrb[0].mxu0
    %v2838 = vadd.f32 0.0, %v2837
    %v2839 = vpop.f32.mrb[0].mxu0
    %v2840 = vadd.f32 0.0, %v2839
    %v2841 = vpop.f32.mrb[0].mxu0
    %v2842 = vadd.f32 0.0, %v2841
    %2843 = vdwg.mxu0
    %v2844 = vmul.f32 %v2656, %v2656
    %v2845 = vmul.f32 %v2660, %v2660
    %v2846 = vmul.f32 %v2666, %v2666
    %v2847 = vmul.f32 %v2670, %v2670
    %v2848 = vmul.f32 %v2676, %v2676
    %v2849 = vmul.f32 %v2680, %v2680
    %v2850 = vmul.f32 %v2686, %v2686
    %v2851 = vmul.f32 %v2690, %v2690
    %v2852 = vmul.f32 %v2696, %v2696
    %v2853 = vmul.f32 %v2700, %v2700
    %v2854 = vmul.f32 %v2706, %v2706
    %v2855 = vmul.f32 %v2710, %v2710
    %v2856 = vmul.f32 %v2716, %v2716
    %v2857 = vmul.f32 %v2720, %v2720
    %v2858 = vmul.f32 %v2726, %v2726
    %v2859 = vmul.f32 %v2730, %v2730
    %v2860 = vmul.f32 %v2736, %v2736
    %v2861 = vmul.f32 %v2740, %v2740
    %v2862 = vmul.f32 %v2746, %v2746
    %v2863 = vmul.f32 %v2750, %v2750
    %v2864 = vmul.f32 %v2756, %v2756
    %v2865 = vmul.f32 %v2760, %v2760
    %v2866 = vmul.f32 %v2766, %v2766
    %v2867 = vmul.f32 %v2770, %v2770
    %v2868 = vmul.f32 %v2776, %v2776
    %v2869 = vmul.f32 %v2780, %v2780
    %v2870 = vmul.f32 %v2786, %v2786
    %v2871 = vmul.f32 %v2790, %v2790
    %v2872 = vmul.f32 %v2796, %v2796
    %v2873 = vmul.f32 %v2800, %v2800
    %v2874 = vmul.f32 %v2806, %v2806
    %v2875 = vmul.f32 %v2810, %v2810
    %v2876 = vmul.f32 %v2816, %v2816
    %v2877 = vmul.f32 %v2820, %v2820
    %v2878 = vmul.f32 %v2826, %v2826
    %v2879 = vmul.f32 %v2830, %v2830
    %v2880 = vmul.f32 %v2836, %v2836
    %v2881 = vmul.f32 %v2840, %v2840
    %v2882 = vsub.f32 %v2658, %v2844
    %v2883 = vsub.f32 %v2662, %v2845
    %v2884 = vsub.f32 %v2668, %v2846
    %v2885 = vsub.f32 %v2672, %v2847
    %v2886 = vsub.f32 %v2678, %v2848
    %v2887 = vsub.f32 %v2682, %v2849
    %v2888 = vsub.f32 %v2688, %v2850
    %v2889 = vsub.f32 %v2692, %v2851
    %v2890 = vsub.f32 %v2698, %v2852
    %v2891 = vsub.f32 %v2702, %v2853
    %v2892 = vsub.f32 %v2708, %v2854
    %v2893 = vsub.f32 %v2712, %v2855
    %v2894 = vsub.f32 %v2718, %v2856
    %v2895 = vsub.f32 %v2722, %v2857
    %v2896 = vsub.f32 %v2728, %v2858
    %v2897 = vsub.f32 %v2732, %v2859
    %v2898 = vsub.f32 %v2738, %v2860
    %v2899 = vsub.f32 %v2742, %v2861
    %v2900 = vsub.f32 %v2748, %v2862
    %v2901 = vsub.f32 %v2752, %v2863
    %v2902 = vsub.f32 %v2758, %v2864
    %v2903 = vsub.f32 %v2762, %v2865
    %v2904 = vsub.f32 %v2768, %v2866
    %v2905 = vsub.f32 %v2772, %v2867
    %v2906 = vsub.f32 %v2778, %v2868
    %v2907 = vsub.f32 %v2782, %v2869
    %v2908 = vsub.f32 %v2788, %v2870
    %v2909 = vsub.f32 %v2792, %v2871
    %v2910 = vsub.f32 %v2798, %v2872
    %v2911 = vsub.f32 %v2802, %v2873
    %v2912 = vsub.f32 %v2808, %v2874
    %v2913 = vsub.f32 %v2812, %v2875
    %v2914 = vsub.f32 %v2818, %v2876
    %v2915 = vsub.f32 %v2822, %v2877
    %v2916 = vsub.f32 %v2828, %v2878
    %v2917 = vsub.f32 %v2832, %v2879
    %v2918 = vsub.f32 %v2838, %v2880
    %v2919 = vsub.f32 %v2842, %v2881
    %v2920 = vmax.f32 %v2882, 0.0
    %v2921 = vmax.f32 %v2883, 0.0
    %v2922 = vmax.f32 %v2884, 0.0
    %v2923 = vmax.f32 %v2885, 0.0
    %v2924 = vmax.f32 %v2886, 0.0
    %v2925 = vmax.f32 %v2887, 0.0
    %v2926 = vmax.f32 %v2888, 0.0
    %v2927 = vmax.f32 %v2889, 0.0
    %v2928 = vmax.f32 %v2890, 0.0
    %v2929 = vmax.f32 %v2891, 0.0
    %v2930 = vmax.f32 %v2892, 0.0
    %v2931 = vmax.f32 %v2893, 0.0
    %v2932 = vmax.f32 %v2894, 0.0
    %v2933 = vmax.f32 %v2895, 0.0
    %v2934 = vmax.f32 %v2896, 0.0
    %v2935 = vmax.f32 %v2897, 0.0
    %v2936 = vmax.f32 %v2898, 0.0
    %v2937 = vmax.f32 %v2899, 0.0
    %v2938 = vmax.f32 %v2900, 0.0
    %v2939 = vmax.f32 %v2901, 0.0
    %v2940 = vmax.f32 %v2902, 0.0
    %v2941 = vmax.f32 %v2903, 0.0
    %v2942 = vmax.f32 %v2904, 0.0
    %v2943 = vmax.f32 %v2905, 0.0
    %v2944 = vmax.f32 %v2906, 0.0
    %v2945 = vmax.f32 %v2907, 0.0
    %v2946 = vmax.f32 %v2908, 0.0
    %v2947 = vmax.f32 %v2909, 0.0
    %v2948 = vmax.f32 %v2910, 0.0
    %v2949 = vmax.f32 %v2911, 0.0
    %v2950 = vmax.f32 %v2912, 0.0
    %v2951 = vmax.f32 %v2913, 0.0
    %v2952 = vmax.f32 %v2914, 0.0
    %v2953 = vmax.f32 %v2915, 0.0
    %v2954 = vmax.f32 %v2916, 0.0
    %v2955 = vmax.f32 %v2917, 0.0
    %v2956 = vmax.f32 %v2918, 0.0
    %v2957 = vmax.f32 %v2919, 0.0
    %v2958 = vadd.f32 %v2920, 1e-05
    %v2959 = vadd.f32 %v2921, 1e-05
    %v2960 = vadd.f32 %v2922, 1e-05
    %v2961 = vadd.f32 %v2923, 1e-05
    %v2962 = vadd.f32 %v2924, 1e-05
    %v2963 = vadd.f32 %v2925, 1e-05
    %v2964 = vadd.f32 %v2926, 1e-05
    %v2965 = vadd.f32 %v2927, 1e-05
    %v2966 = vadd.f32 %v2928, 1e-05
    %v2967 = vadd.f32 %v2929, 1e-05
    %v2968 = vadd.f32 %v2930, 1e-05
    %v2969 = vadd.f32 %v2931, 1e-05
    %v2970 = vadd.f32 %v2932, 1e-05
    %v2971 = vadd.f32 %v2933, 1e-05
    %v2972 = vadd.f32 %v2934, 1e-05
    %v2973 = vadd.f32 %v2935, 1e-05
    %v2974 = vadd.f32 %v2936, 1e-05
    %v2975 = vadd.f32 %v2937, 1e-05
    %v2976 = vadd.f32 %v2938, 1e-05
    %v2977 = vadd.f32 %v2939, 1e-05
    %v2978 = vadd.f32 %v2940, 1e-05
    %v2979 = vadd.f32 %v2941, 1e-05
    %v2980 = vadd.f32 %v2942, 1e-05
    %v2981 = vadd.f32 %v2943, 1e-05
    %v2982 = vadd.f32 %v2944, 1e-05
    %v2983 = vadd.f32 %v2945, 1e-05
    %v2984 = vadd.f32 %v2946, 1e-05
    %v2985 = vadd.f32 %v2947, 1e-05
    %v2986 = vadd.f32 %v2948, 1e-05
    %v2987 = vadd.f32 %v2949, 1e-05
    %v2988 = vadd.f32 %v2950, 1e-05
    %v2989 = vadd.f32 %v2951, 1e-05
    %v2990 = vadd.f32 %v2952, 1e-05
    %v2991 = vadd.f32 %v2953, 1e-05
    %v2992 = vadd.f32 %v2954, 1e-05
    %v2993 = vadd.f32 %v2955, 1e-05
    %v2994 = vadd.f32 %v2956, 1e-05
    %v2995 = vadd.f32 %v2957, 1e-05
    %v2996 = vrsqrt.pop %v2958
    %v2997 = vrsqrt.pop %v2959
    %v2998 = vrsqrt.pop %v2960
    %v2999 = vrsqrt.pop %v2961
    %v3000 = vrsqrt.pop %v2962
    %v3001 = vrsqrt.pop %v2963
    %v3002 = vrsqrt.pop %v2964
    %v3003 = vrsqrt.pop %v2965
    %v3004 = vrsqrt.pop %v2966
    %v3005 = vrsqrt.pop %v2967
    %v3006 = vrsqrt.pop %v2968
    %v3007 = vrsqrt.pop %v2969
    %v3008 = vrsqrt.pop %v2970
    %v3009 = vrsqrt.pop %v2971
    %v3010 = vrsqrt.pop %v2972
    %v3011 = vrsqrt.pop %v2973
    %v3012 = vrsqrt.pop %v2974
    %v3013 = vrsqrt.pop %v2975
    %v3014 = vrsqrt.pop %v2976
    %v3015 = vrsqrt.pop %v2977
    %v3016 = vrsqrt.pop %v2978
    %v3017 = vrsqrt.pop %v2979
    %v3018 = vrsqrt.pop %v2980
    %v3019 = vrsqrt.pop %v2981
    %v3020 = vrsqrt.pop %v2982
    %v3021 = vrsqrt.pop %v2983
    %v3022 = vrsqrt.pop %v2984
    %v3023 = vrsqrt.pop %v2985
    %v3024 = vrsqrt.pop %v2986
    %v3025 = vrsqrt.pop %v2987
    %v3026 = vrsqrt.pop %v2988
    %v3027 = vrsqrt.pop %v2989
    %v3028 = vrsqrt.pop %v2990
    %v3029 = vrsqrt.pop %v2991
    %v3030 = vrsqrt.pop %v2992
    %v3031 = vrsqrt.pop %v2993
    %v3032 = vrsqrt.pop %v2994
    %v3033 = vrsqrt.pop %v2995
    %v3034 = vsub.f32 %v2393, %v2656
    %v3035 = vsub.f32 %v2396, %v2660
    %v3036 = vsub.f32 %v2401, %v2666
    %v3037 = vsub.f32 %v2404, %v2670
    %v3038 = vsub.f32 %v2409, %v2676
    %v3039 = vsub.f32 %v2412, %v2680
    %v3040 = vsub.f32 %v2417, %v2686
    %v3041 = vsub.f32 %v2420, %v2690
    %v3042 = vsub.f32 %v2425, %v2696
    %v3043 = vsub.f32 %v2428, %v2700
    %v3044 = vsub.f32 %v2433, %v2706
    %v3045 = vsub.f32 %v2436, %v2710
    %v3046 = vsub.f32 %v2441, %v2716
    %v3047 = vsub.f32 %v2444, %v2720
    %v3048 = vsub.f32 %v2449, %v2726
    %v3049 = vsub.f32 %v2452, %v2730
    %v3050 = vsub.f32 %v2457, %v2736
    %v3051 = vsub.f32 %v2460, %v2740
    %v3052 = vsub.f32 %v2465, %v2746
    %v3053 = vsub.f32 %v2468, %v2750
    %v3054 = vsub.f32 %v2473, %v2756
    %v3055 = vsub.f32 %v2476, %v2760
    %v3056 = vsub.f32 %v2481, %v2766
    %v3057 = vsub.f32 %v2484, %v2770
    %v3058 = vsub.f32 %v2489, %v2776
    %v3059 = vsub.f32 %v2492, %v2780
    %v3060 = vsub.f32 %v2497, %v2786
    %v3061 = vsub.f32 %v2500, %v2790
    %v3062 = vsub.f32 %v2505, %v2796
    %v3063 = vsub.f32 %v2508, %v2800
    %v3064 = vsub.f32 %v2513, %v2806
    %v3065 = vsub.f32 %v2516, %v2810
    %v3066 = vsub.f32 %v2521, %v2816
    %v3067 = vsub.f32 %v2524, %v2820
    %v3068 = vsub.f32 %v2529, %v2826
    %v3069 = vsub.f32 %v2532, %v2830
    %v3070 = vsub.f32 %v2537, %v2836
    %v3071 = vsub.f32 %v2540, %v2840
    %v3072 = vlaneseq
    %v3073 = vshrl.u32 %v3072, 7
    %v3074 = vsub.s32 0, %v3073
    %v3075 = vrot.slane %v2543, %v3074
    %v3076 = vmul.f32 %v2996, %v3075
    %v3077 = vmul.f32 %v2997, %v3075
    %v3078 = vmul.f32 %v2998, %v3075
    %v3079 = vmul.f32 %v2999, %v3075
    %v3080 = vmul.f32 %v3000, %v3075
    %v3081 = vmul.f32 %v3001, %v3075
    %v3082 = vmul.f32 %v3002, %v3075
    %v3083 = vmul.f32 %v3003, %v3075
    %v3084 = vmul.f32 %v3004, %v3075
    %v3085 = vmul.f32 %v3005, %v3075
    %v3086 = vmul.f32 %v3006, %v3075
    %v3087 = vmul.f32 %v3007, %v3075
    %v3088 = vmul.f32 %v3008, %v3075
    %v3089 = vmul.f32 %v3009, %v3075
    %v3090 = vmul.f32 %v3010, %v3075
    %v3091 = vmul.f32 %v3011, %v3075
    %v3092 = vmul.f32 %v3012, %v3075
    %v3093 = vmul.f32 %v3013, %v3075
    %v3094 = vmul.f32 %v3014, %v3075
    %v3095 = vmul.f32 %v3015, %v3075
    %v3096 = vmul.f32 %v3016, %v3075
    %v3097 = vmul.f32 %v3017, %v3075
    %v3098 = vmul.f32 %v3018, %v3075
    %v3099 = vmul.f32 %v3019, %v3075
    %v3100 = vmul.f32 %v3020, %v3075
    %v3101 = vmul.f32 %v3021, %v3075
    %v3102 = vmul.f32 %v3022, %v3075
    %v3103 = vmul.f32 %v3023, %v3075
    %v3104 = vmul.f32 %v3024, %v3075
    %v3105 = vmul.f32 %v3025, %v3075
    %v3106 = vmul.f32 %v3026, %v3075
    %v3107 = vmul.f32 %v3027, %v3075
    %v3108 = vmul.f32 %v3028, %v3075
    %v3109 = vmul.f32 %v3029, %v3075
    %v3110 = vmul.f32 %v3030, %v3075
    %v3111 = vmul.f32 %v3031, %v3075
    %v3112 = vmul.f32 %v3032, %v3075
    %v3113 = vmul.f32 %v3033, %v3075
    %v3114 = vmul.f32 %v3034, %v3076
    %v3115 = vmul.f32 %v3035, %v3077
    %v3116 = vmul.f32 %v3036, %v3078
    %v3117 = vmul.f32 %v3037, %v3079
    %v3118 = vmul.f32 %v3038, %v3080
    %v3119 = vmul.f32 %v3039, %v3081
    %v3120 = vmul.f32 %v3040, %v3082
    %v3121 = vmul.f32 %v3041, %v3083
    %v3122 = vmul.f32 %v3042, %v3084
    %v3123 = vmul.f32 %v3043, %v3085
    %v3124 = vmul.f32 %v3044, %v3086
    %v3125 = vmul.f32 %v3045, %v3087
    %v3126 = vmul.f32 %v3046, %v3088
    %v3127 = vmul.f32 %v3047, %v3089
    %v3128 = vmul.f32 %v3048, %v3090
    %v3129 = vmul.f32 %v3049, %v3091
    %v3130 = vmul.f32 %v3050, %v3092
    %v3131 = vmul.f32 %v3051, %v3093
    %v3132 = vmul.f32 %v3052, %v3094
    %v3133 = vmul.f32 %v3053, %v3095
    %v3134 = vmul.f32 %v3054, %v3096
    %v3135 = vmul.f32 %v3055, %v3097
    %v3136 = vmul.f32 %v3056, %v3098
    %v3137 = vmul.f32 %v3057, %v3099
    %v3138 = vmul.f32 %v3058, %v3100
    %v3139 = vmul.f32 %v3059, %v3101
    %v3140 = vmul.f32 %v3060, %v3102
    %v3141 = vmul.f32 %v3061, %v3103
    %v3142 = vmul.f32 %v3062, %v3104
    %v3143 = vmul.f32 %v3063, %v3105
    %v3144 = vmul.f32 %v3064, %v3106
    %v3145 = vmul.f32 %v3065, %v3107
    %v3146 = vmul.f32 %v3066, %v3108
    %v3147 = vmul.f32 %v3067, %v3109
    %v3148 = vmul.f32 %v3068, %v3110
    %v3149 = vmul.f32 %v3069, %v3111
    %v3150 = vmul.f32 %v3070, %v3112
    %v3151 = vmul.f32 %v3071, %v3113
    %v3152 = vlaneseq
    %v3153 = vshrl.u32 %v3152, 7
    %v3154 = vsub.s32 0, %v3153
    %v3155 = vrot.slane %v2544, %v3154
    %v3156 = vadd.f32 %v3114, %v3155
    %v3157 = vadd.f32 %v3115, %v3155
    %v3158 = vadd.f32 %v3116, %v3155
    %v3159 = vadd.f32 %v3117, %v3155
    %v3160 = vadd.f32 %v3118, %v3155
    %v3161 = vadd.f32 %v3119, %v3155
    %v3162 = vadd.f32 %v3120, %v3155
    %v3163 = vadd.f32 %v3121, %v3155
    %v3164 = vadd.f32 %v3122, %v3155
    %v3165 = vadd.f32 %v3123, %v3155
    %v3166 = vadd.f32 %v3124, %v3155
    %v3167 = vadd.f32 %v3125, %v3155
    %v3168 = vadd.f32 %v3126, %v3155
    %v3169 = vadd.f32 %v3127, %v3155
    %v3170 = vadd.f32 %v3128, %v3155
    %v3171 = vadd.f32 %v3129, %v3155
    %v3172 = vadd.f32 %v3130, %v3155
    %v3173 = vadd.f32 %v3131, %v3155
    %v3174 = vadd.f32 %v3132, %v3155
    %v3175 = vadd.f32 %v3133, %v3155
    %v3176 = vadd.f32 %v3134, %v3155
    %v3177 = vadd.f32 %v3135, %v3155
    %v3178 = vadd.f32 %v3136, %v3155
    %v3179 = vadd.f32 %v3137, %v3155
    %v3180 = vadd.f32 %v3138, %v3155
    %v3181 = vadd.f32 %v3139, %v3155
    %v3182 = vadd.f32 %v3140, %v3155
    %v3183 = vadd.f32 %v3141, %v3155
    %v3184 = vadd.f32 %v3142, %v3155
    %v3185 = vadd.f32 %v3143, %v3155
    %v3186 = vadd.f32 %v3144, %v3155
    %v3187 = vadd.f32 %v3145, %v3155
    %v3188 = vadd.f32 %v3146, %v3155
    %v3189 = vadd.f32 %v3147, %v3155
    %v3190 = vadd.f32 %v3148, %v3155
    %v3191 = vadd.f32 %v3149, %v3155
    %v3192 = vadd.f32 %v3150, %v3155
    %v3193 = vadd.f32 %v3151, %v3155
    %v3194 = vmax.f32 %v3156, 0.0
    %v3195 = vmax.f32 %v3157, 0.0
    %v3196 = vmax.f32 %v3158, 0.0
    %v3197 = vmax.f32 %v3159, 0.0
    %v3198 = vmax.f32 %v3160, 0.0
    %v3199 = vmax.f32 %v3161, 0.0
    %v3200 = vmax.f32 %v3162, 0.0
    %v3201 = vmax.f32 %v3163, 0.0
    %v3202 = vmax.f32 %v3164, 0.0
    %v3203 = vmax.f32 %v3165, 0.0
    %v3204 = vmax.f32 %v3166, 0.0
    %v3205 = vmax.f32 %v3167, 0.0
    %v3206 = vmax.f32 %v3168, 0.0
    %v3207 = vmax.f32 %v3169, 0.0
    %v3208 = vmax.f32 %v3170, 0.0
    %v3209 = vmax.f32 %v3171, 0.0
    %v3210 = vmax.f32 %v3172, 0.0
    %v3211 = vmax.f32 %v3173, 0.0
    %v3212 = vmax.f32 %v3174, 0.0
    %v3213 = vmax.f32 %v3175, 0.0
    %v3214 = vmax.f32 %v3176, 0.0
    %v3215 = vmax.f32 %v3177, 0.0
    %v3216 = vmax.f32 %v3178, 0.0
    %v3217 = vmax.f32 %v3179, 0.0
    %v3218 = vmax.f32 %v3180, 0.0
    %v3219 = vmax.f32 %v3181, 0.0
    %v3220 = vmax.f32 %v3182, 0.0
    %v3221 = vmax.f32 %v3183, 0.0
    %v3222 = vmax.f32 %v3184, 0.0
    %v3223 = vmax.f32 %v3185, 0.0
    %v3224 = vmax.f32 %v3186, 0.0
    %v3225 = vmax.f32 %v3187, 0.0
    %v3226 = vmax.f32 %v3188, 0.0
    %v3227 = vmax.f32 %v3189, 0.0
    %v3228 = vmax.f32 %v3190, 0.0
    %v3229 = vmax.f32 %v3191, 0.0
    %v3230 = vmax.f32 %v3192, 0.0
    %v3231 = vmax.f32 %v3193, 0.0
    %v3232 = vpack.c.bf16 %v3195, %v3194
    %v3233 = vpack.c.bf16 %v3197, %v3196
    %v3234 = vpack.c.bf16 %v3199, %v3198
    %v3235 = vpack.c.bf16 %v3201, %v3200
    %v3236 = vpack.c.bf16 %v3203, %v3202
    %v3237 = vpack.c.bf16 %v3205, %v3204
    %v3238 = vpack.c.bf16 %v3207, %v3206
    %v3239 = vpack.c.bf16 %v3209, %v3208
    %v3240 = vpack.c.bf16 %v3211, %v3210
    %v3241 = vpack.c.bf16 %v3213, %v3212
    %v3242 = vpack.c.bf16 %v3215, %v3214
    %v3243 = vpack.c.bf16 %v3217, %v3216
    %v3244 = vpack.c.bf16 %v3219, %v3218
    %v3245 = vpack.c.bf16 %v3221, %v3220
    %v3246 = vpack.c.bf16 %v3223, %v3222
    %v3247 = vpack.c.bf16 %v3225, %v3224
    %v3248 = vpack.c.bf16 %v3227, %v3226
    %v3249 = vpack.c.bf16 %v3229, %v3228
    %v3250 = vpack.c.bf16 %v3231, %v3230
    %s3251 = scalar_lea.vmem [#allocation8], 128
    %v3252 = vld [vmem:[%s3251] sm:$0xf]
    %v3253 = vld [vmem:[%s3251 + $0x4] sm:$0xf]
    %v3254 = vld [vmem:[%s3251 + $0x8] sm:$0xf]
    %v3255 = vld [vmem:[%s3251 + $0xc] sm:$0xf]
    %v3256 = vld [vmem:[%s3251 + $0x10] sm:$0xf]
    %v3257 = vld [vmem:[%s3251 + $0x14] sm:$0xf]
    %v3258 = vld [vmem:[%s3251 + $0x18] sm:$0xf]
    %v3259 = vld [vmem:[%s3251 + $0x1c] sm:$0xf]
    %v3260 = vld [vmem:[%s3251 + $0x20] sm:$0xf]
    %v3261 = vld [vmem:[%s3251 + $0x24] sm:$0xf]
    %v3262 = vld [vmem:[%s3251 + $0x28] sm:$0xf]
    %v3263 = vld [vmem:[%s3251 + $0x2c] sm:$0xf]
    %v3264 = vld [vmem:[%s3251 + $0x30] sm:$0xf]
    %v3265 = vld [vmem:[%s3251 + $0x34] sm:$0xf]
    %v3266 = vld [vmem:[%s3251 + $0x38] sm:$0xf]
    %v3267 = vld [vmem:[%s3251 + $0x3c] sm:$0xf]
    %v3268 = vld [vmem:[#allocation7 + $0x4] sm:$0x1]
    %v3269 = vlaneseq
    %v3270 = vshrl.u32 %v3269, 7
    %v3271 = vsub.s32 0, %v3270
    %v3272 = vrot.slane %v3268, %v3271
    %v3289 = vunpack.c.l.b16 %v3252
    %v3290 = vunpack.c.l.b16 %v3253
    %v3291 = vunpack.c.l.b16 %v3254
    %v3292 = vunpack.c.l.b16 %v3255
    %v3293 = vunpack.c.l.b16 %v3256
    %v3294 = vunpack.c.l.b16 %v3257
    %v3295 = vunpack.c.l.b16 %v3258
    %v3296 = vunpack.c.l.b16 %v3259
    %v3297 = vunpack.c.l.b16 %v3260
    %v3298 = vunpack.c.l.b16 %v3261
    %v3299 = vunpack.c.l.b16 %v3262
    %v3300 = vunpack.c.l.b16 %v3263
    %v3301 = vunpack.c.l.b16 %v3264
    %v3302 = vunpack.c.l.b16 %v3265
    %v3303 = vunpack.c.l.b16 %v3266
    %v3304 = vunpack.c.l.b16 %v3267
    %v3305 = vpack.c.b16 %v3290, %v3289
    %v3306 = vpack.c.b16 %v3292, %v3291
    %v3307 = vpack.c.b16 %v3294, %v3293
    %v3308 = vpack.c.b16 %v3296, %v3295
    %v3309 = vpack.c.b16 %v3298, %v3297
    %v3310 = vpack.c.b16 %v3300, %v3299
    %v3311 = vpack.c.b16 %v3302, %v3301
    %v3312 = vpack.c.b16 %v3304, %v3303
    %3321 = vmatprep.subr.bf16.mxu0 0
    %3322 = vmatpush1.bf16.msra.mxu0 %v3305
    %3323 = vmatprep.subr.bf16.mxu0 0
    %3324 = vmatpush1.bf16.msra.mxu0 %v3306
    %3325 = vmatprep.subr.bf16.mxu0 0
    %3326 = vmatpush1.bf16.msra.mxu0 %v3307
    %3327 = vmatprep.subr.bf16.mxu0 0
    %3328 = vmatpush1.bf16.msra.mxu0 %v3308
    %3329 = vmatprep.subr.bf16.mxu0 0
    %3330 = vmatpush1.bf16.msra.mxu0 %v3309
    %3331 = vmatprep.subr.bf16.mxu0 0
    %3332 = vmatpush1.bf16.msra.mxu0 %v3310
    %3333 = vmatprep.subr.bf16.mxu0 0
    %3334 = vmatpush1.bf16.msra.mxu0 %v3311
    %3335 = vmatprep.subr.bf16.mxu0 0
    %3336 = vmatpush1.bf16.msra.mxu0 %v3312
    %3337 = vmatprep.subr.bf16.mxu0 0
    %3338 = vmatpush1.bf16.msra.mxu0 0
    %3339 = vmatprep.subr.bf16.mxu0 0
    %3340 = vmatpush1.bf16.msra.mxu0 0
    %3341 = vmatprep.subr.bf16.mxu0 0
    %3342 = vmatpush1.bf16.msra.mxu0 0
    %3343 = vmatprep.subr.bf16.mxu0 0
    %3344 = vmatpush1.bf16.msra.mxu0 0
    %3345 = vmatprep.subr.bf16.mxu0 0
    %3346 = vmatpush1.bf16.msra.mxu0 0
    %3347 = vmatprep.subr.bf16.mxu0 0
    %3348 = vmatpush1.bf16.msra.mxu0 0
    %3349 = vmatprep.subr.bf16.mxu0 0
    %3350 = vmatpush1.bf16.msra.mxu0 0
    %3351 = vmatprep.subr.bf16.mxu0 0
    %3352 = vmatpush1.bf16.msra.mxu0 0
    %3353 = vmatprep.mubr.bf16.mxu0 0
    %3354 = vmatmul.mubr.bf16.gmra.mrb[0].mxu0 %v3232
    %v3355 = vpop.f32.mrb[0].mxu0
    %v3356 = vadd.f32 %v3272, %v3355
    %v3357 = vpop.f32.mrb[0].mxu0
    %v3358 = vpop.f32.mrb[0].mxu0
    %v3359 = vadd.f32 %v3272, %v3358
    %v3360 = vpop.f32.mrb[0].mxu0
    %3361 = vmatprep.mubr.bf16.mxu0 0
    %3362 = vmatmul.mubr.bf16.gmra.mrb[0].mxu0 %v3233
    %v3363 = vpop.f32.mrb[0].mxu0
    %v3364 = vadd.f32 %v3272, %v3363
    %v3365 = vpop.f32.mrb[0].mxu0
    %v3366 = vpop.f32.mrb[0].mxu0
    %v3367 = vadd.f32 %v3272, %v3366
    %v3368 = vpop.f32.mrb[0].mxu0
    %3369 = vmatprep.mubr.bf16.mxu0 0
    %3370 = vmatmul.mubr.bf16.gmra.mrb[0].mxu0 %v3234
    %v3371 = vpop.f32.mrb[0].mxu0
    %v3372 = vadd.f32 %v3272, %v3371
    %v3373 = vpop.f32.mrb[0].mxu0
    %v3374 = vpop.f32.mrb[0].mxu0
    %v3375 = vadd.f32 %v3272, %v3374
    %v3376 = vpop.f32.mrb[0].mxu0
    %3377 = vmatprep.mubr.bf16.mxu0 0
    %3378 = vmatmul.mubr.bf16.gmra.mrb[0].mxu0 %v3235
    %v3379 = vpop.f32.mrb[0].mxu0
    %v3380 = vadd.f32 %v3272, %v3379
    %v3381 = vpop.f32.mrb[0].mxu0
    %v3382 = vpop.f32.mrb[0].mxu0
    %v3383 = vadd.f32 %v3272, %v3382
    %v3384 = vpop.f32.mrb[0].mxu0
    %3385 = vmatprep.mubr.bf16.mxu0 0
    %3386 = vmatmul.mubr.bf16.gmra.mrb[0].mxu0 %v3236
    %v3387 = vpop.f32.mrb[0].mxu0
    %v3388 = vadd.f32 %v3272, %v3387
    %v3389 = vpop.f32.mrb[0].mxu0
    %v3390 = vpop.f32.mrb[0].mxu0
    %v3391 = vadd.f32 %v3272, %v3390
    %v3392 = vpop.f32.mrb[0].mxu0
    %3393 = vmatprep.mubr.bf16.mxu0 0
    %3394 = vmatmul.mubr.bf16.gmra.mrb[0].mxu0 %v3237
    %v3395 = vpop.f32.mrb[0].mxu0
    %v3396 = vadd.f32 %v3272, %v3395
    %v3397 = vpop.f32.mrb[0].mxu0
    %v3398 = vpop.f32.mrb[0].mxu0
    %v3399 = vadd.f32 %v3272, %v3398
    %v3400 = vpop.f32.mrb[0].mxu0
    %3401 = vmatprep.mubr.bf16.mxu0 0
    %3402 = vmatmul.mubr.bf16.gmra.mrb[0].mxu0 %v3238
    %v3403 = vpop.f32.mrb[0].mxu0
    %v3404 = vadd.f32 %v3272, %v3403
    %v3405 = vpop.f32.mrb[0].mxu0
    %v3406 = vpop.f32.mrb[0].mxu0
    %v3407 = vadd.f32 %v3272, %v3406
    %v3408 = vpop.f32.mrb[0].mxu0
    %3409 = vmatprep.mubr.bf16.mxu0 0
    %3410 = vmatmul.mubr.bf16.gmra.mrb[0].mxu0 %v3239
    %v3411 = vpop.f32.mrb[0].mxu0
    %v3412 = vadd.f32 %v3272, %v3411
    %v3413 = vpop.f32.mrb[0].mxu0
    %v3414 = vpop.f32.mrb[0].mxu0
    %v3415 = vadd.f32 %v3272, %v3414
    %v3416 = vpop.f32.mrb[0].mxu0
    %3417 = vmatprep.mubr.bf16.mxu0 0
    %3418 = vmatmul.mubr.bf16.gmra.mrb[0].mxu0 %v3240
    %v3419 = vpop.f32.mrb[0].mxu0
    %v3420 = vadd.f32 %v3272, %v3419
    %v3421 = vpop.f32.mrb[0].mxu0
    %v3422 = vpop.f32.mrb[0].mxu0
    %v3423 = vadd.f32 %v3272, %v3422
    %v3424 = vpop.f32.mrb[0].mxu0
    %3425 = vmatprep.mubr.bf16.mxu0 0
    %3426 = vmatmul.mubr.bf16.gmra.mrb[0].mxu0 %v3241
    %v3427 = vpop.f32.mrb[0].mxu0
    %v3428 = vadd.f32 %v3272, %v3427
    %v3429 = vpop.f32.mrb[0].mxu0
    %v3430 = vpop.f32.mrb[0].mxu0
    %v3431 = vadd.f32 %v3272, %v3430
    %v3432 = vpop.f32.mrb[0].mxu0
    %3433 = vmatprep.mubr.bf16.mxu0 0
    %3434 = vmatmul.mubr.bf16.gmra.mrb[0].mxu0 %v3242
    %v3435 = vpop.f32.mrb[0].mxu0
    %v3436 = vadd.f32 %v3272, %v3435
    %v3437 = vpop.f32.mrb[0].mxu0
    %v3438 = vpop.f32.mrb[0].mxu0
    %v3439 = vadd.f32 %v3272, %v3438
    %v3440 = vpop.f32.mrb[0].mxu0
    %3441 = vmatprep.mubr.bf16.mxu0 0
    %3442 = vmatmul.mubr.bf16.gmra.mrb[0].mxu0 %v3243
    %v3443 = vpop.f32.mrb[0].mxu0
    %v3444 = vadd.f32 %v3272, %v3443
    %v3445 = vpop.f32.mrb[0].mxu0
    %v3446 = vpop.f32.mrb[0].mxu0
    %v3447 = vadd.f32 %v3272, %v3446
    %v3448 = vpop.f32.mrb[0].mxu0
    %3449 = vmatprep.mubr.bf16.mxu0 0
    %3450 = vmatmul.mubr.bf16.gmra.mrb[0].mxu0 %v3244
    %v3451 = vpop.f32.mrb[0].mxu0
    %v3452 = vadd.f32 %v3272, %v3451
    %v3453 = vpop.f32.mrb[0].mxu0
    %v3454 = vpop.f32.mrb[0].mxu0
    %v3455 = vadd.f32 %v3272, %v3454
    %v3456 = vpop.f32.mrb[0].mxu0
    %3457 = vmatprep.mubr.bf16.mxu0 0
    %3458 = vmatmul.mubr.bf16.gmra.mrb[0].mxu0 %v3245
    %v3459 = vpop.f32.mrb[0].mxu0
    %v3460 = vadd.f32 %v3272, %v3459
    %v3461 = vpop.f32.mrb[0].mxu0
    %v3462 = vpop.f32.mrb[0].mxu0
    %v3463 = vadd.f32 %v3272, %v3462
    %v3464 = vpop.f32.mrb[0].mxu0
    %3465 = vmatprep.mubr.bf16.mxu0 0
    %3466 = vmatmul.mubr.bf16.gmra.mrb[0].mxu0 %v3246
    %v3467 = vpop.f32.mrb[0].mxu0
    %v3468 = vadd.f32 %v3272, %v3467
    %v3469 = vpop.f32.mrb[0].mxu0
    %v3470 = vpop.f32.mrb[0].mxu0
    %v3471 = vadd.f32 %v3272, %v3470
    %v3472 = vpop.f32.mrb[0].mxu0
    %3473 = vmatprep.mubr.bf16.mxu0 0
    %3474 = vmatmul.mubr.bf16.gmra.mrb[0].mxu0 %v3247
    %v3475 = vpop.f32.mrb[0].mxu0
    %v3476 = vadd.f32 %v3272, %v3475
    %v3477 = vpop.f32.mrb[0].mxu0
    %v3478 = vpop.f32.mrb[0].mxu0
    %v3479 = vadd.f32 %v3272, %v3478
    %v3480 = vpop.f32.mrb[0].mxu0
    %3481 = vmatprep.mubr.bf16.mxu0 0
    %3482 = vmatmul.mubr.bf16.gmra.mrb[0].mxu0 %v3248
    %v3483 = vpop.f32.mrb[0].mxu0
    %v3484 = vadd.f32 %v3272, %v3483
    %v3485 = vpop.f32.mrb[0].mxu0
    %v3486 = vpop.f32.mrb[0].mxu0
    %v3487 = vadd.f32 %v3272, %v3486
    %v3488 = vpop.f32.mrb[0].mxu0
    %3489 = vmatprep.mubr.bf16.mxu0 0
    %3490 = vmatmul.mubr.bf16.gmra.mrb[0].mxu0 %v3249
    %v3491 = vpop.f32.mrb[0].mxu0
    %v3492 = vadd.f32 %v3272, %v3491
    %v3493 = vpop.f32.mrb[0].mxu0
    %v3494 = vpop.f32.mrb[0].mxu0
    %v3495 = vadd.f32 %v3272, %v3494
    %v3496 = vpop.f32.mrb[0].mxu0
    %3497 = vmatprep.mubr.bf16.mxu0 0
    %3498 = vmatmul.mubr.bf16.gmra.mrb[0].mxu0 %v3250
    %v3499 = vpop.f32.mrb[0].mxu0
    %v3500 = vadd.f32 %v3272, %v3499
    %v3501 = vpop.f32.mrb[0].mxu0
    %v3502 = vpop.f32.mrb[0].mxu0
    %v3503 = vadd.f32 %v3272, %v3502
    %v3504 = vpop.f32.mrb[0].mxu0
    %3505 = vdwg.mxu0
    %v3506 = vld [vmem:[#allocation7 + $0x9] sm:$0x1]
    %v3507 = vld [vmem:[#allocation7 + $0xd] sm:$0x1]
    %v3508 = vpack.c.bf16 %v3359, %v3356
    %v3509 = vpack.c.bf16 %v3367, %v3364
    %v3510 = vpack.c.bf16 %v3375, %v3372
    %v3511 = vpack.c.bf16 %v3383, %v3380
    %v3512 = vpack.c.bf16 %v3391, %v3388
    %v3513 = vpack.c.bf16 %v3399, %v3396
    %v3514 = vpack.c.bf16 %v3407, %v3404
    %v3515 = vpack.c.bf16 %v3415, %v3412
    %v3516 = vpack.c.bf16 %v3423, %v3420
    %v3517 = vpack.c.bf16 %v3431, %v3428
    %v3518 = vpack.c.bf16 %v3439, %v3436
    %v3519 = vpack.c.bf16 %v3447, %v3444
    %v3520 = vpack.c.bf16 %v3455, %v3452
    %v3521 = vpack.c.bf16 %v3463, %v3460
    %v3522 = vpack.c.bf16 %v3471, %v3468
    %v3523 = vpack.c.bf16 %v3479, %v3476
    %v3524 = vpack.c.bf16 %v3487, %v3484
    %v3525 = vpack.c.bf16 %v3495, %v3492
    %v3526 = vpack.c.bf16 %v3503, %v3500
    %v3527 = vmul.f32 %v3356, %v3356
    %v3528 = vmul.f32 %v3359, %v3359
    %v3529 = vmul.f32 %v3364, %v3364
    %v3530 = vmul.f32 %v3367, %v3367
    %v3531 = vmul.f32 %v3372, %v3372
    %v3532 = vmul.f32 %v3375, %v3375
    %v3533 = vmul.f32 %v3380, %v3380
    %v3534 = vmul.f32 %v3383, %v3383
    %v3535 = vmul.f32 %v3388, %v3388
    %v3536 = vmul.f32 %v3391, %v3391
    %v3537 = vmul.f32 %v3396, %v3396
    %v3538 = vmul.f32 %v3399, %v3399
    %v3539 = vmul.f32 %v3404, %v3404
    %v3540 = vmul.f32 %v3407, %v3407
    %v3541 = vmul.f32 %v3412, %v3412
    %v3542 = vmul.f32 %v3415, %v3415
    %v3543 = vmul.f32 %v3420, %v3420
    %v3544 = vmul.f32 %v3423, %v3423
    %v3545 = vmul.f32 %v3428, %v3428
    %v3546 = vmul.f32 %v3431, %v3431
    %v3547 = vmul.f32 %v3436, %v3436
    %v3548 = vmul.f32 %v3439, %v3439
    %v3549 = vmul.f32 %v3444, %v3444
    %v3550 = vmul.f32 %v3447, %v3447
    %v3551 = vmul.f32 %v3452, %v3452
    %v3552 = vmul.f32 %v3455, %v3455
    %v3553 = vmul.f32 %v3460, %v3460
    %v3554 = vmul.f32 %v3463, %v3463
    %v3555 = vmul.f32 %v3468, %v3468
    %v3556 = vmul.f32 %v3471, %v3471
    %v3557 = vmul.f32 %v3476, %v3476
    %v3558 = vmul.f32 %v3479, %v3479
    %v3559 = vmul.f32 %v3484, %v3484
    %v3560 = vmul.f32 %v3487, %v3487
    %v3561 = vmul.f32 %v3492, %v3492
    %v3562 = vmul.f32 %v3495, %v3495
    %v3563 = vmul.f32 %v3500, %v3500
    %v3564 = vmul.f32 %v3503, %v3503
    %v3565 = vpack.c.bf16 %v3528, %v3527
    %v3566 = vpack.c.bf16 %v3530, %v3529
    %v3567 = vpack.c.bf16 %v3532, %v3531
    %v3568 = vpack.c.bf16 %v3534, %v3533
    %v3569 = vpack.c.bf16 %v3536, %v3535
    %v3570 = vpack.c.bf16 %v3538, %v3537
    %v3571 = vpack.c.bf16 %v3540, %v3539
    %v3572 = vpack.c.bf16 %v3542, %v3541
    %v3573 = vpack.c.bf16 %v3544, %v3543
    %v3574 = vpack.c.bf16 %v3546, %v3545
    %v3575 = vpack.c.bf16 %v3548, %v3547
    %v3576 = vpack.c.bf16 %v3550, %v3549
    %v3577 = vpack.c.bf16 %v3552, %v3551
    %v3578 = vpack.c.bf16 %v3554, %v3553
    %v3579 = vpack.c.bf16 %v3556, %v3555
    %v3580 = vpack.c.bf16 %v3558, %v3557
    %v3581 = vpack.c.bf16 %v3560, %v3559
    %v3582 = vpack.c.bf16 %v3562, %v3561
    %v3583 = vpack.c.bf16 %v3564, %v3563
    %3584 = vmatprep.subr.bf16.mxu0 %v633
    %3585 = vmatpush1.bf16.msra.mxu0 %v632
    %3586 = vmatprep.subr.bf16.mxu0 %v635
    %3587 = vmatpush1.bf16.msra.mxu0 %v634
    %3588 = vmatprep.subr.bf16.mxu0 %v637
    %3589 = vmatpush1.bf16.msra.mxu0 %v636
    %3590 = vmatprep.subr.bf16.mxu0 %v639
    %3591 = vmatpush1.bf16.msra.mxu0 %v638
    %3592 = vmatprep.subr.bf16.mxu0 %v641
    %3593 = vmatpush1.bf16.msra.mxu0 %v640
    %3594 = vmatprep.subr.bf16.mxu0 %v643
    %3595 = vmatpush1.bf16.msra.mxu0 %v642
    %3596 = vmatprep.subr.bf16.mxu0 %v645
    %3597 = vmatpush1.bf16.msra.mxu0 %v644
    %3598 = vmatprep.subr.bf16.mxu0 %v647
    %3599 = vmatpush1.bf16.msra.mxu0 %v646
    %3600 = vmatprep.subr.bf16.mxu0 %v649
    %3601 = vmatpush1.bf16.msra.mxu0 %v648
    %3602 = vmatprep.subr.bf16.mxu0 %v651
    %3603 = vmatpush1.bf16.msra.mxu0 %v650
    %3604 = vmatprep.subr.bf16.mxu0 %v653
    %3605 = vmatpush1.bf16.msra.mxu0 %v652
    %3606 = vmatprep.subr.bf16.mxu0 %v655
    %3607 = vmatpush1.bf16.msra.mxu0 %v654
    %3608 = vmatprep.subr.bf16.mxu0 %v657
    %3609 = vmatpush1.bf16.msra.mxu0 %v656
    %3610 = vmatprep.subr.bf16.mxu0 %v659
    %3611 = vmatpush1.bf16.msra.mxu0 %v658
    %3612 = vmatprep.subr.bf16.mxu0 %v661
    %3613 = vmatpush1.bf16.msra.mxu0 %v660
    %3614 = vmatprep.subr.bf16.mxu0 %v663
    %3615 = vmatpush1.bf16.msra.mxu0 %v662
    %3616 = vmatprep.mubr.bf16.mxu0 %v3565
    %3617 = vmatmul.mubr.bf16.gmra.mrb[0].mxu0 %v3508
    %v3618 = vpop.f32.mrb[0].mxu0
    %v3619 = vadd.f32 0.0, %v3618
    %v3620 = vpop.f32.mrb[0].mxu0
    %v3621 = vadd.f32 0.0, %v3620
    %v3622 = vpop.f32.mrb[0].mxu0
    %v3623 = vadd.f32 0.0, %v3622
    %v3624 = vpop.f32.mrb[0].mxu0
    %v3625 = vadd.f32 0.0, %v3624
    %3626 = vmatprep.mubr.bf16.mxu0 %v3566
    %3627 = vmatmul.mubr.bf16.gmra.mrb[0].mxu0 %v3509
    %v3628 = vpop.f32.mrb[0].mxu0
    %v3629 = vadd.f32 0.0, %v3628
    %v3630 = vpop.f32.mrb[0].mxu0
    %v3631 = vadd.f32 0.0, %v3630
    %v3632 = vpop.f32.mrb[0].mxu0
    %v3633 = vadd.f32 0.0, %v3632
    %v3634 = vpop.f32.mrb[0].mxu0
    %v3635 = vadd.f32 0.0, %v3634
    %3636 = vmatprep.mubr.bf16.mxu0 %v3567
    %3637 = vmatmul.mubr.bf16.gmra.mrb[0].mxu0 %v3510
    %v3638 = vpop.f32.mrb[0].mxu0
    %v3639 = vadd.f32 0.0, %v3638
    %v3640 = vpop.f32.mrb[0].mxu0
    %v3641 = vadd.f32 0.0, %v3640
    %v3642 = vpop.f32.mrb[0].mxu0
    %v3643 = vadd.f32 0.0, %v3642
    %v3644 = vpop.f32.mrb[0].mxu0
    %v3645 = vadd.f32 0.0, %v3644
    %3646 = vmatprep.mubr.bf16.mxu0 %v3568
    %3647 = vmatmul.mubr.bf16.gmra.mrb[0].mxu0 %v3511
    %v3648 = vpop.f32.mrb[0].mxu0
    %v3649 = vadd.f32 0.0, %v3648
    %v3650 = vpop.f32.mrb[0].mxu0
    %v3651 = vadd.f32 0.0, %v3650
    %v3652 = vpop.f32.mrb[0].mxu0
    %v3653 = vadd.f32 0.0, %v3652
    %v3654 = vpop.f32.mrb[0].mxu0
    %v3655 = vadd.f32 0.0, %v3654
    %3656 = vmatprep.mubr.bf16.mxu0 %v3569
    %3657 = vmatmul.mubr.bf16.gmra.mrb[0].mxu0 %v3512
    %v3658 = vpop.f32.mrb[0].mxu0
    %v3659 = vadd.f32 0.0, %v3658
    %v3660 = vpop.f32.mrb[0].mxu0
    %v3661 = vadd.f32 0.0, %v3660
    %v3662 = vpop.f32.mrb[0].mxu0
    %v3663 = vadd.f32 0.0, %v3662
    %v3664 = vpop.f32.mrb[0].mxu0
    %v3665 = vadd.f32 0.0, %v3664
    %3666 = vmatprep.mubr.bf16.mxu0 %v3570
    %3667 = vmatmul.mubr.bf16.gmra.mrb[0].mxu0 %v3513
    %v3668 = vpop.f32.mrb[0].mxu0
    %v3669 = vadd.f32 0.0, %v3668
    %v3670 = vpop.f32.mrb[0].mxu0
    %v3671 = vadd.f32 0.0, %v3670
    %v3672 = vpop.f32.mrb[0].mxu0
    %v3673 = vadd.f32 0.0, %v3672
    %v3674 = vpop.f32.mrb[0].mxu0
    %v3675 = vadd.f32 0.0, %v3674
    %3676 = vmatprep.mubr.bf16.mxu0 %v3571
    %3677 = vmatmul.mubr.bf16.gmra.mrb[0].mxu0 %v3514
    %v3678 = vpop.f32.mrb[0].mxu0
    %v3679 = vadd.f32 0.0, %v3678
    %v3680 = vpop.f32.mrb[0].mxu0
    %v3681 = vadd.f32 0.0, %v3680
    %v3682 = vpop.f32.mrb[0].mxu0
    %v3683 = vadd.f32 0.0, %v3682
    %v3684 = vpop.f32.mrb[0].mxu0
    %v3685 = vadd.f32 0.0, %v3684
    %3686 = vmatprep.mubr.bf16.mxu0 %v3572
    %3687 = vmatmul.mubr.bf16.gmra.mrb[0].mxu0 %v3515
    %v3688 = vpop.f32.mrb[0].mxu0
    %v3689 = vadd.f32 0.0, %v3688
    %v3690 = vpop.f32.mrb[0].mxu0
    %v3691 = vadd.f32 0.0, %v3690
    %v3692 = vpop.f32.mrb[0].mxu0
    %v3693 = vadd.f32 0.0, %v3692
    %v3694 = vpop.f32.mrb[0].mxu0
    %v3695 = vadd.f32 0.0, %v3694
    %3696 = vmatprep.mubr.bf16.mxu0 %v3573
    %3697 = vmatmul.mubr.bf16.gmra.mrb[0].mxu0 %v3516
    %v3698 = vpop.f32.mrb[0].mxu0
    %v3699 = vadd.f32 0.0, %v3698
    %v3700 = vpop.f32.mrb[0].mxu0
    %v3701 = vadd.f32 0.0, %v3700
    %v3702 = vpop.f32.mrb[0].mxu0
    %v3703 = vadd.f32 0.0, %v3702
    %v3704 = vpop.f32.mrb[0].mxu0
    %v3705 = vadd.f32 0.0, %v3704
    %3706 = vmatprep.mubr.bf16.mxu0 %v3574
    %3707 = vmatmul.mubr.bf16.gmra.mrb[0].mxu0 %v3517
    %v3708 = vpop.f32.mrb[0].mxu0
    %v3709 = vadd.f32 0.0, %v3708
    %v3710 = vpop.f32.mrb[0].mxu0
    %v3711 = vadd.f32 0.0, %v3710
    %v3712 = vpop.f32.mrb[0].mxu0
    %v3713 = vadd.f32 0.0, %v3712
    %v3714 = vpop.f32.mrb[0].mxu0
    %v3715 = vadd.f32 0.0, %v3714
    %3716 = vmatprep.mubr.bf16.mxu0 %v3575
    %3717 = vmatmul.mubr.bf16.gmra.mrb[0].mxu0 %v3518
    %v3718 = vpop.f32.mrb[0].mxu0
    %v3719 = vadd.f32 0.0, %v3718
    %v3720 = vpop.f32.mrb[0].mxu0
    %v3721 = vadd.f32 0.0, %v3720
    %v3722 = vpop.f32.mrb[0].mxu0
    %v3723 = vadd.f32 0.0, %v3722
    %v3724 = vpop.f32.mrb[0].mxu0
    %v3725 = vadd.f32 0.0, %v3724
    %3726 = vmatprep.mubr.bf16.mxu0 %v3576
    %3727 = vmatmul.mubr.bf16.gmra.mrb[0].mxu0 %v3519
    %v3728 = vpop.f32.mrb[0].mxu0
    %v3729 = vadd.f32 0.0, %v3728
    %v3730 = vpop.f32.mrb[0].mxu0
    %v3731 = vadd.f32 0.0, %v3730
    %v3732 = vpop.f32.mrb[0].mxu0
    %v3733 = vadd.f32 0.0, %v3732
    %v3734 = vpop.f32.mrb[0].mxu0
    %v3735 = vadd.f32 0.0, %v3734
    %3736 = vmatprep.mubr.bf16.mxu0 %v3577
    %3737 = vmatmul.mubr.bf16.gmra.mrb[0].mxu0 %v3520
    %v3738 = vpop.f32.mrb[0].mxu0
    %v3739 = vadd.f32 0.0, %v3738
    %v3740 = vpop.f32.mrb[0].mxu0
    %v3741 = vadd.f32 0.0, %v3740
    %v3742 = vpop.f32.mrb[0].mxu0
    %v3743 = vadd.f32 0.0, %v3742
    %v3744 = vpop.f32.mrb[0].mxu0
    %v3745 = vadd.f32 0.0, %v3744
    %3746 = vmatprep.mubr.bf16.mxu0 %v3578
    %3747 = vmatmul.mubr.bf16.gmra.mrb[0].mxu0 %v3521
    %v3748 = vpop.f32.mrb[0].mxu0
    %v3749 = vadd.f32 0.0, %v3748
    %v3750 = vpop.f32.mrb[0].mxu0
    %v3751 = vadd.f32 0.0, %v3750
    %v3752 = vpop.f32.mrb[0].mxu0
    %v3753 = vadd.f32 0.0, %v3752
    %v3754 = vpop.f32.mrb[0].mxu0
    %v3755 = vadd.f32 0.0, %v3754
    %3756 = vmatprep.mubr.bf16.mxu0 %v3579
    %3757 = vmatmul.mubr.bf16.gmra.mrb[0].mxu0 %v3522
    %v3758 = vpop.f32.mrb[0].mxu0
    %v3759 = vadd.f32 0.0, %v3758
    %v3760 = vpop.f32.mrb[0].mxu0
    %v3761 = vadd.f32 0.0, %v3760
    %v3762 = vpop.f32.mrb[0].mxu0
    %v3763 = vadd.f32 0.0, %v3762
    %v3764 = vpop.f32.mrb[0].mxu0
    %v3765 = vadd.f32 0.0, %v3764
    %3766 = vmatprep.mubr.bf16.mxu0 %v3580
    %3767 = vmatmul.mubr.bf16.gmra.mrb[0].mxu0 %v3523
    %v3768 = vpop.f32.mrb[0].mxu0
    %v3769 = vadd.f32 0.0, %v3768
    %v3770 = vpop.f32.mrb[0].mxu0
    %v3771 = vadd.f32 0.0, %v3770
    %v3772 = vpop.f32.mrb[0].mxu0
    %v3773 = vadd.f32 0.0, %v3772
    %v3774 = vpop.f32.mrb[0].mxu0
    %v3775 = vadd.f32 0.0, %v3774
    %3776 = vmatprep.mubr.bf16.mxu0 %v3581
    %3777 = vmatmul.mubr.bf16.gmra.mrb[0].mxu0 %v3524
    %v3778 = vpop.f32.mrb[0].mxu0
    %v3779 = vadd.f32 0.0, %v3778
    %v3780 = vpop.f32.mrb[0].mxu0
    %v3781 = vadd.f32 0.0, %v3780
    %v3782 = vpop.f32.mrb[0].mxu0
    %v3783 = vadd.f32 0.0, %v3782
    %v3784 = vpop.f32.mrb[0].mxu0
    %v3785 = vadd.f32 0.0, %v3784
    %3786 = vmatprep.mubr.bf16.mxu0 %v3582
    %3787 = vmatmul.mubr.bf16.gmra.mrb[0].mxu0 %v3525
    %v3788 = vpop.f32.mrb[0].mxu0
    %v3789 = vadd.f32 0.0, %v3788
    %v3790 = vpop.f32.mrb[0].mxu0
    %v3791 = vadd.f32 0.0, %v3790
    %v3792 = vpop.f32.mrb[0].mxu0
    %v3793 = vadd.f32 0.0, %v3792
    %v3794 = vpop.f32.mrb[0].mxu0
    %v3795 = vadd.f32 0.0, %v3794
    %3796 = vmatprep.mubr.bf16.mxu0 %v3583
    %3797 = vmatmul.mubr.bf16.gmra.mrb[0].mxu0 %v3526
    %v3798 = vpop.f32.mrb[0].mxu0
    %v3799 = vadd.f32 0.0, %v3798
    %v3800 = vpop.f32.mrb[0].mxu0
    %v3801 = vadd.f32 0.0, %v3800
    %v3802 = vpop.f32.mrb[0].mxu0
    %v3803 = vadd.f32 0.0, %v3802
    %v3804 = vpop.f32.mrb[0].mxu0
    %v3805 = vadd.f32 0.0, %v3804
    %3806 = vdwg.mxu0
    %v3807 = vmul.f32 %v3619, %v3619
    %v3808 = vmul.f32 %v3623, %v3623
    %v3809 = vmul.f32 %v3629, %v3629
    %v3810 = vmul.f32 %v3633, %v3633
    %v3811 = vmul.f32 %v3639, %v3639
    %v3812 = vmul.f32 %v3643, %v3643
    %v3813 = vmul.f32 %v3649, %v3649
    %v3814 = vmul.f32 %v3653, %v3653
    %v3815 = vmul.f32 %v3659, %v3659
    %v3816 = vmul.f32 %v3663, %v3663
    %v3817 = vmul.f32 %v3669, %v3669
    %v3818 = vmul.f32 %v3673, %v3673
    %v3819 = vmul.f32 %v3679, %v3679
    %v3820 = vmul.f32 %v3683, %v3683
    %v3821 = vmul.f32 %v3689, %v3689
    %v3822 = vmul.f32 %v3693, %v3693
    %v3823 = vmul.f32 %v3699, %v3699
    %v3824 = vmul.f32 %v3703, %v3703
    %v3825 = vmul.f32 %v3709, %v3709
    %v3826 = vmul.f32 %v3713, %v3713
    %v3827 = vmul.f32 %v3719, %v3719
    %v3828 = vmul.f32 %v3723, %v3723
    %v3829 = vmul.f32 %v3729, %v3729
    %v3830 = vmul.f32 %v3733, %v3733
    %v3831 = vmul.f32 %v3739, %v3739
    %v3832 = vmul.f32 %v3743, %v3743
    %v3833 = vmul.f32 %v3749, %v3749
    %v3834 = vmul.f32 %v3753, %v3753
    %v3835 = vmul.f32 %v3759, %v3759
    %v3836 = vmul.f32 %v3763, %v3763
    %v3837 = vmul.f32 %v3769, %v3769
    %v3838 = vmul.f32 %v3773, %v3773
    %v3839 = vmul.f32 %v3779, %v3779
    %v3840 = vmul.f32 %v3783, %v3783
    %v3841 = vmul.f32 %v3789, %v3789
    %v3842 = vmul.f32 %v3793, %v3793
    %v3843 = vmul.f32 %v3799, %v3799
    %v3844 = vmul.f32 %v3803, %v3803
    %v3845 = vsub.f32 %v3621, %v3807
    %v3846 = vsub.f32 %v3625, %v3808
    %v3847 = vsub.f32 %v3631, %v3809
    %v3848 = vsub.f32 %v3635, %v3810
    %v3849 = vsub.f32 %v3641, %v3811
    %v3850 = vsub.f32 %v3645, %v3812
    %v3851 = vsub.f32 %v3651, %v3813
    %v3852 = vsub.f32 %v3655, %v3814
    %v3853 = vsub.f32 %v3661, %v3815
    %v3854 = vsub.f32 %v3665, %v3816
    %v3855 = vsub.f32 %v3671, %v3817
    %v3856 = vsub.f32 %v3675, %v3818
    %v3857 = vsub.f32 %v3681, %v3819
    %v3858 = vsub.f32 %v3685, %v3820
    %v3859 = vsub.f32 %v3691, %v3821
    %v3860 = vsub.f32 %v3695, %v3822
    %v3861 = vsub.f32 %v3701, %v3823
    %v3862 = vsub.f32 %v3705, %v3824
    %v3863 = vsub.f32 %v3711, %v3825
    %v3864 = vsub.f32 %v3715, %v3826
    %v3865 = vsub.f32 %v3721, %v3827
    %v3866 = vsub.f32 %v3725, %v3828
    %v3867 = vsub.f32 %v3731, %v3829
    %v3868 = vsub.f32 %v3735, %v3830
    %v3869 = vsub.f32 %v3741, %v3831
    %v3870 = vsub.f32 %v3745, %v3832
    %v3871 = vsub.f32 %v3751, %v3833
    %v3872 = vsub.f32 %v3755, %v3834
    %v3873 = vsub.f32 %v3761, %v3835
    %v3874 = vsub.f32 %v3765, %v3836
    %v3875 = vsub.f32 %v3771, %v3837
    %v3876 = vsub.f32 %v3775, %v3838
    %v3877 = vsub.f32 %v3781, %v3839
    %v3878 = vsub.f32 %v3785, %v3840
    %v3879 = vsub.f32 %v3791, %v3841
    %v3880 = vsub.f32 %v3795, %v3842
    %v3881 = vsub.f32 %v3801, %v3843
    %v3882 = vsub.f32 %v3805, %v3844
    %v3883 = vmax.f32 %v3845, 0.0
    %v3884 = vmax.f32 %v3846, 0.0
    %v3885 = vmax.f32 %v3847, 0.0
    %v3886 = vmax.f32 %v3848, 0.0
    %v3887 = vmax.f32 %v3849, 0.0
    %v3888 = vmax.f32 %v3850, 0.0
    %v3889 = vmax.f32 %v3851, 0.0
    %v3890 = vmax.f32 %v3852, 0.0
    %v3891 = vmax.f32 %v3853, 0.0
    %v3892 = vmax.f32 %v3854, 0.0
    %v3893 = vmax.f32 %v3855, 0.0
    %v3894 = vmax.f32 %v3856, 0.0
    %v3895 = vmax.f32 %v3857, 0.0
    %v3896 = vmax.f32 %v3858, 0.0
    %v3897 = vmax.f32 %v3859, 0.0
    %v3898 = vmax.f32 %v3860, 0.0
    %v3899 = vmax.f32 %v3861, 0.0
    %v3900 = vmax.f32 %v3862, 0.0
    %v3901 = vmax.f32 %v3863, 0.0
    %v3902 = vmax.f32 %v3864, 0.0
    %v3903 = vmax.f32 %v3865, 0.0
    %v3904 = vmax.f32 %v3866, 0.0
    %v3905 = vmax.f32 %v3867, 0.0
    %v3906 = vmax.f32 %v3868, 0.0
    %v3907 = vmax.f32 %v3869, 0.0
    %v3908 = vmax.f32 %v3870, 0.0
    %v3909 = vmax.f32 %v3871, 0.0
    %v3910 = vmax.f32 %v3872, 0.0
    %v3911 = vmax.f32 %v3873, 0.0
    %v3912 = vmax.f32 %v3874, 0.0
    %v3913 = vmax.f32 %v3875, 0.0
    %v3914 = vmax.f32 %v3876, 0.0
    %v3915 = vmax.f32 %v3877, 0.0
    %v3916 = vmax.f32 %v3878, 0.0
    %v3917 = vmax.f32 %v3879, 0.0
    %v3918 = vmax.f32 %v3880, 0.0
    %v3919 = vmax.f32 %v3881, 0.0
    %v3920 = vmax.f32 %v3882, 0.0
    %v3921 = vadd.f32 %v3883, 1e-05
    %v3922 = vadd.f32 %v3884, 1e-05
    %v3923 = vadd.f32 %v3885, 1e-05
    %v3924 = vadd.f32 %v3886, 1e-05
    %v3925 = vadd.f32 %v3887, 1e-05
    %v3926 = vadd.f32 %v3888, 1e-05
    %v3927 = vadd.f32 %v3889, 1e-05
    %v3928 = vadd.f32 %v3890, 1e-05
    %v3929 = vadd.f32 %v3891, 1e-05
    %v3930 = vadd.f32 %v3892, 1e-05
    %v3931 = vadd.f32 %v3893, 1e-05
    %v3932 = vadd.f32 %v3894, 1e-05
    %v3933 = vadd.f32 %v3895, 1e-05
    %v3934 = vadd.f32 %v3896, 1e-05
    %v3935 = vadd.f32 %v3897, 1e-05
    %v3936 = vadd.f32 %v3898, 1e-05
    %v3937 = vadd.f32 %v3899, 1e-05
    %v3938 = vadd.f32 %v3900, 1e-05
    %v3939 = vadd.f32 %v3901, 1e-05
    %v3940 = vadd.f32 %v3902, 1e-05
    %v3941 = vadd.f32 %v3903, 1e-05
    %v3942 = vadd.f32 %v3904, 1e-05
    %v3943 = vadd.f32 %v3905, 1e-05
    %v3944 = vadd.f32 %v3906, 1e-05
    %v3945 = vadd.f32 %v3907, 1e-05
    %v3946 = vadd.f32 %v3908, 1e-05
    %v3947 = vadd.f32 %v3909, 1e-05
    %v3948 = vadd.f32 %v3910, 1e-05
    %v3949 = vadd.f32 %v3911, 1e-05
    %v3950 = vadd.f32 %v3912, 1e-05
    %v3951 = vadd.f32 %v3913, 1e-05
    %v3952 = vadd.f32 %v3914, 1e-05
    %v3953 = vadd.f32 %v3915, 1e-05
    %v3954 = vadd.f32 %v3916, 1e-05
    %v3955 = vadd.f32 %v3917, 1e-05
    %v3956 = vadd.f32 %v3918, 1e-05
    %v3957 = vadd.f32 %v3919, 1e-05
    %v3958 = vadd.f32 %v3920, 1e-05
    %v3959 = vrsqrt.pop %v3921
    %v3960 = vrsqrt.pop %v3922
    %v3961 = vrsqrt.pop %v3923
    %v3962 = vrsqrt.pop %v3924
    %v3963 = vrsqrt.pop %v3925
    %v3964 = vrsqrt.pop %v3926
    %v3965 = vrsqrt.pop %v3927
    %v3966 = vrsqrt.pop %v3928
    %v3967 = vrsqrt.pop %v3929
    %v3968 = vrsqrt.pop %v3930
    %v3969 = vrsqrt.pop %v3931
    %v3970 = vrsqrt.pop %v3932
    %v3971 = vrsqrt.pop %v3933
    %v3972 = vrsqrt.pop %v3934
    %v3973 = vrsqrt.pop %v3935
    %v3974 = vrsqrt.pop %v3936
    %v3975 = vrsqrt.pop %v3937
    %v3976 = vrsqrt.pop %v3938
    %v3977 = vrsqrt.pop %v3939
    %v3978 = vrsqrt.pop %v3940
    %v3979 = vrsqrt.pop %v3941
    %v3980 = vrsqrt.pop %v3942
    %v3981 = vrsqrt.pop %v3943
    %v3982 = vrsqrt.pop %v3944
    %v3983 = vrsqrt.pop %v3945
    %v3984 = vrsqrt.pop %v3946
    %v3985 = vrsqrt.pop %v3947
    %v3986 = vrsqrt.pop %v3948
    %v3987 = vrsqrt.pop %v3949
    %v3988 = vrsqrt.pop %v3950
    %v3989 = vrsqrt.pop %v3951
    %v3990 = vrsqrt.pop %v3952
    %v3991 = vrsqrt.pop %v3953
    %v3992 = vrsqrt.pop %v3954
    %v3993 = vrsqrt.pop %v3955
    %v3994 = vrsqrt.pop %v3956
    %v3995 = vrsqrt.pop %v3957
    %v3996 = vrsqrt.pop %v3958
    %v3997 = vsub.f32 %v3356, %v3619
    %v3998 = vsub.f32 %v3359, %v3623
    %v3999 = vsub.f32 %v3364, %v3629
    %v4000 = vsub.f32 %v3367, %v3633
    %v4001 = vsub.f32 %v3372, %v3639
    %v4002 = vsub.f32 %v3375, %v3643
    %v4003 = vsub.f32 %v3380, %v3649
    %v4004 = vsub.f32 %v3383, %v3653
    %v4005 = vsub.f32 %v3388, %v3659
    %v4006 = vsub.f32 %v3391, %v3663
    %v4007 = vsub.f32 %v3396, %v3669
    %v4008 = vsub.f32 %v3399, %v3673
    %v4009 = vsub.f32 %v3404, %v3679
    %v4010 = vsub.f32 %v3407, %v3683
    %v4011 = vsub.f32 %v3412, %v3689
    %v4012 = vsub.f32 %v3415, %v3693
    %v4013 = vsub.f32 %v3420, %v3699
    %v4014 = vsub.f32 %v3423, %v3703
    %v4015 = vsub.f32 %v3428, %v3709
    %v4016 = vsub.f32 %v3431, %v3713
    %v4017 = vsub.f32 %v3436, %v3719
    %v4018 = vsub.f32 %v3439, %v3723
    %v4019 = vsub.f32 %v3444, %v3729
    %v4020 = vsub.f32 %v3447, %v3733
    %v4021 = vsub.f32 %v3452, %v3739
    %v4022 = vsub.f32 %v3455, %v3743
    %v4023 = vsub.f32 %v3460, %v3749
    %v4024 = vsub.f32 %v3463, %v3753
    %v4025 = vsub.f32 %v3468, %v3759
    %v4026 = vsub.f32 %v3471, %v3763
    %v4027 = vsub.f32 %v3476, %v3769
    %v4028 = vsub.f32 %v3479, %v3773
    %v4029 = vsub.f32 %v3484, %v3779
    %v4030 = vsub.f32 %v3487, %v3783
    %v4031 = vsub.f32 %v3492, %v3789
    %v4032 = vsub.f32 %v3495, %v3793
    %v4033 = vsub.f32 %v3500, %v3799
    %v4034 = vsub.f32 %v3503, %v3803
    %v4035 = vlaneseq
    %v4036 = vshrl.u32 %v4035, 7
    %v4037 = vsub.s32 0, %v4036
    %v4038 = vrot.slane %v3506, %v4037
    %v4039 = vmul.f32 %v3959, %v4038
    %v4040 = vmul.f32 %v3960, %v4038
    %v4041 = vmul.f32 %v3961, %v4038
    %v4042 = vmul.f32 %v3962, %v4038
    %v4043 = vmul.f32 %v3963, %v4038
    %v4044 = vmul.f32 %v3964, %v4038
    %v4045 = vmul.f32 %v3965, %v4038
    %v4046 = vmul.f32 %v3966, %v4038
    %v4047 = vmul.f32 %v3967, %v4038
    %v4048 = vmul.f32 %v3968, %v4038
    %v4049 = vmul.f32 %v3969, %v4038
    %v4050 = vmul.f32 %v3970, %v4038
    %v4051 = vmul.f32 %v3971, %v4038
    %v4052 = vmul.f32 %v3972, %v4038
    %v4053 = vmul.f32 %v3973, %v4038
    %v4054 = vmul.f32 %v3974, %v4038
    %v4055 = vmul.f32 %v3975, %v4038
    %v4056 = vmul.f32 %v3976, %v4038
    %v4057 = vmul.f32 %v3977, %v4038
    %v4058 = vmul.f32 %v3978, %v4038
    %v4059 = vmul.f32 %v3979, %v4038
    %v4060 = vmul.f32 %v3980, %v4038
    %v4061 = vmul.f32 %v3981, %v4038
    %v4062 = vmul.f32 %v3982, %v4038
    %v4063 = vmul.f32 %v3983, %v4038
    %v4064 = vmul.f32 %v3984, %v4038
    %v4065 = vmul.f32 %v3985, %v4038
    %v4066 = vmul.f32 %v3986, %v4038
    %v4067 = vmul.f32 %v3987, %v4038
    %v4068 = vmul.f32 %v3988, %v4038
    %v4069 = vmul.f32 %v3989, %v4038
    %v4070 = vmul.f32 %v3990, %v4038
    %v4071 = vmul.f32 %v3991, %v4038
    %v4072 = vmul.f32 %v3992, %v4038
    %v4073 = vmul.f32 %v3993, %v4038
    %v4074 = vmul.f32 %v3994, %v4038
    %v4075 = vmul.f32 %v3995, %v4038
    %v4076 = vmul.f32 %v3996, %v4038
    %v4077 = vmul.f32 %v3997, %v4039
    %v4078 = vmul.f32 %v3998, %v4040
    %v4079 = vmul.f32 %v3999, %v4041
    %v4080 = vmul.f32 %v4000, %v4042
    %v4081 = vmul.f32 %v4001, %v4043
    %v4082 = vmul.f32 %v4002, %v4044
    %v4083 = vmul.f32 %v4003, %v4045
    %v4084 = vmul.f32 %v4004, %v4046
    %v4085 = vmul.f32 %v4005, %v4047
    %v4086 = vmul.f32 %v4006, %v4048
    %v4087 = vmul.f32 %v4007, %v4049
    %v4088 = vmul.f32 %v4008, %v4050
    %v4089 = vmul.f32 %v4009, %v4051
    %v4090 = vmul.f32 %v4010, %v4052
    %v4091 = vmul.f32 %v4011, %v4053
    %v4092 = vmul.f32 %v4012, %v4054
    %v4093 = vmul.f32 %v4013, %v4055
    %v4094 = vmul.f32 %v4014, %v4056
    %v4095 = vmul.f32 %v4015, %v4057
    %v4096 = vmul.f32 %v4016, %v4058
    %v4097 = vmul.f32 %v4017, %v4059
    %v4098 = vmul.f32 %v4018, %v4060
    %v4099 = vmul.f32 %v4019, %v4061
    %v4100 = vmul.f32 %v4020, %v4062
    %v4101 = vmul.f32 %v4021, %v4063
    %v4102 = vmul.f32 %v4022, %v4064
    %v4103 = vmul.f32 %v4023, %v4065
    %v4104 = vmul.f32 %v4024, %v4066
    %v4105 = vmul.f32 %v4025, %v4067
    %v4106 = vmul.f32 %v4026, %v4068
    %v4107 = vmul.f32 %v4027, %v4069
    %v4108 = vmul.f32 %v4028, %v4070
    %v4109 = vmul.f32 %v4029, %v4071
    %v4110 = vmul.f32 %v4030, %v4072
    %v4111 = vmul.f32 %v4031, %v4073
    %v4112 = vmul.f32 %v4032, %v4074
    %v4113 = vmul.f32 %v4033, %v4075
    %v4114 = vmul.f32 %v4034, %v4076
    %v4115 = vlaneseq
    %v4116 = vshrl.u32 %v4115, 7
    %v4117 = vsub.s32 0, %v4116
    %v4118 = vrot.slane %v3507, %v4117
    %v4119 = vadd.f32 %v4077, %v4118
    %v4120 = vadd.f32 %v4078, %v4118
    %v4121 = vadd.f32 %v4079, %v4118
    %v4122 = vadd.f32 %v4080, %v4118
    %v4123 = vadd.f32 %v4081, %v4118
    %v4124 = vadd.f32 %v4082, %v4118
    %v4125 = vadd.f32 %v4083, %v4118
    %v4126 = vadd.f32 %v4084, %v4118
    %v4127 = vadd.f32 %v4085, %v4118
    %v4128 = vadd.f32 %v4086, %v4118
    %v4129 = vadd.f32 %v4087, %v4118
    %v4130 = vadd.f32 %v4088, %v4118
    %v4131 = vadd.f32 %v4089, %v4118
    %v4132 = vadd.f32 %v4090, %v4118
    %v4133 = vadd.f32 %v4091, %v4118
    %v4134 = vadd.f32 %v4092, %v4118
    %v4135 = vadd.f32 %v4093, %v4118
    %v4136 = vadd.f32 %v4094, %v4118
    %v4137 = vadd.f32 %v4095, %v4118
    %v4138 = vadd.f32 %v4096, %v4118
    %v4139 = vadd.f32 %v4097, %v4118
    %v4140 = vadd.f32 %v4098, %v4118
    %v4141 = vadd.f32 %v4099, %v4118
    %v4142 = vadd.f32 %v4100, %v4118
    %v4143 = vadd.f32 %v4101, %v4118
    %v4144 = vadd.f32 %v4102, %v4118
    %v4145 = vadd.f32 %v4103, %v4118
    %v4146 = vadd.f32 %v4104, %v4118
    %v4147 = vadd.f32 %v4105, %v4118
    %v4148 = vadd.f32 %v4106, %v4118
    %v4149 = vadd.f32 %v4107, %v4118
    %v4150 = vadd.f32 %v4108, %v4118
    %v4151 = vadd.f32 %v4109, %v4118
    %v4152 = vadd.f32 %v4110, %v4118
    %v4153 = vadd.f32 %v4111, %v4118
    %v4154 = vadd.f32 %v4112, %v4118
    %v4155 = vadd.f32 %v4113, %v4118
    %v4156 = vadd.f32 %v4114, %v4118
    %v4157 = vmax.f32 %v4119, 0.0
    %v4158 = vmax.f32 %v4120, 0.0
    %v4159 = vmax.f32 %v4121, 0.0
    %v4160 = vmax.f32 %v4122, 0.0
    %v4161 = vmax.f32 %v4123, 0.0
    %v4162 = vmax.f32 %v4124, 0.0
    %v4163 = vmax.f32 %v4125, 0.0
    %v4164 = vmax.f32 %v4126, 0.0
    %v4165 = vmax.f32 %v4127, 0.0
    %v4166 = vmax.f32 %v4128, 0.0
    %v4167 = vmax.f32 %v4129, 0.0
    %v4168 = vmax.f32 %v4130, 0.0
    %v4169 = vmax.f32 %v4131, 0.0
    %v4170 = vmax.f32 %v4132, 0.0
    %v4171 = vmax.f32 %v4133, 0.0
    %v4172 = vmax.f32 %v4134, 0.0
    %v4173 = vmax.f32 %v4135, 0.0
    %v4174 = vmax.f32 %v4136, 0.0
    %v4175 = vmax.f32 %v4137, 0.0
    %v4176 = vmax.f32 %v4138, 0.0
    %v4177 = vmax.f32 %v4139, 0.0
    %v4178 = vmax.f32 %v4140, 0.0
    %v4179 = vmax.f32 %v4141, 0.0
    %v4180 = vmax.f32 %v4142, 0.0
    %v4181 = vmax.f32 %v4143, 0.0
    %v4182 = vmax.f32 %v4144, 0.0
    %v4183 = vmax.f32 %v4145, 0.0
    %v4184 = vmax.f32 %v4146, 0.0
    %v4185 = vmax.f32 %v4147, 0.0
    %v4186 = vmax.f32 %v4148, 0.0
    %v4187 = vmax.f32 %v4149, 0.0
    %v4188 = vmax.f32 %v4150, 0.0
    %v4189 = vmax.f32 %v4151, 0.0
    %v4190 = vmax.f32 %v4152, 0.0
    %v4191 = vmax.f32 %v4153, 0.0
    %v4192 = vmax.f32 %v4154, 0.0
    %v4193 = vmax.f32 %v4155, 0.0
    %v4194 = vmax.f32 %v4156, 0.0
    %v4195 = vpack.c.bf16 %v4158, %v4157
    %v4196 = vpack.c.bf16 %v4160, %v4159
    %v4197 = vpack.c.bf16 %v4162, %v4161
    %v4198 = vpack.c.bf16 %v4164, %v4163
    %v4199 = vpack.c.bf16 %v4166, %v4165
    %v4200 = vpack.c.bf16 %v4168, %v4167
    %v4201 = vpack.c.bf16 %v4170, %v4169
    %v4202 = vpack.c.bf16 %v4172, %v4171
    %v4203 = vpack.c.bf16 %v4174, %v4173
    %v4204 = vpack.c.bf16 %v4176, %v4175
    %v4205 = vpack.c.bf16 %v4178, %v4177
    %v4206 = vpack.c.bf16 %v4180, %v4179
    %v4207 = vpack.c.bf16 %v4182, %v4181
    %v4208 = vpack.c.bf16 %v4184, %v4183
    %v4209 = vpack.c.bf16 %v4186, %v4185
    %v4210 = vpack.c.bf16 %v4188, %v4187
    %v4211 = vpack.c.bf16 %v4190, %v4189
    %v4212 = vpack.c.bf16 %v4192, %v4191
    %v4213 = vpack.c.bf16 %v4194, %v4193
    %s4214 = scalar_lea.vmem [#allocation8], 192
    %v4215 = vld [vmem:[%s4214] sm:$0xf]
    %v4216 = vld [vmem:[%s4214 + $0x4] sm:$0xf]
    %v4217 = vld [vmem:[%s4214 + $0x8] sm:$0xf]
    %v4218 = vld [vmem:[%s4214 + $0xc] sm:$0xf]
    %v4219 = vld [vmem:[%s4214 + $0x10] sm:$0xf]
    %v4220 = vld [vmem:[%s4214 + $0x14] sm:$0xf]
    %v4221 = vld [vmem:[%s4214 + $0x18] sm:$0xf]
    %v4222 = vld [vmem:[%s4214 + $0x1c] sm:$0xf]
    %v4223 = vld [vmem:[%s4214 + $0x20] sm:$0xf]
    %v4224 = vld [vmem:[%s4214 + $0x24] sm:$0xf]
    %v4225 = vld [vmem:[%s4214 + $0x28] sm:$0xf]
    %v4226 = vld [vmem:[%s4214 + $0x2c] sm:$0xf]
    %v4227 = vld [vmem:[%s4214 + $0x30] sm:$0xf]
    %v4228 = vld [vmem:[%s4214 + $0x34] sm:$0xf]
    %v4229 = vld [vmem:[%s4214 + $0x38] sm:$0xf]
    %v4230 = vld [vmem:[%s4214 + $0x3c] sm:$0xf]
    %v4231 = vld [vmem:[#allocation7 + $0x5] sm:$0x1]
    %v4232 = vlaneseq
    %v4233 = vshrl.u32 %v4232, 7
    %v4234 = vsub.s32 0, %v4233
    %v4235 = vrot.slane %v4231, %v4234
    %v4252 = vunpack.c.l.b16 %v4215
    %v4253 = vunpack.c.l.b16 %v4216
    %v4254 = vunpack.c.l.b16 %v4217
    %v4255 = vunpack.c.l.b16 %v4218
    %v4256 = vunpack.c.l.b16 %v4219
    %v4257 = vunpack.c.l.b16 %v4220
    %v4258 = vunpack.c.l.b16 %v4221
    %v4259 = vunpack.c.l.b16 %v4222
    %v4260 = vunpack.c.l.b16 %v4223
    %v4261 = vunpack.c.l.b16 %v4224
    %v4262 = vunpack.c.l.b16 %v4225
    %v4263 = vunpack.c.l.b16 %v4226
    %v4264 = vunpack.c.l.b16 %v4227
    %v4265 = vunpack.c.l.b16 %v4228
    %v4266 = vunpack.c.l.b16 %v4229
    %v4267 = vunpack.c.l.b16 %v4230
    %v4268 = vpack.c.b16 %v4253, %v4252
    %v4269 = vpack.c.b16 %v4255, %v4254
    %v4270 = vpack.c.b16 %v4257, %v4256
    %v4271 = vpack.c.b16 %v4259, %v4258
    %v4272 = vpack.c.b16 %v4261, %v4260
    %v4273 = vpack.c.b16 %v4263, %v4262
    %v4274 = vpack.c.b16 %v4265, %v4264
    %v4275 = vpack.c.b16 %v4267, %v4266
    %4284 = vmatprep.subr.bf16.mxu0 0
    %4285 = vmatpush1.bf16.msra.mxu0 %v4268
    %4286 = vmatprep.subr.bf16.mxu0 0
    %4287 = vmatpush1.bf16.msra.mxu0 %v4269
    %4288 = vmatprep.subr.bf16.mxu0 0
    %4289 = vmatpush1.bf16.msra.mxu0 %v4270
    %4290 = vmatprep.subr.bf16.mxu0 0
    %4291 = vmatpush1.bf16.msra.mxu0 %v4271
    %4292 = vmatprep.subr.bf16.mxu0 0
    %4293 = vmatpush1.bf16.msra.mxu0 %v4272
    %4294 = vmatprep.subr.bf16.mxu0 0
    %4295 = vmatpush1.bf16.msra.mxu0 %v4273
    %4296 = vmatprep.subr.bf16.mxu0 0
    %4297 = vmatpush1.bf16.msra.mxu0 %v4274
    %4298 = vmatprep.subr.bf16.mxu0 0
    %4299 = vmatpush1.bf16.msra.mxu0 %v4275
    %4300 = vmatprep.subr.bf16.mxu0 0
    %4301 = vmatpush1.bf16.msra.mxu0 0
    %4302 = vmatprep.subr.bf16.mxu0 0
    %4303 = vmatpush1.bf16.msra.mxu0 0
    %4304 = vmatprep.subr.bf16.mxu0 0
    %4305 = vmatpush1.bf16.msra.mxu0 0
    %4306 = vmatprep.subr.bf16.mxu0 0
    %4307 = vmatpush1.bf16.msra.mxu0 0
    %4308 = vmatprep.subr.bf16.mxu0 0
    %4309 = vmatpush1.bf16.msra.mxu0 0
    %4310 = vmatprep.subr.bf16.mxu0 0
    %4311 = vmatpush1.bf16.msra.mxu0 0
    %4312 = vmatprep.subr.bf16.mxu0 0
    %4313 = vmatpush1.bf16.msra.mxu0 0
    %4314 = vmatprep.subr.bf16.mxu0 0
    %4315 = vmatpush1.bf16.msra.mxu0 0
    %4316 = vmatprep.mubr.bf16.mxu0 0
    %4317 = vmatmul.mubr.bf16.gmra.mrb[0].mxu0 %v4195
    %v4318 = vpop.f32.mrb[0].mxu0
    %v4319 = vadd.f32 %v4235, %v4318
    %v4320 = vpop.f32.mrb[0].mxu0
    %v4321 = vpop.f32.mrb[0].mxu0
    %v4322 = vadd.f32 %v4235, %v4321
    %v4323 = vpop.f32.mrb[0].mxu0
    %4324 = vmatprep.mubr.bf16.mxu0 0
    %4325 = vmatmul.mubr.bf16.gmra.mrb[0].mxu0 %v4196
    %v4326 = vpop.f32.mrb[0].mxu0
    %v4327 = vadd.f32 %v4235, %v4326
    %v4328 = vpop.f32.mrb[0].mxu0
    %v4329 = vpop.f32.mrb[0].mxu0
    %v4330 = vadd.f32 %v4235, %v4329
    %v4331 = vpop.f32.mrb[0].mxu0
    %4332 = vmatprep.mubr.bf16.mxu0 0
    %4333 = vmatmul.mubr.bf16.gmra.mrb[0].mxu0 %v4197
    %v4334 = vpop.f32.mrb[0].mxu0
    %v4335 = vadd.f32 %v4235, %v4334
    %v4336 = vpop.f32.mrb[0].mxu0
    %v4337 = vpop.f32.mrb[0].mxu0
    %v4338 = vadd.f32 %v4235, %v4337
    %v4339 = vpop.f32.mrb[0].mxu0
    %4340 = vmatprep.mubr.bf16.mxu0 0
    %4341 = vmatmul.mubr.bf16.gmra.mrb[0].mxu0 %v4198
    %v4342 = vpop.f32.mrb[0].mxu0
    %v4343 = vadd.f32 %v4235, %v4342
    %v4344 = vpop.f32.mrb[0].mxu0
    %v4345 = vpop.f32.mrb[0].mxu0
    %v4346 = vadd.f32 %v4235, %v4345
    %v4347 = vpop.f32.mrb[0].mxu0
    %4348 = vmatprep.mubr.bf16.mxu0 0
    %4349 = vmatmul.mubr.bf16.gmra.mrb[0].mxu0 %v4199
    %v4350 = vpop.f32.mrb[0].mxu0
    %v4351 = vadd.f32 %v4235, %v4350
    %v4352 = vpop.f32.mrb[0].mxu0
    %v4353 = vpop.f32.mrb[0].mxu0
    %v4354 = vadd.f32 %v4235, %v4353
    %v4355 = vpop.f32.mrb[0].mxu0
    %4356 = vmatprep.mubr.bf16.mxu0 0
    %4357 = vmatmul.mubr.bf16.gmra.mrb[0].mxu0 %v4200
    %v4358 = vpop.f32.mrb[0].mxu0
    %v4359 = vadd.f32 %v4235, %v4358
    %v4360 = vpop.f32.mrb[0].mxu0
    %v4361 = vpop.f32.mrb[0].mxu0
    %v4362 = vadd.f32 %v4235, %v4361
    %v4363 = vpop.f32.mrb[0].mxu0
    %4364 = vmatprep.mubr.bf16.mxu0 0
    %4365 = vmatmul.mubr.bf16.gmra.mrb[0].mxu0 %v4201
    %v4366 = vpop.f32.mrb[0].mxu0
    %v4367 = vadd.f32 %v4235, %v4366
    %v4368 = vpop.f32.mrb[0].mxu0
    %v4369 = vpop.f32.mrb[0].mxu0
    %v4370 = vadd.f32 %v4235, %v4369
    %v4371 = vpop.f32.mrb[0].mxu0
    %4372 = vmatprep.mubr.bf16.mxu0 0
    %4373 = vmatmul.mubr.bf16.gmra.mrb[0].mxu0 %v4202
    %v4374 = vpop.f32.mrb[0].mxu0
    %v4375 = vadd.f32 %v4235, %v4374
    %v4376 = vpop.f32.mrb[0].mxu0
    %v4377 = vpop.f32.mrb[0].mxu0
    %v4378 = vadd.f32 %v4235, %v4377
    %v4379 = vpop.f32.mrb[0].mxu0
    %4380 = vmatprep.mubr.bf16.mxu0 0
    %4381 = vmatmul.mubr.bf16.gmra.mrb[0].mxu0 %v4203
    %v4382 = vpop.f32.mrb[0].mxu0
    %v4383 = vadd.f32 %v4235, %v4382
    %v4384 = vpop.f32.mrb[0].mxu0
    %v4385 = vpop.f32.mrb[0].mxu0
    %v4386 = vadd.f32 %v4235, %v4385
    %v4387 = vpop.f32.mrb[0].mxu0
    %4388 = vmatprep.mubr.bf16.mxu0 0
    %4389 = vmatmul.mubr.bf16.gmra.mrb[0].mxu0 %v4204
    %v4390 = vpop.f32.mrb[0].mxu0
    %v4391 = vadd.f32 %v4235, %v4390
    %v4392 = vpop.f32.mrb[0].mxu0
    %v4393 = vpop.f32.mrb[0].mxu0
    %v4394 = vadd.f32 %v4235, %v4393
    %v4395 = vpop.f32.mrb[0].mxu0
    %4396 = vmatprep.mubr.bf16.mxu0 0
    %4397 = vmatmul.mubr.bf16.gmra.mrb[0].mxu0 %v4205
    %v4398 = vpop.f32.mrb[0].mxu0
    %v4399 = vadd.f32 %v4235, %v4398
    %v4400 = vpop.f32.mrb[0].mxu0
    %v4401 = vpop.f32.mrb[0].mxu0
    %v4402 = vadd.f32 %v4235, %v4401
    %v4403 = vpop.f32.mrb[0].mxu0
    %4404 = vmatprep.mubr.bf16.mxu0 0
    %4405 = vmatmul.mubr.bf16.gmra.mrb[0].mxu0 %v4206
    %v4406 = vpop.f32.mrb[0].mxu0
    %v4407 = vadd.f32 %v4235, %v4406
    %v4408 = vpop.f32.mrb[0].mxu0
    %v4409 = vpop.f32.mrb[0].mxu0
    %v4410 = vadd.f32 %v4235, %v4409
    %v4411 = vpop.f32.mrb[0].mxu0
    %4412 = vmatprep.mubr.bf16.mxu0 0
    %4413 = vmatmul.mubr.bf16.gmra.mrb[0].mxu0 %v4207
    %v4414 = vpop.f32.mrb[0].mxu0
    %v4415 = vadd.f32 %v4235, %v4414
    %v4416 = vpop.f32.mrb[0].mxu0
    %v4417 = vpop.f32.mrb[0].mxu0
    %v4418 = vadd.f32 %v4235, %v4417
    %v4419 = vpop.f32.mrb[0].mxu0
    %4420 = vmatprep.mubr.bf16.mxu0 0
    %4421 = vmatmul.mubr.bf16.gmra.mrb[0].mxu0 %v4208
    %v4422 = vpop.f32.mrb[0].mxu0
    %v4423 = vadd.f32 %v4235, %v4422
    %v4424 = vpop.f32.mrb[0].mxu0
    %v4425 = vpop.f32.mrb[0].mxu0
    %v4426 = vadd.f32 %v4235, %v4425
    %v4427 = vpop.f32.mrb[0].mxu0
    %4428 = vmatprep.mubr.bf16.mxu0 0
    %4429 = vmatmul.mubr.bf16.gmra.mrb[0].mxu0 %v4209
    %v4430 = vpop.f32.mrb[0].mxu0
    %v4431 = vadd.f32 %v4235, %v4430
    %v4432 = vpop.f32.mrb[0].mxu0
    %v4433 = vpop.f32.mrb[0].mxu0
    %v4434 = vadd.f32 %v4235, %v4433
    %v4435 = vpop.f32.mrb[0].mxu0
    %4436 = vmatprep.mubr.bf16.mxu0 0
    %4437 = vmatmul.mubr.bf16.gmra.mrb[0].mxu0 %v4210
    %v4438 = vpop.f32.mrb[0].mxu0
    %v4439 = vadd.f32 %v4235, %v4438
    %v4440 = vpop.f32.mrb[0].mxu0
    %v4441 = vpop.f32.mrb[0].mxu0
    %v4442 = vadd.f32 %v4235, %v4441
    %v4443 = vpop.f32.mrb[0].mxu0
    %4444 = vmatprep.mubr.bf16.mxu0 0
    %4445 = vmatmul.mubr.bf16.gmra.mrb[0].mxu0 %v4211
    %v4446 = vpop.f32.mrb[0].mxu0
    %v4447 = vadd.f32 %v4235, %v4446
    %v4448 = vpop.f32.mrb[0].mxu0
    %v4449 = vpop.f32.mrb[0].mxu0
    %v4450 = vadd.f32 %v4235, %v4449
    %v4451 = vpop.f32.mrb[0].mxu0
    %4452 = vmatprep.mubr.bf16.mxu0 0
    %4453 = vmatmul.mubr.bf16.gmra.mrb[0].mxu0 %v4212
    %v4454 = vpop.f32.mrb[0].mxu0
    %v4455 = vadd.f32 %v4235, %v4454
    %v4456 = vpop.f32.mrb[0].mxu0
    %v4457 = vpop.f32.mrb[0].mxu0
    %v4458 = vadd.f32 %v4235, %v4457
    %v4459 = vpop.f32.mrb[0].mxu0
    %4460 = vmatprep.mubr.bf16.mxu0 0
    %4461 = vmatmul.mubr.bf16.gmra.mrb[0].mxu0 %v4213
    %v4462 = vpop.f32.mrb[0].mxu0
    %v4463 = vadd.f32 %v4235, %v4462
    %v4464 = vpop.f32.mrb[0].mxu0
    %v4465 = vpop.f32.mrb[0].mxu0
    %v4466 = vadd.f32 %v4235, %v4465
    %v4467 = vpop.f32.mrb[0].mxu0
    %4468 = vdwg.mxu0
    %v4469 = vmax.f32 %v4319, 0.0
    %v4470 = vmax.f32 %v4322, 0.0
    %v4471 = vmax.f32 %v4327, 0.0
    %v4472 = vmax.f32 %v4330, 0.0
    %v4473 = vmax.f32 %v4335, 0.0
    %v4474 = vmax.f32 %v4338, 0.0
    %v4475 = vmax.f32 %v4343, 0.0
    %v4476 = vmax.f32 %v4346, 0.0
    %v4477 = vmax.f32 %v4351, 0.0
    %v4478 = vmax.f32 %v4354, 0.0
    %v4479 = vmax.f32 %v4359, 0.0
    %v4480 = vmax.f32 %v4362, 0.0
    %v4481 = vmax.f32 %v4367, 0.0
    %v4482 = vmax.f32 %v4370, 0.0
    %v4483 = vmax.f32 %v4375, 0.0
    %v4484 = vmax.f32 %v4378, 0.0
    %v4485 = vmax.f32 %v4383, 0.0
    %v4486 = vmax.f32 %v4386, 0.0
    %v4487 = vmax.f32 %v4391, 0.0
    %v4488 = vmax.f32 %v4394, 0.0
    %v4489 = vmax.f32 %v4399, 0.0
    %v4490 = vmax.f32 %v4402, 0.0
    %v4491 = vmax.f32 %v4407, 0.0
    %v4492 = vmax.f32 %v4410, 0.0
    %v4493 = vmax.f32 %v4415, 0.0
    %v4494 = vmax.f32 %v4418, 0.0
    %v4495 = vmax.f32 %v4423, 0.0
    %v4496 = vmax.f32 %v4426, 0.0
    %v4497 = vmax.f32 %v4431, 0.0
    %v4498 = vmax.f32 %v4434, 0.0
    %v4499 = vmax.f32 %v4439, 0.0
    %v4500 = vmax.f32 %v4442, 0.0
    %v4501 = vmax.f32 %v4447, 0.0
    %v4502 = vmax.f32 %v4450, 0.0
    %v4503 = vmax.f32 %v4455, 0.0
    %v4504 = vmax.f32 %v4458, 0.0
    %v4505 = vmax.f32 %v4463, 0.0
    %v4506 = vmax.f32 %v4466, 0.0
    %4507 = vst [vmem:[#allocation10] sm:$0xff] %v4469
    %4508 = vst [vmem:[#allocation10 + $0x8] sm:$0xff] %v4470
    %4509 = vst [vmem:[#allocation10 + $0x10] sm:$0xff] %v4471
    %4510 = vst [vmem:[#allocation10 + $0x18] sm:$0xff] %v4472
    %4511 = vst [vmem:[#allocation10 + $0x20] sm:$0xff] %v4473
    %4512 = vst [vmem:[#allocation10 + $0x28] sm:$0xff] %v4474
    %4513 = vst [vmem:[#allocation10 + $0x30] sm:$0xff] %v4475
    %4514 = vst [vmem:[#allocation10 + $0x38] sm:$0xff] %v4476
    %4515 = vst [vmem:[#allocation10 + $0x40] sm:$0xff] %v4477
    %4516 = vst [vmem:[#allocation10 + $0x48] sm:$0xff] %v4478
    %4517 = vst [vmem:[#allocation10 + $0x50] sm:$0xff] %v4479
    %4518 = vst [vmem:[#allocation10 + $0x58] sm:$0xff] %v4480
    %4519 = vst [vmem:[#allocation10 + $0x60] sm:$0xff] %v4481
    %4520 = vst [vmem:[#allocation10 + $0x68] sm:$0xff] %v4482
    %4521 = vst [vmem:[#allocation10 + $0x70] sm:$0xff] %v4483
    %4522 = vst [vmem:[#allocation10 + $0x78] sm:$0xff] %v4484
    %4523 = vst [vmem:[#allocation10 + $0x80] sm:$0xff] %v4485
    %4524 = vst [vmem:[#allocation10 + $0x88] sm:$0xff] %v4486
    %4525 = vst [vmem:[#allocation10 + $0x90] sm:$0xff] %v4487
    %4526 = vst [vmem:[#allocation10 + $0x98] sm:$0xff] %v4488
    %4527 = vst [vmem:[#allocation10 + $0xa0] sm:$0xff] %v4489
    %4528 = vst [vmem:[#allocation10 + $0xa8] sm:$0xff] %v4490
    %4529 = vst [vmem:[#allocation10 + $0xb0] sm:$0xff] %v4491
    %4530 = vst [vmem:[#allocation10 + $0xb8] sm:$0xff] %v4492
    %4531 = vst [vmem:[#allocation10 + $0xc0] sm:$0xff] %v4493
    %4532 = vst [vmem:[#allocation10 + $0xc8] sm:$0xff] %v4494
    %4533 = vst [vmem:[#allocation10 + $0xd0] sm:$0xff] %v4495
    %4534 = vst [vmem:[#allocation10 + $0xd8] sm:$0xff] %v4496
    %4535 = vst [vmem:[#allocation10 + $0xe0] sm:$0xff] %v4497
    %4536 = vst [vmem:[#allocation10 + $0xe8] sm:$0xff] %v4498
    %4537 = vst [vmem:[#allocation10 + $0xf0] sm:$0xff] %v4499
    %4538 = vst [vmem:[#allocation10 + $0xf8] sm:$0xff] %v4500
    %4539 = vst [vmem:[#allocation10 + $0x100] sm:$0xff] %v4501
    %4540 = vst [vmem:[#allocation10 + $0x108] sm:$0xff] %v4502
    %4541 = vst [vmem:[#allocation10 + $0x110] sm:$0xff] %v4503
    %4542 = vst [vmem:[#allocation10 + $0x118] sm:$0xff] %v4504
    %4543 = vst [vmem:[#allocation10 + $0x120] sm:$0xff] %v4505
    %4544 = vst [vmem:[#allocation10 + $0x128] sm:$0xff] %v4506
    // Predicated region
    $region34: #{tpu_custom_call.1} parent=1 // pred_check
      _
    $region35: #{tpu_custom_call.1} parent=1 // pred_check_branch
      %4546 = sbr.rel (0) target = $region37
    $region36: #{tpu_custom_call.1} parent=1 // pred_region
      %s4548 = ssub.s32 4864, 4864
      %4549 = vsyncadd [#allocation4], %s4548
      %s4550 = sshll.u32 [#allocation10], 4
      %s4551 = int_to_ptr.vmem [resolvable:$true] %s4550
      %4556 = dma.vmem_to_hbm [thread:$0]  %s4551, 4864, %s4, [#allocation4], 128, 128, 8
    $region37: #{tpu_custom_call.1} parent=1 // pred_fallthru
      _
    // Predicated region
    $region38: #{tpu_custom_call.1} parent=1 // pred_check
      _
    $region39: #{tpu_custom_call.1} parent=1 // pred_check_branch
      %4558 = sbr.rel (0) target = $region41
    $region40: #{tpu_custom_call.1} parent=1 // pred_region
      %4559 = dma.done [#allocation4], 4864
    $region41: #{tpu_custom_call.1} parent=1 // pred_fallthru
      _
    %4560 = vsyncpa [#allocation3], 1
    %4561 = vsyncpa [#allocation6], 1
    %4562 = vsyncpa [#allocation9], 1
    %4563 = vsyncpa [#allocation4], 1

</llo_original>
